<compile_context>
chip_gen: v5e
topology: v5e:2x2
jax: 0.10.0
libtpu: 0.0.40
codegen_flags: <defaults>
</compile_context>

<pallas_src>
import math
import functools

import jax
import jax.numpy as jnp
from jax.experimental import pallas as pl
from jax.experimental.pallas import tpu as pltpu  # noqa: F401  (TPU backend)

MATMUL_DTYPE = jnp.bfloat16   # MXU operand dtype
ACC_DTYPE = jnp.float32       # accumulation / VPU / LayerNorm / softmax dtype
LN_EPS = 1e-5                 # PyTorch LayerNorm default


# --------------------------- in-kernel helpers ---------------------------

def _dense(x, w, b, activation=None):
    """y = act(x @ w + b); operands cast to the weight dtype, f32 accumulation."""
    y = jnp.dot(x.astype(w.dtype), w, preferred_element_type=ACC_DTYPE) + b
    if activation == "relu":
        y = jnp.maximum(y, 0.0)
    return y


def _layernorm(x, g, b):
    mean = jnp.mean(x, axis=-1, keepdims=True)
    c = x - mean
    var = jnp.mean(c * c, axis=-1, keepdims=True)
    return c * jax.lax.rsqrt(var + LN_EPS) * g + b


# ------------------------ fused decoder-layer kernel ------------------------

def _decoder_layer_kernel(
    x_ref, mem_ref, mask_ref,
    sa_wqkv_ref, sa_bqkv_ref, sa_wo_ref, sa_bo_ref, ln1_g_ref, ln1_b_ref,
    ca_wq_ref, ca_bq_ref, ca_wkv_ref, ca_bkv_ref, ca_wo_ref, ca_bo_ref,
    ln2_g_ref, ln2_b_ref,
    ff_w1_ref, ff_b1_ref, ff_w2_ref, ff_b2_ref, ln3_g_ref, ln3_b_ref,
    out_ref,
    *, num_heads,
):
    B, Sy, D = x_ref.shape
    Ss = mem_ref.shape[1]
    H = num_heads
    dh = D // H
    scale = 1.0 / math.sqrt(dh)

    def mha(q2, k2, v2, Sq, Sk, w_o_ref, b_o_ref, mask):
        """Multi-head attention; head split in-kernel, W_o folded per head."""
        acc = jnp.zeros((B * Sq, D), ACC_DTYPE)
        for h in range(H):                       # static unroll, no launch cost
            lo = h * dh
            qh = q2[:, lo:lo + dh].reshape(B, Sq, dh).astype(MATMUL_DTYPE)
            kh = k2[:, lo:lo + dh].reshape(B, Sk, dh).astype(MATMUL_DTYPE)
            vh = v2[:, lo:lo + dh].reshape(B, Sk, dh).astype(MATMUL_DTYPE)
            s = jnp.einsum("bqd,bkd->bqk", qh, kh,
                           preferred_element_type=ACC_DTYPE) * scale
            if mask is not None:                 # cross-attention skips the add
                s = s + mask[None, :, :]
            s_max = jnp.max(s, axis=-1, keepdims=True)
            p = jnp.exp(s - s_max)
            denom = jnp.sum(p, axis=-1, keepdims=True)
            o = jnp.einsum("bqk,bkd->bqd", p.astype(MATMUL_DTYPE), vh,
                           preferred_element_type=ACC_DTYPE)
            o = (o * pl.reciprocal(denom, approx=True)).reshape(B * Sq, dh)
            # head merge fused into the output projection: rows [lo, lo+dh) of W_o
            w_blk = w_o_ref[lo:lo + dh, :].astype(MATMUL_DTYPE)
            acc = acc + jnp.dot(o.astype(MATMUL_DTYPE), w_blk,
                                preferred_element_type=ACC_DTYPE)
        return acc + b_o_ref[...]

    x = x_ref[...].reshape(B * Sy, D)
    mem = mem_ref[...].reshape(B * Ss, D)
    mask = mask_ref[...]

    # ---- self-attention block (fused QKV projection, causal mask) ----
    qkv = _dense(x, sa_wqkv_ref[...], sa_bqkv_ref[...])
    sa = mha(qkv[:, 0:D], qkv[:, D:2 * D], qkv[:, 2 * D:3 * D],
             Sy, Sy, sa_wo_ref, sa_bo_ref, mask)
    x = _layernorm(x + sa, ln1_g_ref[...], ln1_b_ref[...])

    # ---- cross-attention block (fused KV projection of memory, no mask) ----
    q = _dense(x, ca_wq_ref[...], ca_bq_ref[...])
    kv = _dense(mem, ca_wkv_ref[...], ca_bkv_ref[...])
    ca = mha(q, kv[:, 0:D], kv[:, D:2 * D], Sy, Ss, ca_wo_ref, ca_bo_ref, None)
    x = _layernorm(x + ca, ln2_g_ref[...], ln2_b_ref[...])

    # ---- feed-forward block ----
    h1 = _dense(x, ff_w1_ref[...], ff_b1_ref[...], activation="relu")
    ff = _dense(h1, ff_w2_ref[...], ff_b2_ref[...])
    x = _layernorm(x + ff, ln3_g_ref[...], ln3_b_ref[...])

    out_ref[...] = x.reshape(B, Sy, D).astype(out_ref.dtype)


def decoder_layer(x, memory, lp, tgt_mask, num_heads):
    """Whole post-norm nn.TransformerDecoderLayer forward as one pallas_call."""
    B, Sy, D = x.shape
    return pl.pallas_call(
        functools.partial(_decoder_layer_kernel, num_heads=num_heads),
        out_shape=jax.ShapeDtypeStruct((B, Sy, D), jnp.float32),
    )(x, memory, tgt_mask,
      lp["sa_wqkv"], lp["sa_bqkv"], lp["sa_wo"], lp["sa_bo"],
      lp["ln1_g"], lp["ln1_b"],
      lp["ca_wq"], lp["ca_bq"], lp["ca_wkv"], lp["ca_bkv"],
      lp["ca_wo"], lp["ca_bo"], lp["ln2_g"], lp["ln2_b"],
      lp["ff_w1"], lp["ff_b1"], lp["ff_w2"], lp["ff_b2"],
      lp["ln3_g"], lp["ln3_b"])


# ----------------------- lane-padded classifier kernel -----------------------

def _classifier_kernel(x_ref, w_ref, b_ref, o_ref):
    o_ref[...] = _dense(x_ref[...], w_ref[...], b_ref[...]).astype(o_ref.dtype)


def classifier(x2, w_pad, b_pad):
    M = x2.shape[0]
    Np = w_pad.shape[1]
    return pl.pallas_call(
        _classifier_kernel,
        out_shape=jax.ShapeDtypeStruct((M, Np), jnp.float32),
    )(x2, w_pad, b_pad)


# ----------------------------- model (glue) -----------------------------

def sinusoidal_pe(max_len, d_model):
    pos = jnp.arange(max_len, dtype=jnp.float32)[:, None]
    div = jnp.exp(jnp.arange(0, d_model, 2, dtype=jnp.float32)
                  * (-math.log(10000.0) / d_model))
    pe = jnp.zeros((max_len, d_model), jnp.float32)
    pe = pe.at[:, 0::2].set(jnp.sin(pos * div))
    pe = pe.at[:, 1::2].set(jnp.cos(pos * div))
    return pe


def causal_mask(max_len):
    tril = jnp.tril(jnp.ones((max_len, max_len), jnp.float32)) == 1.0
    return jnp.where(tril, 0.0, float("-inf")).astype(jnp.float32)


def init_params(key, d_model, num_heads, num_layers, dim_forward, num_classes, max_len):
    keys = iter(jax.random.split(key, 4 + 12 * num_layers))

    def dense(k, fan_in, fan_out):
        lim = 1.0 / math.sqrt(fan_in)
        return jax.random.uniform(k, (fan_in, fan_out), jnp.float32, -lim, lim)

    # lane-padded classifier weights (num_classes -> multiple of 128 lanes)
    n_pad = max(128, ((num_classes + 127) // 128) * 128)
    fc_w = dense(next(keys), d_model, num_classes)
    fc_w_pad = jnp.zeros((d_model, n_pad), jnp.float32).at[:, :num_classes].set(fc_w)
    fc_b_pad = jnp.zeros((1, n_pad), jnp.float32)

    params = {
        "embedding": jax.random.normal(next(keys), (num_classes, d_model), jnp.float32),
        "pe": sinusoidal_pe(max_len, d_model),
        "tgt_mask": causal_mask(max_len),
        "fc_w": fc_w_pad.astype(MATMUL_DTYPE),
        "fc_b": fc_b_pad,                       # biases stay f32
        "layers": [],
    }
    for _ in range(num_layers):
        lp = {}
        # self-attention: fused QKV projection (D, 3D)
        wq, wk, wv = [dense(next(keys), d_model, d_model) for _ in range(3)]
        lp["sa_wqkv"] = jnp.concatenate([wq, wk, wv], axis=1).astype(MATMUL_DTYPE)
        lp["sa_bqkv"] = jnp.zeros((1, 3 * d_model), jnp.float32)
        lp["sa_wo"] = dense(next(keys), d_model, d_model)            # f32: sliced per head
        lp["sa_bo"] = jnp.zeros((1, d_model), jnp.float32)
        # cross-attention: Q from tgt, fused KV projection of memory (D, 2D)
        lp["ca_wq"] = dense(next(keys), d_model, d_model).astype(MATMUL_DTYPE)
        lp["ca_bq"] = jnp.zeros((1, d_model), jnp.float32)
        wk2, wv2 = [dense(next(keys), d_model, d_model) for _ in range(2)]
        lp["ca_wkv"] = jnp.concatenate([wk2, wv2], axis=1).astype(MATMUL_DTYPE)
        lp["ca_bkv"] = jnp.zeros((1, 2 * d_model), jnp.float32)
        lp["ca_wo"] = dense(next(keys), d_model, d_model)            # f32: sliced per head
        lp["ca_bo"] = jnp.zeros((1, d_model), jnp.float32)
        # feed-forward
        lp["ff_w1"] = dense(next(keys), d_model, dim_forward).astype(MATMUL_DTYPE)
        lp["ff_b1"] = jnp.zeros((1, dim_forward), jnp.float32)
        lp["ff_w2"] = dense(next(keys), dim_forward, d_model).astype(MATMUL_DTYPE)
        lp["ff_b2"] = jnp.zeros((1, d_model), jnp.float32)
        # layer norms
        for n in ("ln1", "ln2", "ln3"):
            lp[f"{n}_g"] = jnp.ones((1, d_model), jnp.float32)
            lp[f"{n}_b"] = jnp.zeros((1, d_model), jnp.float32)
        params["layers"].append(lp)
    return params


def decoder_forward(params, src, tgt_ids, *, d_model, num_heads, num_classes):
    """src: (B, S_src, d_model) float memory;  tgt_ids: (B, Sy) int tokens."""
    B, Sy = tgt_ids.shape
    # TODO(synk): embedding gather + positional-encoding add kept as plain-JAX
    # glue (a Pallas gather kernel is not worthwhile at this size).
    x = params["embedding"][tgt_ids] * math.sqrt(d_model)
    x = x + params["pe"][:Sy][None, :, :]
    tgt_mask = params["tgt_mask"][:Sy, :Sy]
    for lp in params["layers"]:
        x = decoder_layer(x, src, lp, tgt_mask, num_heads)
    logits_pad = classifier(x.reshape(B * Sy, d_model),
                            params["fc_w"], params["fc_b"])
    return logits_pad[:, :num_classes].reshape(B, Sy, num_classes)


# ----------------------------------- main -----------------------------------

if __name__ == "__main__":
    d_model, num_heads, num_layers = 32, 4, 2
    dim_forward, num_classes, max_len = 64, 10, 8
    B, Sy, S_src = 2, 8, 12

    key = jax.random.PRNGKey(0)
    k_param, k_src, k_tgt = jax.random.split(key, 3)

    params = init_params(k_param, d_model, num_heads, num_layers,
                         dim_forward, num_classes, max_len)

    src = jax.random.normal(k_src, (B, S_src, d_model), jnp.float32)
    tgt = jax.random.randint(k_tgt, (B, Sy), 0, num_classes, jnp.int32)

    fwd = jax.jit(functools.partial(decoder_forward, d_model=d_model,
                                    num_heads=num_heads, num_classes=num_classes))
    out = jax.block_until_ready(fwd(params, src, tgt))

    assert out.shape == (B, Sy, num_classes)
    assert bool(jnp.all(jnp.isfinite(out)))
    print("KERNEL_OK")
</pallas_src>

<mosaic_0001>
module attributes {stable_mosaic.version = 11 : i64} {
  func.func @_classifier_kernel(%arg0: memref<16x32xf32, #tpu.memory_space<vmem>>, %arg1: memref<32x128xbf16, #tpu.memory_space<vmem>>, %arg2: memref<1x128xf32, #tpu.memory_space<vmem>>, %arg3: memref<16x128xf32, #tpu.memory_space<vmem>>) attributes {dimension_semantics = [], scalar_prefetch = 0 : i64, scratch_operands = 0 : i64, tpu.core_type = #tpu.core_type<tc>} {
    %c0 = arith.constant 0 : index
    %c0_0 = arith.constant 0 : index
    %0 = vector.load %arg0[%c0, %c0_0] : memref<16x32xf32, #tpu.memory_space<vmem>>, vector<16x32xf32>
    %c0_1 = arith.constant 0 : index
    %c0_2 = arith.constant 0 : index
    %1 = vector.load %arg1[%c0_1, %c0_2] : memref<32x128xbf16, #tpu.memory_space<vmem>>, vector<32x128xbf16>
    %c0_3 = arith.constant 0 : index
    %c0_4 = arith.constant 0 : index
    %2 = vector.load %arg2[%c0_3, %c0_4] : memref<1x128xf32, #tpu.memory_space<vmem>>, vector<1x128xf32>
    %3 = arith.truncf %0 : vector<16x32xf32> to vector<16x32xbf16>
    %cst = arith.constant dense<0.000000e+00> : vector<16x128xf32>
    %4 = tpu.matmul %3, %1, %cst {dimension_numbers = #tpu.dot_dimension_numbers<[1], [0], [0], [1], [0, 0, 1, 1], [], []>} : vector<16x32xbf16>, vector<32x128xbf16>, vector<16x128xf32> -> vector<16x128xf32>
    %5 = vector.broadcast %2 : vector<1x128xf32> to vector<16x128xf32>
    %6 = arith.addf %4, %5 : vector<16x128xf32>
    %c0_5 = arith.constant 0 : index
    %c0_6 = arith.constant 0 : index
    %7 = vector.load %arg3[%c0_5, %c0_6] : memref<16x128xf32, #tpu.memory_space<vmem>>, vector<16x128xf32>
    tpu.vector_store %arg3[%c0_5, %c0_6], %6 {strides = array<i32>} : memref<16x128xf32, #tpu.memory_space<vmem>>, vector<16x128xf32>,
    return
  }
}

module attributes {stable_mosaic.version = 11 : i64} {
  func.func @_decoder_layer_kernel(%arg0: memref<2x8x32xf32, #tpu.memory_space<vmem>>, %arg1: memref<2x12x32xf32, #tpu.memory_space<vmem>>, %arg2: memref<8x8xf32, #tpu.memory_space<vmem>>, %arg3: memref<32x96xbf16, #tpu.memory_space<vmem>>, %arg4: memref<1x96xf32, #tpu.memory_space<vmem>>, %arg5: memref<32x32xf32, #tpu.memory_space<vmem>>, %arg6: memref<1x32xf32, #tpu.memory_space<vmem>>, %arg7: memref<1x32xf32, #tpu.memory_space<vmem>>, %arg8: memref<1x32xf32, #tpu.memory_space<vmem>>, %arg9: memref<32x32xbf16, #tpu.memory_space<vmem>>, %arg10: memref<1x32xf32, #tpu.memory_space<vmem>>, %arg11: memref<32x64xbf16, #tpu.memory_space<vmem>>, %arg12: memref<1x64xf32, #tpu.memory_space<vmem>>, %arg13: memref<32x32xf32, #tpu.memory_space<vmem>>, %arg14: memref<1x32xf32, #tpu.memory_space<vmem>>, %arg15: memref<1x32xf32, #tpu.memory_space<vmem>>, %arg16: memref<1x32xf32, #tpu.memory_space<vmem>>, %arg17: memref<32x64xbf16, #tpu.memory_space<vmem>>, %arg18: memref<1x64xf32, #tpu.memory_space<vmem>>, %arg19: memref<64x32xbf16, #tpu.memory_space<vmem>>, %arg20: memref<1x32xf32, #tpu.memory_space<vmem>>, %arg21: memref<1x32xf32, #tpu.memory_space<vmem>>, %arg22: memref<1x32xf32, #tpu.memory_space<vmem>>, %arg23: memref<2x8x32xf32, #tpu.memory_space<vmem>>) attributes {dimension_semantics = [], scalar_prefetch = 0 : i64, scratch_operands = 0 : i64, tpu.core_type = #tpu.core_type<tc>} {
    %c0 = arith.constant 0 : index
    %c0_0 = arith.constant 0 : index
    %c0_1 = arith.constant 0 : index
    %0 = vector.load %arg0[%c0, %c0_0, %c0_1] : memref<2x8x32xf32, #tpu.memory_space<vmem>>, vector<2x8x32xf32>
    %1 = vector.shape_cast %0 : vector<2x8x32xf32> to vector<16x32xf32>
    %c0_2 = arith.constant 0 : index
    %c0_3 = arith.constant 0 : index
    %c0_4 = arith.constant 0 : index
    %2 = vector.load %arg1[%c0_2, %c0_3, %c0_4] : memref<2x12x32xf32, #tpu.memory_space<vmem>>, vector<2x12x32xf32>
    %3 = vector.shape_cast %2 : vector<2x12x32xf32> to vector<24x32xf32>
    %c0_5 = arith.constant 0 : index
    %c0_6 = arith.constant 0 : index
    %4 = vector.load %arg2[%c0_5, %c0_6] : memref<8x8xf32, #tpu.memory_space<vmem>>, vector<8x8xf32>
    %c0_7 = arith.constant 0 : index
    %c0_8 = arith.constant 0 : index
    %5 = vector.load %arg3[%c0_7, %c0_8] : memref<32x96xbf16, #tpu.memory_space<vmem>>, vector<32x96xbf16>
    %c0_9 = arith.constant 0 : index
    %c0_10 = arith.constant 0 : index
    %6 = vector.load %arg4[%c0_9, %c0_10] : memref<1x96xf32, #tpu.memory_space<vmem>>, vector<1x96xf32>
    %7 = arith.truncf %1 : vector<16x32xf32> to vector<16x32xbf16>
    %cst = arith.constant dense<0.000000e+00> : vector<16x96xf32>
    %8 = tpu.matmul %7, %5, %cst {dimension_numbers = #tpu.dot_dimension_numbers<[1], [0], [0], [1], [0, 0, 1, 1], [], []>} : vector<16x32xbf16>, vector<32x96xbf16>, vector<16x96xf32> -> vector<16x96xf32>
    %9 = vector.broadcast %6 : vector<1x96xf32> to vector<16x96xf32>
    %10 = arith.addf %8, %9 : vector<16x96xf32>
    %11 = vector.extract_strided_slice %10 {offsets = [0, 0], sizes = [16, 32], strides = [1, 1]} : vector<16x96xf32> to vector<16x32xf32>
    %12 = vector.extract_strided_slice %10 {offsets = [0, 32], sizes = [16, 32], strides = [1, 1]} : vector<16x96xf32> to vector<16x32xf32>
    %13 = vector.extract_strided_slice %10 {offsets = [0, 64], sizes = [16, 32], strides = [1, 1]} : vector<16x96xf32> to vector<16x32xf32>
    %cst_11 = arith.constant 0.000000e+00 : f32
    %14 = vector.broadcast %cst_11 : f32 to vector<16x32xf32>
    %15 = vector.extract_strided_slice %11 {offsets = [0, 0], sizes = [16, 8], strides = [1, 1]} : vector<16x32xf32> to vector<16x8xf32>
    %16 = vector.shape_cast %15 : vector<16x8xf32> to vector<2x8x8xf32>
    %17 = arith.truncf %16 : vector<2x8x8xf32> to vector<2x8x8xbf16>
    %18 = vector.extract_strided_slice %12 {offsets = [0, 0], sizes = [16, 8], strides = [1, 1]} : vector<16x32xf32> to vector<16x8xf32>
    %19 = vector.shape_cast %18 : vector<16x8xf32> to vector<2x8x8xf32>
    %20 = arith.truncf %19 : vector<2x8x8xf32> to vector<2x8x8xbf16>
    %21 = vector.extract_strided_slice %13 {offsets = [0, 0], sizes = [16, 8], strides = [1, 1]} : vector<16x32xf32> to vector<16x8xf32>
    %22 = vector.shape_cast %21 : vector<16x8xf32> to vector<2x8x8xf32>
    %23 = arith.truncf %22 : vector<2x8x8xf32> to vector<2x8x8xbf16>
    "tpu.trace_start"() <{level = 10 : i32, message = "bqd,bkd->bqk"}> : () -> ()
    %cst_12 = arith.constant dense<0.000000e+00> : vector<2x8x8xf32>
    %24 = tpu.matmul %17, %20, %cst_12 {dimension_numbers = #tpu.dot_dimension_numbers<[2], [2], [1], [1], [0, 0, 0, 1, 1, 1], [0], [0]>} : vector<2x8x8xbf16>, vector<2x8x8xbf16>, vector<2x8x8xf32> -> vector<2x8x8xf32>
    "tpu.trace_stop"() : () -> ()
    %cst_13 = arith.constant 0.353553385 : f32
    %25 = vector.broadcast %cst_13 : f32 to vector<2x8x8xf32>
    %26 = arith.mulf %24, %25 : vector<2x8x8xf32>
    %27 = vector.shape_cast %4 : vector<8x8xf32> to vector<1x8x8xf32>
    %28 = vector.broadcast %27 : vector<1x8x8xf32> to vector<2x8x8xf32>
    %29 = arith.addf %26, %28 : vector<2x8x8xf32>
    %cst_14 = arith.constant dense<0xFF800000> : vector<2x8xf32>
    %30 = vector.multi_reduction <maximumf>, %29, %cst_14 [2] : vector<2x8x8xf32> to vector<2x8xf32>
    %31 = vector.shape_cast %30 : vector<2x8xf32> to vector<2x8x1xf32>
    %32 = vector.broadcast %31 : vector<2x8x1xf32> to vector<2x8x8xf32>
    %33 = arith.subf %29, %32 : vector<2x8x8xf32>
    %34 = math.exp %33 : vector<2x8x8xf32>
    %cst_15 = arith.constant dense<0.000000e+00> : vector<2x8xf32>
    %35 = vector.multi_reduction <add>, %34, %cst_15 [2] : vector<2x8x8xf32> to vector<2x8xf32>
    %36 = vector.shape_cast %35 : vector<2x8xf32> to vector<2x8x1xf32>
    %37 = arith.truncf %34 : vector<2x8x8xf32> to vector<2x8x8xbf16>
    "tpu.trace_start"() <{level = 10 : i32, message = "bqk,bkd->bqd"}> : () -> ()
    %cst_16 = arith.constant dense<0.000000e+00> : vector<2x8x8xf32>
    %38 = tpu.matmul %37, %23, %cst_16 {dimension_numbers = #tpu.dot_dimension_numbers<[2], [1], [1], [2], [0, 0, 0, 1, 1, 2], [0], [0]>} : vector<2x8x8xbf16>, vector<2x8x8xbf16>, vector<2x8x8xf32> -> vector<2x8x8xf32>
    "tpu.trace_stop"() : () -> ()
    %39 = tpu.reciprocal %36 {approx = true} : vector<2x8x1xf32> -> vector<2x8x1xf32>
    %40 = vector.broadcast %39 : vector<2x8x1xf32> to vector<2x8x8xf32>
    %41 = arith.mulf %38, %40 : vector<2x8x8xf32>
    %42 = vector.shape_cast %41 : vector<2x8x8xf32> to vector<16x8xf32>
    %c0_17 = arith.constant 0 : index
    %c0_18 = arith.constant 0 : index
    %43 = vector.load %arg5[%c0_17, %c0_18] : memref<32x32xf32, #tpu.memory_space<vmem>>, vector<8x32xf32>
    %44 = arith.truncf %43 : vector<8x32xf32> to vector<8x32xbf16>
    %45 = arith.truncf %42 : vector<16x8xf32> to vector<16x8xbf16>
    %cst_19 = arith.constant dense<0.000000e+00> : vector<16x32xf32>
    %46 = tpu.matmul %45, %44, %cst_19 {dimension_numbers = #tpu.dot_dimension_numbers<[1], [0], [0], [1], [0, 0, 1, 1], [], []>} : vector<16x8xbf16>, vector<8x32xbf16>, vector<16x32xf32> -> vector<16x32xf32>
    %47 = arith.addf %14, %46 : vector<16x32xf32>
    %48 = vector.extract_strided_slice %11 {offsets = [0, 8], sizes = [16, 8], strides = [1, 1]} : vector<16x32xf32> to vector<16x8xf32>
    %49 = vector.shape_cast %48 : vector<16x8xf32> to vector<2x8x8xf32>
    %50 = arith.truncf %49 : vector<2x8x8xf32> to vector<2x8x8xbf16>
    %51 = vector.extract_strided_slice %12 {offsets = [0, 8], sizes = [16, 8], strides = [1, 1]} : vector<16x32xf32> to vector<16x8xf32>
    %52 = vector.shape_cast %51 : vector<16x8xf32> to vector<2x8x8xf32>
    %53 = arith.truncf %52 : vector<2x8x8xf32> to vector<2x8x8xbf16>
    %54 = vector.extract_strided_slice %13 {offsets = [0, 8], sizes = [16, 8], strides = [1, 1]} : vector<16x32xf32> to vector<16x8xf32>
    %55 = vector.shape_cast %54 : vector<16x8xf32> to vector<2x8x8xf32>
    %56 = arith.truncf %55 : vector<2x8x8xf32> to vector<2x8x8xbf16>
    "tpu.trace_start"() <{level = 10 : i32, message = "bqd,bkd->bqk"}> : () -> ()
    %cst_20 = arith.constant dense<0.000000e+00> : vector<2x8x8xf32>
    %57 = tpu.matmul %50, %53, %cst_20 {dimension_numbers = #tpu.dot_dimension_numbers<[2], [2], [1], [1], [0, 0, 0, 1, 1, 1], [0], [0]>} : vector<2x8x8xbf16>, vector<2x8x8xbf16>, vector<2x8x8xf32> -> vector<2x8x8xf32>
    "tpu.trace_stop"() : () -> ()
    %cst_21 = arith.constant 0.353553385 : f32
    %58 = vector.broadcast %cst_21 : f32 to vector<2x8x8xf32>
    %59 = arith.mulf %57, %58 : vector<2x8x8xf32>
    %60 = vector.shape_cast %4 : vector<8x8xf32> to vector<1x8x8xf32>
    %61 = vector.broadcast %60 : vector<1x8x8xf32> to vector<2x8x8xf32>
    %62 = arith.addf %59, %61 : vector<2x8x8xf32>
    %cst_22 = arith.constant dense<0xFF800000> : vector<2x8xf32>
    %63 = vector.multi_reduction <maximumf>, %62, %cst_22 [2] : vector<2x8x8xf32> to vector<2x8xf32>
    %64 = vector.shape_cast %63 : vector<2x8xf32> to vector<2x8x1xf32>
    %65 = vector.broadcast %64 : vector<2x8x1xf32> to vector<2x8x8xf32>
    %66 = arith.subf %62, %65 : vector<2x8x8xf32>
    %67 = math.exp %66 : vector<2x8x8xf32>
    %cst_23 = arith.constant dense<0.000000e+00> : vector<2x8xf32>
    %68 = vector.multi_reduction <add>, %67, %cst_23 [2] : vector<2x8x8xf32> to vector<2x8xf32>
    %69 = vector.shape_cast %68 : vector<2x8xf32> to vector<2x8x1xf32>
    %70 = arith.truncf %67 : vector<2x8x8xf32> to vector<2x8x8xbf16>
    "tpu.trace_start"() <{level = 10 : i32, message = "bqk,bkd->bqd"}> : () -> ()
    %cst_24 = arith.constant dense<0.000000e+00> : vector<2x8x8xf32>
    %71 = tpu.matmul %70, %56, %cst_24 {dimension_numbers = #tpu.dot_dimension_numbers<[2], [1], [1], [2], [0, 0, 0, 1, 1, 2], [0], [0]>} : vector<2x8x8xbf16>, vector<2x8x8xbf16>, vector<2x8x8xf32> -> vector<2x8x8xf32>
    "tpu.trace_stop"() : () -> ()
    %72 = tpu.reciprocal %69 {approx = true} : vector<2x8x1xf32> -> vector<2x8x1xf32>
    %73 = vector.broadcast %72 : vector<2x8x1xf32> to vector<2x8x8xf32>
    %74 = arith.mulf %71, %73 : vector<2x8x8xf32>
    %75 = vector.shape_cast %74 : vector<2x8x8xf32> to vector<16x8xf32>
    %c8 = arith.constant 8 : index
    %c0_25 = arith.constant 0 : index
    %76 = vector.load %arg5[%c8, %c0_25] : memref<32x32xf32, #tpu.memory_space<vmem>>, vector<8x32xf32>
    %77 = arith.truncf %76 : vector<8x32xf32> to vector<8x32xbf16>
    %78 = arith.truncf %75 : vector<16x8xf32> to vector<16x8xbf16>
    %cst_26 = arith.constant dense<0.000000e+00> : vector<16x32xf32>
    %79 = tpu.matmul %78, %77, %cst_26 {dimension_numbers = #tpu.dot_dimension_numbers<[1], [0], [0], [1], [0, 0, 1, 1], [], []>} : vector<16x8xbf16>, vector<8x32xbf16>, vector<16x32xf32> -> vector<16x32xf32>
    %80 = arith.addf %47, %79 : vector<16x32xf32>
    %81 = vector.extract_strided_slice %11 {offsets = [0, 16], sizes = [16, 8], strides = [1, 1]} : vector<16x32xf32> to vector<16x8xf32>
    %82 = vector.shape_cast %81 : vector<16x8xf32> to vector<2x8x8xf32>
    %83 = arith.truncf %82 : vector<2x8x8xf32> to vector<2x8x8xbf16>
    %84 = vector.extract_strided_slice %12 {offsets = [0, 16], sizes = [16, 8], strides = [1, 1]} : vector<16x32xf32> to vector<16x8xf32>
    %85 = vector.shape_cast %84 : vector<16x8xf32> to vector<2x8x8xf32>
    %86 = arith.truncf %85 : vector<2x8x8xf32> to vector<2x8x8xbf16>
    %87 = vector.extract_strided_slice %13 {offsets = [0, 16], sizes = [16, 8], strides = [1, 1]} : vector<16x32xf32> to vector<16x8xf32>
    %88 = vector.shape_cast %87 : vector<16x8xf32> to vector<2x8x8xf32>
    %89 = arith.truncf %88 : vector<2x8x8xf32> to vector<2x8x8xbf16>
    "tpu.trace_start"() <{level = 10 : i32, message = "bqd,bkd->bqk"}> : () -> ()
    %cst_27 = arith.constant dense<0.000000e+00> : vector<2x8x8xf32>
    %90 = tpu.matmul %83, %86, %cst_27 {dimension_numbers = #tpu.dot_dimension_numbers<[2], [2], [1], [1], [0, 0, 0, 1, 1, 1], [0], [0]>} : vector<2x8x8xbf16>, vector<2x8x8xbf16>, vector<2x8x8xf32> -> vector<2x8x8xf32>
    "tpu.trace_stop"() : () -> ()
    %cst_28 = arith.constant 0.353553385 : f32
    %91 = vector.broadcast %cst_28 : f32 to vector<2x8x8xf32>
    %92 = arith.mulf %90, %91 : vector<2x8x8xf32>
    %93 = vector.shape_cast %4 : vector<8x8xf32> to vector<1x8x8xf32>
    %94 = vector.broadcast %93 : vector<1x8x8xf32> to vector<2x8x8xf32>
    %95 = arith.addf %92, %94 : vector<2x8x8xf32>
    %cst_29 = arith.constant dense<0xFF800000> : vector<2x8xf32>
    %96 = vector.multi_reduction <maximumf>, %95, %cst_29 [2] : vector<2x8x8xf32> to vector<2x8xf32>
    %97 = vector.shape_cast %96 : vector<2x8xf32> to vector<2x8x1xf32>
    %98 = vector.broadcast %97 : vector<2x8x1xf32> to vector<2x8x8xf32>
    %99 = arith.subf %95, %98 : vector<2x8x8xf32>
    %100 = math.exp %99 : vector<2x8x8xf32>
    %cst_30 = arith.constant dense<0.000000e+00> : vector<2x8xf32>
    %101 = vector.multi_reduction <add>, %100, %cst_30 [2] : vector<2x8x8xf32> to vector<2x8xf32>
    %102 = vector.shape_cast %101 : vector<2x8xf32> to vector<2x8x1xf32>
    %103 = arith.truncf %100 : vector<2x8x8xf32> to vector<2x8x8xbf16>
    "tpu.trace_start"() <{level = 10 : i32, message = "bqk,bkd->bqd"}> : () -> ()
    %cst_31 = arith.constant dense<0.000000e+00> : vector<2x8x8xf32>
    %104 = tpu.matmul %103, %89, %cst_31 {dimension_numbers = #tpu.dot_dimension_numbers<[2], [1], [1], [2], [0, 0, 0, 1, 1, 2], [0], [0]>} : vector<2x8x8xbf16>, vector<2x8x8xbf16>, vector<2x8x8xf32> -> vector<2x8x8xf32>
    "tpu.trace_stop"() : () -> ()
    %105 = tpu.reciprocal %102 {approx = true} : vector<2x8x1xf32> -> vector<2x8x1xf32>
    %106 = vector.broadcast %105 : vector<2x8x1xf32> to vector<2x8x8xf32>
    %107 = arith.mulf %104, %106 : vector<2x8x8xf32>
    %108 = vector.shape_cast %107 : vector<2x8x8xf32> to vector<16x8xf32>
    %c16 = arith.constant 16 : index
    %c0_32 = arith.constant 0 : index
    %109 = vector.load %arg5[%c16, %c0_32] : memref<32x32xf32, #tpu.memory_space<vmem>>, vector<8x32xf32>
    %110 = arith.truncf %109 : vector<8x32xf32> to vector<8x32xbf16>
    %111 = arith.truncf %108 : vector<16x8xf32> to vector<16x8xbf16>
    %cst_33 = arith.constant dense<0.000000e+00> : vector<16x32xf32>
    %112 = tpu.matmul %111, %110, %cst_33 {dimension_numbers = #tpu.dot_dimension_numbers<[1], [0], [0], [1], [0, 0, 1, 1], [], []>} : vector<16x8xbf16>, vector<8x32xbf16>, vector<16x32xf32> -> vector<16x32xf32>
    %113 = arith.addf %80, %112 : vector<16x32xf32>
    %114 = vector.extract_strided_slice %11 {offsets = [0, 24], sizes = [16, 8], strides = [1, 1]} : vector<16x32xf32> to vector<16x8xf32>
    %115 = vector.shape_cast %114 : vector<16x8xf32> to vector<2x8x8xf32>
    %116 = arith.truncf %115 : vector<2x8x8xf32> to vector<2x8x8xbf16>
    %117 = vector.extract_strided_slice %12 {offsets = [0, 24], sizes = [16, 8], strides = [1, 1]} : vector<16x32xf32> to vector<16x8xf32>
    %118 = vector.shape_cast %117 : vector<16x8xf32> to vector<2x8x8xf32>
    %119 = arith.truncf %118 : vector<2x8x8xf32> to vector<2x8x8xbf16>
    %120 = vector.extract_strided_slice %13 {offsets = [0, 24], sizes = [16, 8], strides = [1, 1]} : vector<16x32xf32> to vector<16x8xf32>
    %121 = vector.shape_cast %120 : vector<16x8xf32> to vector<2x8x8xf32>
    %122 = arith.truncf %121 : vector<2x8x8xf32> to vector<2x8x8xbf16>
    "tpu.trace_start"() <{level = 10 : i32, message = "bqd,bkd->bqk"}> : () -> ()
    %cst_34 = arith.constant dense<0.000000e+00> : vector<2x8x8xf32>
    %123 = tpu.matmul %116, %119, %cst_34 {dimension_numbers = #tpu.dot_dimension_numbers<[2], [2], [1], [1], [0, 0, 0, 1, 1, 1], [0], [0]>} : vector<2x8x8xbf16>, vector<2x8x8xbf16>, vector<2x8x8xf32> -> vector<2x8x8xf32>
    "tpu.trace_stop"() : () -> ()
    %cst_35 = arith.constant 0.353553385 : f32
    %124 = vector.broadcast %cst_35 : f32 to vector<2x8x8xf32>
    %125 = arith.mulf %123, %124 : vector<2x8x8xf32>
    %126 = vector.shape_cast %4 : vector<8x8xf32> to vector<1x8x8xf32>
    %127 = vector.broadcast %126 : vector<1x8x8xf32> to vector<2x8x8xf32>
    %128 = arith.addf %125, %127 : vector<2x8x8xf32>
    %cst_36 = arith.constant dense<0xFF800000> : vector<2x8xf32>
    %129 = vector.multi_reduction <maximumf>, %128, %cst_36 [2] : vector<2x8x8xf32> to vector<2x8xf32>
    %130 = vector.shape_cast %129 : vector<2x8xf32> to vector<2x8x1xf32>
    %131 = vector.broadcast %130 : vector<2x8x1xf32> to vector<2x8x8xf32>
    %132 = arith.subf %128, %131 : vector<2x8x8xf32>
    %133 = math.exp %132 : vector<2x8x8xf32>
    %cst_37 = arith.constant dense<0.000000e+00> : vector<2x8xf32>
    %134 = vector.multi_reduction <add>, %133, %cst_37 [2] : vector<2x8x8xf32> to vector<2x8xf32>
    %135 = vector.shape_cast %134 : vector<2x8xf32> to vector<2x8x1xf32>
    %136 = arith.truncf %133 : vector<2x8x8xf32> to vector<2x8x8xbf16>
    "tpu.trace_start"() <{level = 10 : i32, message = "bqk,bkd->bqd"}> : () -> ()
    %cst_38 = arith.constant dense<0.000000e+00> : vector<2x8x8xf32>
    %137 = tpu.matmul %136, %122, %cst_38 {dimension_numbers = #tpu.dot_dimension_numbers<[2], [1], [1], [2], [0, 0, 0, 1, 1, 2], [0], [0]>} : vector<2x8x8xbf16>, vector<2x8x8xbf16>, vector<2x8x8xf32> -> vector<2x8x8xf32>
    "tpu.trace_stop"() : () -> ()
    %138 = tpu.reciprocal %135 {approx = true} : vector<2x8x1xf32> -> vector<2x8x1xf32>
    %139 = vector.broadcast %138 : vector<2x8x1xf32> to vector<2x8x8xf32>
    %140 = arith.mulf %137, %139 : vector<2x8x8xf32>
    %141 = vector.shape_cast %140 : vector<2x8x8xf32> to vector<16x8xf32>
    %c24 = arith.constant 24 : index
    %c0_39 = arith.constant 0 : index
    %142 = vector.load %arg5[%c24, %c0_39] : memref<32x32xf32, #tpu.memory_space<vmem>>, vector<8x32xf32>
    %143 = arith.truncf %142 : vector<8x32xf32> to vector<8x32xbf16>
    %144 = arith.truncf %141 : vector<16x8xf32> to vector<16x8xbf16>
    %cst_40 = arith.constant dense<0.000000e+00> : vector<16x32xf32>
    %145 = tpu.matmul %144, %143, %cst_40 {dimension_numbers = #tpu.dot_dimension_numbers<[1], [0], [0], [1], [0, 0, 1, 1], [], []>} : vector<16x8xbf16>, vector<8x32xbf16>, vector<16x32xf32> -> vector<16x32xf32>
    %146 = arith.addf %113, %145 : vector<16x32xf32>
    %c0_41 = arith.constant 0 : index
    %c0_42 = arith.constant 0 : index
    %147 = vector.load %arg6[%c0_41, %c0_42] : memref<1x32xf32, #tpu.memory_space<vmem>>, vector<1x32xf32>
    %148 = vector.broadcast %147 : vector<1x32xf32> to vector<16x32xf32>
    %149 = arith.addf %146, %148 : vector<16x32xf32>
    %150 = arith.addf %1, %149 : vector<16x32xf32>
    %c0_43 = arith.constant 0 : index
    %c0_44 = arith.constant 0 : index
    %151 = vector.load %arg7[%c0_43, %c0_44] : memref<1x32xf32, #tpu.memory_space<vmem>>, vector<1x32xf32>
    %c0_45 = arith.constant 0 : index
    %c0_46 = arith.constant 0 : index
    %152 = vector.load %arg8[%c0_45, %c0_46] : memref<1x32xf32, #tpu.memory_space<vmem>>, vector<1x32xf32>
    %cst_47 = arith.constant dense<0.000000e+00> : vector<16xf32>
    %153 = vector.multi_reduction <add>, %150, %cst_47 [1] : vector<16x32xf32> to vector<16xf32>
    %154 = vector.shape_cast %153 : vector<16xf32> to vector<16x1xf32>
    %cst_48 = arith.constant 3.200000e+01 : f32
    %155 = vector.broadcast %cst_48 : f32 to vector<16x1xf32>
    %156 = arith.divf %154, %155 : vector<16x1xf32>
    %157 = vector.broadcast %156 : vector<16x1xf32> to vector<16x32xf32>
    %158 = arith.subf %150, %157 : vector<16x32xf32>
    %159 = arith.mulf %158, %158 : vector<16x32xf32>
    %cst_49 = arith.constant dense<0.000000e+00> : vector<16xf32>
    %160 = vector.multi_reduction <add>, %159, %cst_49 [1] : vector<16x32xf32> to vector<16xf32>
    %161 = vector.shape_cast %160 : vector<16xf32> to vector<16x1xf32>
    %cst_50 = arith.constant 3.200000e+01 : f32
    %162 = vector.broadcast %cst_50 : f32 to vector<16x1xf32>
    %163 = arith.divf %161, %162 : vector<16x1xf32>
    %cst_51 = arith.constant 9.99999974E-6 : f32
    %164 = vector.broadcast %cst_51 : f32 to vector<16x1xf32>
    %165 = arith.addf %163, %164 : vector<16x1xf32>
    %166 = math.rsqrt %165 : vector<16x1xf32>
    %167 = vector.broadcast %166 : vector<16x1xf32> to vector<16x32xf32>
    %168 = arith.mulf %158, %167 : vector<16x32xf32>
    %169 = vector.broadcast %151 : vector<1x32xf32> to vector<16x32xf32>
    %170 = arith.mulf %168, %169 : vector<16x32xf32>
    %171 = vector.broadcast %152 : vector<1x32xf32> to vector<16x32xf32>
    %172 = arith.addf %170, %171 : vector<16x32xf32>
    %c0_52 = arith.constant 0 : index
    %c0_53 = arith.constant 0 : index
    %173 = vector.load %arg9[%c0_52, %c0_53] : memref<32x32xbf16, #tpu.memory_space<vmem>>, vector<32x32xbf16>
    %c0_54 = arith.constant 0 : index
    %c0_55 = arith.constant 0 : index
    %174 = vector.load %arg10[%c0_54, %c0_55] : memref<1x32xf32, #tpu.memory_space<vmem>>, vector<1x32xf32>
    %175 = arith.truncf %172 : vector<16x32xf32> to vector<16x32xbf16>
    %cst_56 = arith.constant dense<0.000000e+00> : vector<16x32xf32>
    %176 = tpu.matmul %175, %173, %cst_56 {dimension_numbers = #tpu.dot_dimension_numbers<[1], [0], [0], [1], [0, 0, 1, 1], [], []>} : vector<16x32xbf16>, vector<32x32xbf16>, vector<16x32xf32> -> vector<16x32xf32>
    %177 = vector.broadcast %174 : vector<1x32xf32> to vector<16x32xf32>
    %178 = arith.addf %176, %177 : vector<16x32xf32>
    %c0_57 = arith.constant 0 : index
    %c0_58 = arith.constant 0 : index
    %179 = vector.load %arg11[%c0_57, %c0_58] : memref<32x64xbf16, #tpu.memory_space<vmem>>, vector<32x64xbf16>
    %c0_59 = arith.constant 0 : index
    %c0_60 = arith.constant 0 : index
    %180 = vector.load %arg12[%c0_59, %c0_60] : memref<1x64xf32, #tpu.memory_space<vmem>>, vector<1x64xf32>
    %181 = arith.truncf %3 : vector<24x32xf32> to vector<24x32xbf16>
    %cst_61 = arith.constant dense<0.000000e+00> : vector<24x64xf32>
    %182 = tpu.matmul %181, %179, %cst_61 {dimension_numbers = #tpu.dot_dimension_numbers<[1], [0], [0], [1], [0, 0, 1, 1], [], []>} : vector<24x32xbf16>, vector<32x64xbf16>, vector<24x64xf32> -> vector<24x64xf32>
    %183 = vector.broadcast %180 : vector<1x64xf32> to vector<24x64xf32>
    %184 = arith.addf %182, %183 : vector<24x64xf32>
    %185 = vector.extract_strided_slice %184 {offsets = [0, 0], sizes = [24, 32], strides = [1, 1]} : vector<24x64xf32> to vector<24x32xf32>
    %186 = vector.extract_strided_slice %184 {offsets = [0, 32], sizes = [24, 32], strides = [1, 1]} : vector<24x64xf32> to vector<24x32xf32>
    %cst_62 = arith.constant 0.000000e+00 : f32
    %187 = vector.broadcast %cst_62 : f32 to vector<16x32xf32>
    %188 = vector.extract_strided_slice %178 {offsets = [0, 0], sizes = [16, 8], strides = [1, 1]} : vector<16x32xf32> to vector<16x8xf32>
    %189 = vector.shape_cast %188 : vector<16x8xf32> to vector<2x8x8xf32>
    %190 = arith.truncf %189 : vector<2x8x8xf32> to vector<2x8x8xbf16>
    %191 = vector.extract_strided_slice %185 {offsets = [0, 0], sizes = [24, 8], strides = [1, 1]} : vector<24x32xf32> to vector<24x8xf32>
    %192 = vector.shape_cast %191 : vector<24x8xf32> to vector<2x12x8xf32>
    %193 = arith.truncf %192 : vector<2x12x8xf32> to vector<2x12x8xbf16>
    %194 = vector.extract_strided_slice %186 {offsets = [0, 0], sizes = [24, 8], strides = [1, 1]} : vector<24x32xf32> to vector<24x8xf32>
    %195 = vector.shape_cast %194 : vector<24x8xf32> to vector<2x12x8xf32>
    %196 = arith.truncf %195 : vector<2x12x8xf32> to vector<2x12x8xbf16>
    "tpu.trace_start"() <{level = 10 : i32, message = "bqd,bkd->bqk"}> : () -> ()
    %cst_63 = arith.constant dense<0.000000e+00> : vector<2x8x12xf32>
    %197 = tpu.matmul %190, %193, %cst_63 {dimension_numbers = #tpu.dot_dimension_numbers<[2], [2], [1], [1], [0, 0, 0, 1, 1, 1], [0], [0]>} : vector<2x8x8xbf16>, vector<2x12x8xbf16>, vector<2x8x12xf32> -> vector<2x8x12xf32>
    "tpu.trace_stop"() : () -> ()
    %cst_64 = arith.constant 0.353553385 : f32
    %198 = vector.broadcast %cst_64 : f32 to vector<2x8x12xf32>
    %199 = arith.mulf %197, %198 : vector<2x8x12xf32>
    %cst_65 = arith.constant dense<0xFF800000> : vector<2x8xf32>
    %200 = vector.multi_reduction <maximumf>, %199, %cst_65 [2] : vector<2x8x12xf32> to vector<2x8xf32>
    %201 = vector.shape_cast %200 : vector<2x8xf32> to vector<2x8x1xf32>
    %202 = vector.broadcast %201 : vector<2x8x1xf32> to vector<2x8x12xf32>
    %203 = arith.subf %199, %202 : vector<2x8x12xf32>
    %204 = math.exp %203 : vector<2x8x12xf32>
    %cst_66 = arith.constant dense<0.000000e+00> : vector<2x8xf32>
    %205 = vector.multi_reduction <add>, %204, %cst_66 [2] : vector<2x8x12xf32> to vector<2x8xf32>
    %206 = vector.shape_cast %205 : vector<2x8xf32> to vector<2x8x1xf32>
    %207 = arith.truncf %204 : vector<2x8x12xf32> to vector<2x8x12xbf16>
    "tpu.trace_start"() <{level = 10 : i32, message = "bqk,bkd->bqd"}> : () -> ()
    %cst_67 = arith.constant dense<0.000000e+00> : vector<2x8x8xf32>
    %208 = tpu.matmul %207, %196, %cst_67 {dimension_numbers = #tpu.dot_dimension_numbers<[2], [1], [1], [2], [0, 0, 0, 1, 1, 2], [0], [0]>} : vector<2x8x12xbf16>, vector<2x12x8xbf16>, vector<2x8x8xf32> -> vector<2x8x8xf32>
    "tpu.trace_stop"() : () -> ()
    %209 = tpu.reciprocal %206 {approx = true} : vector<2x8x1xf32> -> vector<2x8x1xf32>
    %210 = vector.broadcast %209 : vector<2x8x1xf32> to vector<2x8x8xf32>
    %211 = arith.mulf %208, %210 : vector<2x8x8xf32>
    %212 = vector.shape_cast %211 : vector<2x8x8xf32> to vector<16x8xf32>
    %c0_68 = arith.constant 0 : index
    %c0_69 = arith.constant 0 : index
    %213 = vector.load %arg13[%c0_68, %c0_69] : memref<32x32xf32, #tpu.memory_space<vmem>>, vector<8x32xf32>
    %214 = arith.truncf %213 : vector<8x32xf32> to vector<8x32xbf16>
    %215 = arith.truncf %212 : vector<16x8xf32> to vector<16x8xbf16>
    %cst_70 = arith.constant dense<0.000000e+00> : vector<16x32xf32>
    %216 = tpu.matmul %215, %214, %cst_70 {dimension_numbers = #tpu.dot_dimension_numbers<[1], [0], [0], [1], [0, 0, 1, 1], [], []>} : vector<16x8xbf16>, vector<8x32xbf16>, vector<16x32xf32> -> vector<16x32xf32>
    %217 = arith.addf %187, %216 : vector<16x32xf32>
    %218 = vector.extract_strided_slice %178 {offsets = [0, 8], sizes = [16, 8], strides = [1, 1]} : vector<16x32xf32> to vector<16x8xf32>
    %219 = vector.shape_cast %218 : vector<16x8xf32> to vector<2x8x8xf32>
    %220 = arith.truncf %219 : vector<2x8x8xf32> to vector<2x8x8xbf16>
    %221 = vector.extract_strided_slice %185 {offsets = [0, 8], sizes = [24, 8], strides = [1, 1]} : vector<24x32xf32> to vector<24x8xf32>
    %222 = vector.shape_cast %221 : vector<24x8xf32> to vector<2x12x8xf32>
    %223 = arith.truncf %222 : vector<2x12x8xf32> to vector<2x12x8xbf16>
    %224 = vector.extract_strided_slice %186 {offsets = [0, 8], sizes = [24, 8], strides = [1, 1]} : vector<24x32xf32> to vector<24x8xf32>
    %225 = vector.shape_cast %224 : vector<24x8xf32> to vector<2x12x8xf32>
    %226 = arith.truncf %225 : vector<2x12x8xf32> to vector<2x12x8xbf16>
    "tpu.trace_start"() <{level = 10 : i32, message = "bqd,bkd->bqk"}> : () -> ()
    %cst_71 = arith.constant dense<0.000000e+00> : vector<2x8x12xf32>
    %227 = tpu.matmul %220, %223, %cst_71 {dimension_numbers = #tpu.dot_dimension_numbers<[2], [2], [1], [1], [0, 0, 0, 1, 1, 1], [0], [0]>} : vector<2x8x8xbf16>, vector<2x12x8xbf16>, vector<2x8x12xf32> -> vector<2x8x12xf32>
    "tpu.trace_stop"() : () -> ()
    %cst_72 = arith.constant 0.353553385 : f32
    %228 = vector.broadcast %cst_72 : f32 to vector<2x8x12xf32>
    %229 = arith.mulf %227, %228 : vector<2x8x12xf32>
    %cst_73 = arith.constant dense<0xFF800000> : vector<2x8xf32>
    %230 = vector.multi_reduction <maximumf>, %229, %cst_73 [2] : vector<2x8x12xf32> to vector<2x8xf32>
    %231 = vector.shape_cast %230 : vector<2x8xf32> to vector<2x8x1xf32>
    %232 = vector.broadcast %231 : vector<2x8x1xf32> to vector<2x8x12xf32>
    %233 = arith.subf %229, %232 : vector<2x8x12xf32>
    %234 = math.exp %233 : vector<2x8x12xf32>
    %cst_74 = arith.constant dense<0.000000e+00> : vector<2x8xf32>
    %235 = vector.multi_reduction <add>, %234, %cst_74 [2] : vector<2x8x12xf32> to vector<2x8xf32>
    %236 = vector.shape_cast %235 : vector<2x8xf32> to vector<2x8x1xf32>
    %237 = arith.truncf %234 : vector<2x8x12xf32> to vector<2x8x12xbf16>
    "tpu.trace_start"() <{level = 10 : i32, message = "bqk,bkd->bqd"}> : () -> ()
    %cst_75 = arith.constant dense<0.000000e+00> : vector<2x8x8xf32>
    %238 = tpu.matmul %237, %226, %cst_75 {dimension_numbers = #tpu.dot_dimension_numbers<[2], [1], [1], [2], [0, 0, 0, 1, 1, 2], [0], [0]>} : vector<2x8x12xbf16>, vector<2x12x8xbf16>, vector<2x8x8xf32> -> vector<2x8x8xf32>
    "tpu.trace_stop"() : () -> ()
    %239 = tpu.reciprocal %236 {approx = true} : vector<2x8x1xf32> -> vector<2x8x1xf32>
    %240 = vector.broadcast %239 : vector<2x8x1xf32> to vector<2x8x8xf32>
    %241 = arith.mulf %238, %240 : vector<2x8x8xf32>
    %242 = vector.shape_cast %241 : vector<2x8x8xf32> to vector<16x8xf32>
    %c8_76 = arith.constant 8 : index
    %c0_77 = arith.constant 0 : index
    %243 = vector.load %arg13[%c8_76, %c0_77] : memref<32x32xf32, #tpu.memory_space<vmem>>, vector<8x32xf32>
    %244 = arith.truncf %243 : vector<8x32xf32> to vector<8x32xbf16>
    %245 = arith.truncf %242 : vector<16x8xf32> to vector<16x8xbf16>
    %cst_78 = arith.constant dense<0.000000e+00> : vector<16x32xf32>
    %246 = tpu.matmul %245, %244, %cst_78 {dimension_numbers = #tpu.dot_dimension_numbers<[1], [0], [0], [1], [0, 0, 1, 1], [], []>} : vector<16x8xbf16>, vector<8x32xbf16>, vector<16x32xf32> -> vector<16x32xf32>
    %247 = arith.addf %217, %246 : vector<16x32xf32>
    %248 = vector.extract_strided_slice %178 {offsets = [0, 16], sizes = [16, 8], strides = [1, 1]} : vector<16x32xf32> to vector<16x8xf32>
    %249 = vector.shape_cast %248 : vector<16x8xf32> to vector<2x8x8xf32>
    %250 = arith.truncf %249 : vector<2x8x8xf32> to vector<2x8x8xbf16>
    %251 = vector.extract_strided_slice %185 {offsets = [0, 16], sizes = [24, 8], strides = [1, 1]} : vector<24x32xf32> to vector<24x8xf32>
    %252 = vector.shape_cast %251 : vector<24x8xf32> to vector<2x12x8xf32>
    %253 = arith.truncf %252 : vector<2x12x8xf32> to vector<2x12x8xbf16>
    %254 = vector.extract_strided_slice %186 {offsets = [0, 16], sizes = [24, 8], strides = [1, 1]} : vector<24x32xf32> to vector<24x8xf32>
    %255 = vector.shape_cast %254 : vector<24x8xf32> to vector<2x12x8xf32>
    %256 = arith.truncf %255 : vector<2x12x8xf32> to vector<2x12x8xbf16>
    "tpu.trace_start"() <{level = 10 : i32, message = "bqd,bkd->bqk"}> : () -> ()
    %cst_79 = arith.constant dense<0.000000e+00> : vector<2x8x12xf32>
    %257 = tpu.matmul %250, %253, %cst_79 {dimension_numbers = #tpu.dot_dimension_numbers<[2], [2], [1], [1], [0, 0, 0, 1, 1, 1], [0], [0]>} : vector<2x8x8xbf16>, vector<2x12x8xbf16>, vector<2x8x12xf32> -> vector<2x8x12xf32>
    "tpu.trace_stop"() : () -> ()
    %cst_80 = arith.constant 0.353553385 : f32
    %258 = vector.broadcast %cst_80 : f32 to vector<2x8x12xf32>
    %259 = arith.mulf %257, %258 : vector<2x8x12xf32>
    %cst_81 = arith.constant dense<0xFF800000> : vector<2x8xf32>
    %260 = vector.multi_reduction <maximumf>, %259, %cst_81 [2] : vector<2x8x12xf32> to vector<2x8xf32>
    %261 = vector.shape_cast %260 : vector<2x8xf32> to vector<2x8x1xf32>
    %262 = vector.broadcast %261 : vector<2x8x1xf32> to vector<2x8x12xf32>
    %263 = arith.subf %259, %262 : vector<2x8x12xf32>
    %264 = math.exp %263 : vector<2x8x12xf32>
    %cst_82 = arith.constant dense<0.000000e+00> : vector<2x8xf32>
    %265 = vector.multi_reduction <add>, %264, %cst_82 [2] : vector<2x8x12xf32> to vector<2x8xf32>
    %266 = vector.shape_cast %265 : vector<2x8xf32> to vector<2x8x1xf32>
    %267 = arith.truncf %264 : vector<2x8x12xf32> to vector<2x8x12xbf16>
    "tpu.trace_start"() <{level = 10 : i32, message = "bqk,bkd->bqd"}> : () -> ()
    %cst_83 = arith.constant dense<0.000000e+00> : vector<2x8x8xf32>
    %268 = tpu.matmul %267, %256, %cst_83 {dimension_numbers = #tpu.dot_dimension_numbers<[2], [1], [1], [2], [0, 0, 0, 1, 1, 2], [0], [0]>} : vector<2x8x12xbf16>, vector<2x12x8xbf16>, vector<2x8x8xf32> -> vector<2x8x8xf32>
    "tpu.trace_stop"() : () -> ()
    %269 = tpu.reciprocal %266 {approx = true} : vector<2x8x1xf32> -> vector<2x8x1xf32>
    %270 = vector.broadcast %269 : vector<2x8x1xf32> to vector<2x8x8xf32>
    %271 = arith.mulf %268, %270 : vector<2x8x8xf32>
    %272 = vector.shape_cast %271 : vector<2x8x8xf32> to vector<16x8xf32>
    %c16_84 = arith.constant 16 : index
    %c0_85 = arith.constant 0 : index
    %273 = vector.load %arg13[%c16_84, %c0_85] : memref<32x32xf32, #tpu.memory_space<vmem>>, vector<8x32xf32>
    %274 = arith.truncf %273 : vector<8x32xf32> to vector<8x32xbf16>
    %275 = arith.truncf %272 : vector<16x8xf32> to vector<16x8xbf16>
    %cst_86 = arith.constant dense<0.000000e+00> : vector<16x32xf32>
    %276 = tpu.matmul %275, %274, %cst_86 {dimension_numbers = #tpu.dot_dimension_numbers<[1], [0], [0], [1], [0, 0, 1, 1], [], []>} : vector<16x8xbf16>, vector<8x32xbf16>, vector<16x32xf32> -> vector<16x32xf32>
    %277 = arith.addf %247, %276 : vector<16x32xf32>
    %278 = vector.extract_strided_slice %178 {offsets = [0, 24], sizes = [16, 8], strides = [1, 1]} : vector<16x32xf32> to vector<16x8xf32>
    %279 = vector.shape_cast %278 : vector<16x8xf32> to vector<2x8x8xf32>
    %280 = arith.truncf %279 : vector<2x8x8xf32> to vector<2x8x8xbf16>
    %281 = vector.extract_strided_slice %185 {offsets = [0, 24], sizes = [24, 8], strides = [1, 1]} : vector<24x32xf32> to vector<24x8xf32>
    %282 = vector.shape_cast %281 : vector<24x8xf32> to vector<2x12x8xf32>
    %283 = arith.truncf %282 : vector<2x12x8xf32> to vector<2x12x8xbf16>
    %284 = vector.extract_strided_slice %186 {offsets = [0, 24], sizes = [24, 8], strides = [1, 1]} : vector<24x32xf32> to vector<24x8xf32>
    %285 = vector.shape_cast %284 : vector<24x8xf32> to vector<2x12x8xf32>
    %286 = arith.truncf %285 : vector<2x12x8xf32> to vector<2x12x8xbf16>
    "tpu.trace_start"() <{level = 10 : i32, message = "bqd,bkd->bqk"}> : () -> ()
    %cst_87 = arith.constant dense<0.000000e+00> : vector<2x8x12xf32>
    %287 = tpu.matmul %280, %283, %cst_87 {dimension_numbers = #tpu.dot_dimension_numbers<[2], [2], [1], [1], [0, 0, 0, 1, 1, 1], [0], [0]>} : vector<2x8x8xbf16>, vector<2x12x8xbf16>, vector<2x8x12xf32> -> vector<2x8x12xf32>
    "tpu.trace_stop"() : () -> ()
    %cst_88 = arith.constant 0.353553385 : f32
    %288 = vector.broadcast %cst_88 : f32 to vector<2x8x12xf32>
    %289 = arith.mulf %287, %288 : vector<2x8x12xf32>
    %cst_89 = arith.constant dense<0xFF800000> : vector<2x8xf32>
    %290 = vector.multi_reduction <maximumf>, %289, %cst_89 [2] : vector<2x8x12xf32> to vector<2x8xf32>
    %291 = vector.shape_cast %290 : vector<2x8xf32> to vector<2x8x1xf32>
    %292 = vector.broadcast %291 : vector<2x8x1xf32> to vector<2x8x12xf32>
    %293 = arith.subf %289, %292 : vector<2x8x12xf32>
    %294 = math.exp %293 : vector<2x8x12xf32>
    %cst_90 = arith.constant dense<0.000000e+00> : vector<2x8xf32>
    %295 = vector.multi_reduction <add>, %294, %cst_90 [2] : vector<2x8x12xf32> to vector<2x8xf32>
    %296 = vector.shape_cast %295 : vector<2x8xf32> to vector<2x8x1xf32>
    %297 = arith.truncf %294 : vector<2x8x12xf32> to vector<2x8x12xbf16>
    "tpu.trace_start"() <{level = 10 : i32, message = "bqk,bkd->bqd"}> : () -> ()
    %cst_91 = arith.constant dense<0.000000e+00> : vector<2x8x8xf32>
    %298 = tpu.matmul %297, %286, %cst_91 {dimension_numbers = #tpu.dot_dimension_numbers<[2], [1], [1], [2], [0, 0, 0, 1, 1, 2], [0], [0]>} : vector<2x8x12xbf16>, vector<2x12x8xbf16>, vector<2x8x8xf32> -> vector<2x8x8xf32>
    "tpu.trace_stop"() : () -> ()
    %299 = tpu.reciprocal %296 {approx = true} : vector<2x8x1xf32> -> vector<2x8x1xf32>
    %300 = vector.broadcast %299 : vector<2x8x1xf32> to vector<2x8x8xf32>
    %301 = arith.mulf %298, %300 : vector<2x8x8xf32>
    %302 = vector.shape_cast %301 : vector<2x8x8xf32> to vector<16x8xf32>
    %c24_92 = arith.constant 24 : index
    %c0_93 = arith.constant 0 : index
    %303 = vector.load %arg13[%c24_92, %c0_93] : memref<32x32xf32, #tpu.memory_space<vmem>>, vector<8x32xf32>
    %304 = arith.truncf %303 : vector<8x32xf32> to vector<8x32xbf16>
    %305 = arith.truncf %302 : vector<16x8xf32> to vector<16x8xbf16>
    %cst_94 = arith.constant dense<0.000000e+00> : vector<16x32xf32>
    %306 = tpu.matmul %305, %304, %cst_94 {dimension_numbers = #tpu.dot_dimension_numbers<[1], [0], [0], [1], [0, 0, 1, 1], [], []>} : vector<16x8xbf16>, vector<8x32xbf16>, vector<16x32xf32> -> vector<16x32xf32>
    %307 = arith.addf %277, %306 : vector<16x32xf32>
    %c0_95 = arith.constant 0 : index
    %c0_96 = arith.constant 0 : index
    %308 = vector.load %arg14[%c0_95, %c0_96] : memref<1x32xf32, #tpu.memory_space<vmem>>, vector<1x32xf32>
    %309 = vector.broadcast %308 : vector<1x32xf32> to vector<16x32xf32>
    %310 = arith.addf %307, %309 : vector<16x32xf32>
    %311 = arith.addf %172, %310 : vector<16x32xf32>
    %c0_97 = arith.constant 0 : index
    %c0_98 = arith.constant 0 : index
    %312 = vector.load %arg15[%c0_97, %c0_98] : memref<1x32xf32, #tpu.memory_space<vmem>>, vector<1x32xf32>
    %c0_99 = arith.constant 0 : index
    %c0_100 = arith.constant 0 : index
    %313 = vector.load %arg16[%c0_99, %c0_100] : memref<1x32xf32, #tpu.memory_space<vmem>>, vector<1x32xf32>
    %cst_101 = arith.constant dense<0.000000e+00> : vector<16xf32>
    %314 = vector.multi_reduction <add>, %311, %cst_101 [1] : vector<16x32xf32> to vector<16xf32>
    %315 = vector.shape_cast %314 : vector<16xf32> to vector<16x1xf32>
    %cst_102 = arith.constant 3.200000e+01 : f32
    %316 = vector.broadcast %cst_102 : f32 to vector<16x1xf32>
    %317 = arith.divf %315, %316 : vector<16x1xf32>
    %318 = vector.broadcast %317 : vector<16x1xf32> to vector<16x32xf32>
    %319 = arith.subf %311, %318 : vector<16x32xf32>
    %320 = arith.mulf %319, %319 : vector<16x32xf32>
    %cst_103 = arith.constant dense<0.000000e+00> : vector<16xf32>
    %321 = vector.multi_reduction <add>, %320, %cst_103 [1] : vector<16x32xf32> to vector<16xf32>
    %322 = vector.shape_cast %321 : vector<16xf32> to vector<16x1xf32>
    %cst_104 = arith.constant 3.200000e+01 : f32
    %323 = vector.broadcast %cst_104 : f32 to vector<16x1xf32>
    %324 = arith.divf %322, %323 : vector<16x1xf32>
    %cst_105 = arith.constant 9.99999974E-6 : f32
    %325 = vector.broadcast %cst_105 : f32 to vector<16x1xf32>
    %326 = arith.addf %324, %325 : vector<16x1xf32>
    %327 = math.rsqrt %326 : vector<16x1xf32>
    %328 = vector.broadcast %327 : vector<16x1xf32> to vector<16x32xf32>
    %329 = arith.mulf %319, %328 : vector<16x32xf32>
    %330 = vector.broadcast %312 : vector<1x32xf32> to vector<16x32xf32>
    %331 = arith.mulf %329, %330 : vector<16x32xf32>
    %332 = vector.broadcast %313 : vector<1x32xf32> to vector<16x32xf32>
    %333 = arith.addf %331, %332 : vector<16x32xf32>
    %c0_106 = arith.constant 0 : index
    %c0_107 = arith.constant 0 : index
    %334 = vector.load %arg17[%c0_106, %c0_107] : memref<32x64xbf16, #tpu.memory_space<vmem>>, vector<32x64xbf16>
    %c0_108 = arith.constant 0 : index
    %c0_109 = arith.constant 0 : index
    %335 = vector.load %arg18[%c0_108, %c0_109] : memref<1x64xf32, #tpu.memory_space<vmem>>, vector<1x64xf32>
    %336 = arith.truncf %333 : vector<16x32xf32> to vector<16x32xbf16>
    %cst_110 = arith.constant dense<0.000000e+00> : vector<16x64xf32>
    %337 = tpu.matmul %336, %334, %cst_110 {dimension_numbers = #tpu.dot_dimension_numbers<[1], [0], [0], [1], [0, 0, 1, 1], [], []>} : vector<16x32xbf16>, vector<32x64xbf16>, vector<16x64xf32> -> vector<16x64xf32>
    %338 = vector.broadcast %335 : vector<1x64xf32> to vector<16x64xf32>
    %339 = arith.addf %337, %338 : vector<16x64xf32>
    %cst_111 = arith.constant 0.000000e+00 : f32
    %340 = vector.broadcast %cst_111 : f32 to vector<16x64xf32>
    %341 = arith.maximumf %339, %340 : vector<16x64xf32>
    %c0_112 = arith.constant 0 : index
    %c0_113 = arith.constant 0 : index
    %342 = vector.load %arg19[%c0_112, %c0_113] : memref<64x32xbf16, #tpu.memory_space<vmem>>, vector<64x32xbf16>
    %c0_114 = arith.constant 0 : index
    %c0_115 = arith.constant 0 : index
    %343 = vector.load %arg20[%c0_114, %c0_115] : memref<1x32xf32, #tpu.memory_space<vmem>>, vector<1x32xf32>
    %344 = arith.truncf %341 : vector<16x64xf32> to vector<16x64xbf16>
    %cst_116 = arith.constant dense<0.000000e+00> : vector<16x32xf32>
    %345 = tpu.matmul %344, %342, %cst_116 {dimension_numbers = #tpu.dot_dimension_numbers<[1], [0], [0], [1], [0, 0, 1, 1], [], []>} : vector<16x64xbf16>, vector<64x32xbf16>, vector<16x32xf32> -> vector<16x32xf32>
    %346 = vector.broadcast %343 : vector<1x32xf32> to vector<16x32xf32>
    %347 = arith.addf %345, %346 : vector<16x32xf32>
    %348 = arith.addf %333, %347 : vector<16x32xf32>
    %c0_117 = arith.constant 0 : index
    %c0_118 = arith.constant 0 : index
    %349 = vector.load %arg21[%c0_117, %c0_118] : memref<1x32xf32, #tpu.memory_space<vmem>>, vector<1x32xf32>
    %c0_119 = arith.constant 0 : index
    %c0_120 = arith.constant 0 : index
    %350 = vector.load %arg22[%c0_119, %c0_120] : memref<1x32xf32, #tpu.memory_space<vmem>>, vector<1x32xf32>
    %cst_121 = arith.constant dense<0.000000e+00> : vector<16xf32>
    %351 = vector.multi_reduction <add>, %348, %cst_121 [1] : vector<16x32xf32> to vector<16xf32>
    %352 = vector.shape_cast %351 : vector<16xf32> to vector<16x1xf32>
    %cst_122 = arith.constant 3.200000e+01 : f32
    %353 = vector.broadcast %cst_122 : f32 to vector<16x1xf32>
    %354 = arith.divf %352, %353 : vector<16x1xf32>
    %355 = vector.broadcast %354 : vector<16x1xf32> to vector<16x32xf32>
    %356 = arith.subf %348, %355 : vector<16x32xf32>
    %357 = arith.mulf %356, %356 : vector<16x32xf32>
    %cst_123 = arith.constant dense<0.000000e+00> : vector<16xf32>
    %358 = vector.multi_reduction <add>, %357, %cst_123 [1] : vector<16x32xf32> to vector<16xf32>
    %359 = vector.shape_cast %358 : vector<16xf32> to vector<16x1xf32>
    %cst_124 = arith.constant 3.200000e+01 : f32
    %360 = vector.broadcast %cst_124 : f32 to vector<16x1xf32>
    %361 = arith.divf %359, %360 : vector<16x1xf32>
    %cst_125 = arith.constant 9.99999974E-6 : f32
    %362 = vector.broadcast %cst_125 : f32 to vector<16x1xf32>
    %363 = arith.addf %361, %362 : vector<16x1xf32>
    %364 = math.rsqrt %363 : vector<16x1xf32>
    %365 = vector.broadcast %364 : vector<16x1xf32> to vector<16x32xf32>
    %366 = arith.mulf %356, %365 : vector<16x32xf32>
    %367 = vector.broadcast %349 : vector<1x32xf32> to vector<16x32xf32>
    %368 = arith.mulf %366, %367 : vector<16x32xf32>
    %369 = vector.broadcast %350 : vector<1x32xf32> to vector<16x32xf32>
    %370 = arith.addf %368, %369 : vector<16x32xf32>
    %371 = vector.shape_cast %370 : vector<16x32xf32> to vector<2x8x32xf32>
    %c0_126 = arith.constant 0 : index
    %c0_127 = arith.constant 0 : index
    %c0_128 = arith.constant 0 : index
    %372 = vector.load %arg23[%c0_126, %c0_127, %c0_128] : memref<2x8x32xf32, #tpu.memory_space<vmem>>, vector<2x8x32xf32>
    tpu.vector_store %arg23[%c0_126, %c0_127, %c0_128], %371 {strides = array<i32>} : memref<2x8x32xf32, #tpu.memory_space<vmem>>, vector<2x8x32xf32>,
    return
  }
}

module attributes {stable_mosaic.version = 11 : i64} {
  func.func @_decoder_layer_kernel(%arg0: memref<2x8x32xf32, #tpu.memory_space<vmem>>, %arg1: memref<2x12x32xf32, #tpu.memory_space<vmem>>, %arg2: memref<8x8xf32, #tpu.memory_space<vmem>>, %arg3: memref<32x96xbf16, #tpu.memory_space<vmem>>, %arg4: memref<1x96xf32, #tpu.memory_space<vmem>>, %arg5: memref<32x32xf32, #tpu.memory_space<vmem>>, %arg6: memref<1x32xf32, #tpu.memory_space<vmem>>, %arg7: memref<1x32xf32, #tpu.memory_space<vmem>>, %arg8: memref<1x32xf32, #tpu.memory_space<vmem>>, %arg9: memref<32x32xbf16, #tpu.memory_space<vmem>>, %arg10: memref<1x32xf32, #tpu.memory_space<vmem>>, %arg11: memref<32x64xbf16, #tpu.memory_space<vmem>>, %arg12: memref<1x64xf32, #tpu.memory_space<vmem>>, %arg13: memref<32x32xf32, #tpu.memory_space<vmem>>, %arg14: memref<1x32xf32, #tpu.memory_space<vmem>>, %arg15: memref<1x32xf32, #tpu.memory_space<vmem>>, %arg16: memref<1x32xf32, #tpu.memory_space<vmem>>, %arg17: memref<32x64xbf16, #tpu.memory_space<vmem>>, %arg18: memref<1x64xf32, #tpu.memory_space<vmem>>, %arg19: memref<64x32xbf16, #tpu.memory_space<vmem>>, %arg20: memref<1x32xf32, #tpu.memory_space<vmem>>, %arg21: memref<1x32xf32, #tpu.memory_space<vmem>>, %arg22: memref<1x32xf32, #tpu.memory_space<vmem>>, %arg23: memref<2x8x32xf32, #tpu.memory_space<vmem>>) attributes {dimension_semantics = [], scalar_prefetch = 0 : i64, scratch_operands = 0 : i64, tpu.core_type = #tpu.core_type<tc>} {
    %c0 = arith.constant 0 : index
    %c0_0 = arith.constant 0 : index
    %c0_1 = arith.constant 0 : index
    %0 = vector.load %arg0[%c0, %c0_0, %c0_1] : memref<2x8x32xf32, #tpu.memory_space<vmem>>, vector<2x8x32xf32>
    %1 = vector.shape_cast %0 : vector<2x8x32xf32> to vector<16x32xf32>
    %c0_2 = arith.constant 0 : index
    %c0_3 = arith.constant 0 : index
    %c0_4 = arith.constant 0 : index
    %2 = vector.load %arg1[%c0_2, %c0_3, %c0_4] : memref<2x12x32xf32, #tpu.memory_space<vmem>>, vector<2x12x32xf32>
    %3 = vector.shape_cast %2 : vector<2x12x32xf32> to vector<24x32xf32>
    %c0_5 = arith.constant 0 : index
    %c0_6 = arith.constant 0 : index
    %4 = vector.load %arg2[%c0_5, %c0_6] : memref<8x8xf32, #tpu.memory_space<vmem>>, vector<8x8xf32>
    %c0_7 = arith.constant 0 : index
    %c0_8 = arith.constant 0 : index
    %5 = vector.load %arg3[%c0_7, %c0_8] : memref<32x96xbf16, #tpu.memory_space<vmem>>, vector<32x96xbf16>
    %c0_9 = arith.constant 0 : index
    %c0_10 = arith.constant 0 : index
    %6 = vector.load %arg4[%c0_9, %c0_10] : memref<1x96xf32, #tpu.memory_space<vmem>>, vector<1x96xf32>
    %7 = arith.truncf %1 : vector<16x32xf32> to vector<16x32xbf16>
    %cst = arith.constant dense<0.000000e+00> : vector<16x96xf32>
    %8 = tpu.matmul %7, %5, %cst {dimension_numbers = #tpu.dot_dimension_numbers<[1], [0], [0], [1], [0, 0, 1, 1], [], []>} : vector<16x32xbf16>, vector<32x96xbf16>, vector<16x96xf32> -> vector<16x96xf32>
    %9 = vector.broadcast %6 : vector<1x96xf32> to vector<16x96xf32>
    %10 = arith.addf %8, %9 : vector<16x96xf32>
    %11 = vector.extract_strided_slice %10 {offsets = [0, 0], sizes = [16, 32], strides = [1, 1]} : vector<16x96xf32> to vector<16x32xf32>
    %12 = vector.extract_strided_slice %10 {offsets = [0, 32], sizes = [16, 32], strides = [1, 1]} : vector<16x96xf32> to vector<16x32xf32>
    %13 = vector.extract_strided_slice %10 {offsets = [0, 64], sizes = [16, 32], strides = [1, 1]} : vector<16x96xf32> to vector<16x32xf32>
    %cst_11 = arith.constant 0.000000e+00 : f32
    %14 = vector.broadcast %cst_11 : f32 to vector<16x32xf32>
    %15 = vector.extract_strided_slice %11 {offsets = [0, 0], sizes = [16, 8], strides = [1, 1]} : vector<16x32xf32> to vector<16x8xf32>
    %16 = vector.shape_cast %15 : vector<16x8xf32> to vector<2x8x8xf32>
    %17 = arith.truncf %16 : vector<2x8x8xf32> to vector<2x8x8xbf16>
    %18 = vector.extract_strided_slice %12 {offsets = [0, 0], sizes = [16, 8], strides = [1, 1]} : vector<16x32xf32> to vector<16x8xf32>
    %19 = vector.shape_cast %18 : vector<16x8xf32> to vector<2x8x8xf32>
    %20 = arith.truncf %19 : vector<2x8x8xf32> to vector<2x8x8xbf16>
    %21 = vector.extract_strided_slice %13 {offsets = [0, 0], sizes = [16, 8], strides = [1, 1]} : vector<16x32xf32> to vector<16x8xf32>
    %22 = vector.shape_cast %21 : vector<16x8xf32> to vector<2x8x8xf32>
    %23 = arith.truncf %22 : vector<2x8x8xf32> to vector<2x8x8xbf16>
    "tpu.trace_start"() <{level = 10 : i32, message = "bqd,bkd->bqk"}> : () -> ()
    %cst_12 = arith.constant dense<0.000000e+00> : vector<2x8x8xf32>
    %24 = tpu.matmul %17, %20, %cst_12 {dimension_numbers = #tpu.dot_dimension_numbers<[2], [2], [1], [1], [0, 0, 0, 1, 1, 1], [0], [0]>} : vector<2x8x8xbf16>, vector<2x8x8xbf16>, vector<2x8x8xf32> -> vector<2x8x8xf32>
    "tpu.trace_stop"() : () -> ()
    %cst_13 = arith.constant 0.353553385 : f32
    %25 = vector.broadcast %cst_13 : f32 to vector<2x8x8xf32>
    %26 = arith.mulf %24, %25 : vector<2x8x8xf32>
    %27 = vector.shape_cast %4 : vector<8x8xf32> to vector<1x8x8xf32>
    %28 = vector.broadcast %27 : vector<1x8x8xf32> to vector<2x8x8xf32>
    %29 = arith.addf %26, %28 : vector<2x8x8xf32>
    %cst_14 = arith.constant dense<0xFF800000> : vector<2x8xf32>
    %30 = vector.multi_reduction <maximumf>, %29, %cst_14 [2] : vector<2x8x8xf32> to vector<2x8xf32>
    %31 = vector.shape_cast %30 : vector<2x8xf32> to vector<2x8x1xf32>
    %32 = vector.broadcast %31 : vector<2x8x1xf32> to vector<2x8x8xf32>
    %33 = arith.subf %29, %32 : vector<2x8x8xf32>
    %34 = math.exp %33 : vector<2x8x8xf32>
    %cst_15 = arith.constant dense<0.000000e+00> : vector<2x8xf32>
    %35 = vector.multi_reduction <add>, %34, %cst_15 [2] : vector<2x8x8xf32> to vector<2x8xf32>
    %36 = vector.shape_cast %35 : vector<2x8xf32> to vector<2x8x1xf32>
    %37 = arith.truncf %34 : vector<2x8x8xf32> to vector<2x8x8xbf16>
    "tpu.trace_start"() <{level = 10 : i32, message = "bqk,bkd->bqd"}> : () -> ()
    %cst_16 = arith.constant dense<0.000000e+00> : vector<2x8x8xf32>
    %38 = tpu.matmul %37, %23, %cst_16 {dimension_numbers = #tpu.dot_dimension_numbers<[2], [1], [1], [2], [0, 0, 0, 1, 1, 2], [0], [0]>} : vector<2x8x8xbf16>, vector<2x8x8xbf16>, vector<2x8x8xf32> -> vector<2x8x8xf32>
    "tpu.trace_stop"() : () -> ()
    %39 = tpu.reciprocal %36 {approx = true} : vector<2x8x1xf32> -> vector<2x8x1xf32>
    %40 = vector.broadcast %39 : vector<2x8x1xf32> to vector<2x8x8xf32>
    %41 = arith.mulf %38, %40 : vector<2x8x8xf32>
    %42 = vector.shape_cast %41 : vector<2x8x8xf32> to vector<16x8xf32>
    %c0_17 = arith.constant 0 : index
    %c0_18 = arith.constant 0 : index
    %43 = vector.load %arg5[%c0_17, %c0_18] : memref<32x32xf32, #tpu.memory_space<vmem>>, vector<8x32xf32>
    %44 = arith.truncf %43 : vector<8x32xf32> to vector<8x32xbf16>
    %45 = arith.truncf %42 : vector<16x8xf32> to vector<16x8xbf16>
    %cst_19 = arith.constant dense<0.000000e+00> : vector<16x32xf32>
    %46 = tpu.matmul %45, %44, %cst_19 {dimension_numbers = #tpu.dot_dimension_numbers<[1], [0], [0], [1], [0, 0, 1, 1], [], []>} : vector<16x8xbf16>, vector<8x32xbf16>, vector<16x32xf32> -> vector<16x32xf32>
    %47 = arith.addf %14, %46 : vector<16x32xf32>
    %48 = vector.extract_strided_slice %11 {offsets = [0, 8], sizes = [16, 8], strides = [1, 1]} : vector<16x32xf32> to vector<16x8xf32>
    %49 = vector.shape_cast %48 : vector<16x8xf32> to vector<2x8x8xf32>
    %50 = arith.truncf %49 : vector<2x8x8xf32> to vector<2x8x8xbf16>
    %51 = vector.extract_strided_slice %12 {offsets = [0, 8], sizes = [16, 8], strides = [1, 1]} : vector<16x32xf32> to vector<16x8xf32>
    %52 = vector.shape_cast %51 : vector<16x8xf32> to vector<2x8x8xf32>
    %53 = arith.truncf %52 : vector<2x8x8xf32> to vector<2x8x8xbf16>
    %54 = vector.extract_strided_slice %13 {offsets = [0, 8], sizes = [16, 8], strides = [1, 1]} : vector<16x32xf32> to vector<16x8xf32>
    %55 = vector.shape_cast %54 : vector<16x8xf32> to vector<2x8x8xf32>
    %56 = arith.truncf %55 : vector<2x8x8xf32> to vector<2x8x8xbf16>
    "tpu.trace_start"() <{level = 10 : i32, message = "bqd,bkd->bqk"}> : () -> ()
    %cst_20 = arith.constant dense<0.000000e+00> : vector<2x8x8xf32>
    %57 = tpu.matmul %50, %53, %cst_20 {dimension_numbers = #tpu.dot_dimension_numbers<[2], [2], [1], [1], [0, 0, 0, 1, 1, 1], [0], [0]>} : vector<2x8x8xbf16>, vector<2x8x8xbf16>, vector<2x8x8xf32> -> vector<2x8x8xf32>
    "tpu.trace_stop"() : () -> ()
    %cst_21 = arith.constant 0.353553385 : f32
    %58 = vector.broadcast %cst_21 : f32 to vector<2x8x8xf32>
    %59 = arith.mulf %57, %58 : vector<2x8x8xf32>
    %60 = vector.shape_cast %4 : vector<8x8xf32> to vector<1x8x8xf32>
    %61 = vector.broadcast %60 : vector<1x8x8xf32> to vector<2x8x8xf32>
    %62 = arith.addf %59, %61 : vector<2x8x8xf32>
    %cst_22 = arith.constant dense<0xFF800000> : vector<2x8xf32>
    %63 = vector.multi_reduction <maximumf>, %62, %cst_22 [2] : vector<2x8x8xf32> to vector<2x8xf32>
    %64 = vector.shape_cast %63 : vector<2x8xf32> to vector<2x8x1xf32>
    %65 = vector.broadcast %64 : vector<2x8x1xf32> to vector<2x8x8xf32>
    %66 = arith.subf %62, %65 : vector<2x8x8xf32>
    %67 = math.exp %66 : vector<2x8x8xf32>
    %cst_23 = arith.constant dense<0.000000e+00> : vector<2x8xf32>
    %68 = vector.multi_reduction <add>, %67, %cst_23 [2] : vector<2x8x8xf32> to vector<2x8xf32>
    %69 = vector.shape_cast %68 : vector<2x8xf32> to vector<2x8x1xf32>
    %70 = arith.truncf %67 : vector<2x8x8xf32> to vector<2x8x8xbf16>
    "tpu.trace_start"() <{level = 10 : i32, message = "bqk,bkd->bqd"}> : () -> ()
    %cst_24 = arith.constant dense<0.000000e+00> : vector<2x8x8xf32>
    %71 = tpu.matmul %70, %56, %cst_24 {dimension_numbers = #tpu.dot_dimension_numbers<[2], [1], [1], [2], [0, 0, 0, 1, 1, 2], [0], [0]>} : vector<2x8x8xbf16>, vector<2x8x8xbf16>, vector<2x8x8xf32> -> vector<2x8x8xf32>
    "tpu.trace_stop"() : () -> ()
    %72 = tpu.reciprocal %69 {approx = true} : vector<2x8x1xf32> -> vector<2x8x1xf32>
    %73 = vector.broadcast %72 : vector<2x8x1xf32> to vector<2x8x8xf32>
    %74 = arith.mulf %71, %73 : vector<2x8x8xf32>
    %75 = vector.shape_cast %74 : vector<2x8x8xf32> to vector<16x8xf32>
    %c8 = arith.constant 8 : index
    %c0_25 = arith.constant 0 : index
    %76 = vector.load %arg5[%c8, %c0_25] : memref<32x32xf32, #tpu.memory_space<vmem>>, vector<8x32xf32>
    %77 = arith.truncf %76 : vector<8x32xf32> to vector<8x32xbf16>
    %78 = arith.truncf %75 : vector<16x8xf32> to vector<16x8xbf16>
    %cst_26 = arith.constant dense<0.000000e+00> : vector<16x32xf32>
    %79 = tpu.matmul %78, %77, %cst_26 {dimension_numbers = #tpu.dot_dimension_numbers<[1], [0], [0], [1], [0, 0, 1, 1], [], []>} : vector<16x8xbf16>, vector<8x32xbf16>, vector<16x32xf32> -> vector<16x32xf32>
    %80 = arith.addf %47, %79 : vector<16x32xf32>
    %81 = vector.extract_strided_slice %11 {offsets = [0, 16], sizes = [16, 8], strides = [1, 1]} : vector<16x32xf32> to vector<16x8xf32>
    %82 = vector.shape_cast %81 : vector<16x8xf32> to vector<2x8x8xf32>
    %83 = arith.truncf %82 : vector<2x8x8xf32> to vector<2x8x8xbf16>
    %84 = vector.extract_strided_slice %12 {offsets = [0, 16], sizes = [16, 8], strides = [1, 1]} : vector<16x32xf32> to vector<16x8xf32>
    %85 = vector.shape_cast %84 : vector<16x8xf32> to vector<2x8x8xf32>
    %86 = arith.truncf %85 : vector<2x8x8xf32> to vector<2x8x8xbf16>
    %87 = vector.extract_strided_slice %13 {offsets = [0, 16], sizes = [16, 8], strides = [1, 1]} : vector<16x32xf32> to vector<16x8xf32>
    %88 = vector.shape_cast %87 : vector<16x8xf32> to vector<2x8x8xf32>
    %89 = arith.truncf %88 : vector<2x8x8xf32> to vector<2x8x8xbf16>
    "tpu.trace_start"() <{level = 10 : i32, message = "bqd,bkd->bqk"}> : () -> ()
    %cst_27 = arith.constant dense<0.000000e+00> : vector<2x8x8xf32>
    %90 = tpu.matmul %83, %86, %cst_27 {dimension_numbers = #tpu.dot_dimension_numbers<[2], [2], [1], [1], [0, 0, 0, 1, 1, 1], [0], [0]>} : vector<2x8x8xbf16>, vector<2x8x8xbf16>, vector<2x8x8xf32> -> vector<2x8x8xf32>
    "tpu.trace_stop"() : () -> ()
    %cst_28 = arith.constant 0.353553385 : f32
    %91 = vector.broadcast %cst_28 : f32 to vector<2x8x8xf32>
    %92 = arith.mulf %90, %91 : vector<2x8x8xf32>
    %93 = vector.shape_cast %4 : vector<8x8xf32> to vector<1x8x8xf32>
    %94 = vector.broadcast %93 : vector<1x8x8xf32> to vector<2x8x8xf32>
    %95 = arith.addf %92, %94 : vector<2x8x8xf32>
    %cst_29 = arith.constant dense<0xFF800000> : vector<2x8xf32>
    %96 = vector.multi_reduction <maximumf>, %95, %cst_29 [2] : vector<2x8x8xf32> to vector<2x8xf32>
    %97 = vector.shape_cast %96 : vector<2x8xf32> to vector<2x8x1xf32>
    %98 = vector.broadcast %97 : vector<2x8x1xf32> to vector<2x8x8xf32>
    %99 = arith.subf %95, %98 : vector<2x8x8xf32>
    %100 = math.exp %99 : vector<2x8x8xf32>
    %cst_30 = arith.constant dense<0.000000e+00> : vector<2x8xf32>
    %101 = vector.multi_reduction <add>, %100, %cst_30 [2] : vector<2x8x8xf32> to vector<2x8xf32>
    %102 = vector.shape_cast %101 : vector<2x8xf32> to vector<2x8x1xf32>
    %103 = arith.truncf %100 : vector<2x8x8xf32> to vector<2x8x8xbf16>
    "tpu.trace_start"() <{level = 10 : i32, message = "bqk,bkd->bqd"}> : () -> ()
    %cst_31 = arith.constant dense<0.000000e+00> : vector<2x8x8xf32>
    %104 = tpu.matmul %103, %89, %cst_31 {dimension_numbers = #tpu.dot_dimension_numbers<[2], [1], [1], [2], [0, 0, 0, 1, 1, 2], [0], [0]>} : vector<2x8x8xbf16>, vector<2x8x8xbf16>, vector<2x8x8xf32> -> vector<2x8x8xf32>
    "tpu.trace_stop"() : () -> ()
    %105 = tpu.reciprocal %102 {approx = true} : vector<2x8x1xf32> -> vector<2x8x1xf32>
    %106 = vector.broadcast %105 : vector<2x8x1xf32> to vector<2x8x8xf32>
    %107 = arith.mulf %104, %106 : vector<2x8x8xf32>
    %108 = vector.shape_cast %107 : vector<2x8x8xf32> to vector<16x8xf32>
    %c16 = arith.constant 16 : index
    %c0_32 = arith.constant 0 : index
    %109 = vector.load %arg5[%c16, %c0_32] : memref<32x32xf32, #tpu.memory_space<vmem>>, vector<8x32xf32>
    %110 = arith.truncf %109 : vector<8x32xf32> to vector<8x32xbf16>
    %111 = arith.truncf %108 : vector<16x8xf32> to vector<16x8xbf16>
    %cst_33 = arith.constant dense<0.000000e+00> : vector<16x32xf32>
    %112 = tpu.matmul %111, %110, %cst_33 {dimension_numbers = #tpu.dot_dimension_numbers<[1], [0], [0], [1], [0, 0, 1, 1], [], []>} : vector<16x8xbf16>, vector<8x32xbf16>, vector<16x32xf32> -> vector<16x32xf32>
    %113 = arith.addf %80, %112 : vector<16x32xf32>
    %114 = vector.extract_strided_slice %11 {offsets = [0, 24], sizes = [16, 8], strides = [1, 1]} : vector<16x32xf32> to vector<16x8xf32>
    %115 = vector.shape_cast %114 : vector<16x8xf32> to vector<2x8x8xf32>
    %116 = arith.truncf %115 : vector<2x8x8xf32> to vector<2x8x8xbf16>
    %117 = vector.extract_strided_slice %12 {offsets = [0, 24], sizes = [16, 8], strides = [1, 1]} : vector<16x32xf32> to vector<16x8xf32>
    %118 = vector.shape_cast %117 : vector<16x8xf32> to vector<2x8x8xf32>
    %119 = arith.truncf %118 : vector<2x8x8xf32> to vector<2x8x8xbf16>
    %120 = vector.extract_strided_slice %13 {offsets = [0, 24], sizes = [16, 8], strides = [1, 1]} : vector<16x32xf32> to vector<16x8xf32>
    %121 = vector.shape_cast %120 : vector<16x8xf32> to vector<2x8x8xf32>
    %122 = arith.truncf %121 : vector<2x8x8xf32> to vector<2x8x8xbf16>
    "tpu.trace_start"() <{level = 10 : i32, message = "bqd,bkd->bqk"}> : () -> ()
    %cst_34 = arith.constant dense<0.000000e+00> : vector<2x8x8xf32>
    %123 = tpu.matmul %116, %119, %cst_34 {dimension_numbers = #tpu.dot_dimension_numbers<[2], [2], [1], [1], [0, 0, 0, 1, 1, 1], [0], [0]>} : vector<2x8x8xbf16>, vector<2x8x8xbf16>, vector<2x8x8xf32> -> vector<2x8x8xf32>
    "tpu.trace_stop"() : () -> ()
    %cst_35 = arith.constant 0.353553385 : f32
    %124 = vector.broadcast %cst_35 : f32 to vector<2x8x8xf32>
    %125 = arith.mulf %123, %124 : vector<2x8x8xf32>
    %126 = vector.shape_cast %4 : vector<8x8xf32> to vector<1x8x8xf32>
    %127 = vector.broadcast %126 : vector<1x8x8xf32> to vector<2x8x8xf32>
    %128 = arith.addf %125, %127 : vector<2x8x8xf32>
    %cst_36 = arith.constant dense<0xFF800000> : vector<2x8xf32>
    %129 = vector.multi_reduction <maximumf>, %128, %cst_36 [2] : vector<2x8x8xf32> to vector<2x8xf32>
    %130 = vector.shape_cast %129 : vector<2x8xf32> to vector<2x8x1xf32>
    %131 = vector.broadcast %130 : vector<2x8x1xf32> to vector<2x8x8xf32>
    %132 = arith.subf %128, %131 : vector<2x8x8xf32>
    %133 = math.exp %132 : vector<2x8x8xf32>
    %cst_37 = arith.constant dense<0.000000e+00> : vector<2x8xf32>
    %134 = vector.multi_reduction <add>, %133, %cst_37 [2] : vector<2x8x8xf32> to vector<2x8xf32>
    %135 = vector.shape_cast %134 : vector<2x8xf32> to vector<2x8x1xf32>
    %136 = arith.truncf %133 : vector<2x8x8xf32> to vector<2x8x8xbf16>
    "tpu.trace_start"() <{level = 10 : i32, message = "bqk,bkd->bqd"}> : () -> ()
    %cst_38 = arith.constant dense<0.000000e+00> : vector<2x8x8xf32>
    %137 = tpu.matmul %136, %122, %cst_38 {dimension_numbers = #tpu.dot_dimension_numbers<[2], [1], [1], [2], [0, 0, 0, 1, 1, 2], [0], [0]>} : vector<2x8x8xbf16>, vector<2x8x8xbf16>, vector<2x8x8xf32> -> vector<2x8x8xf32>
    "tpu.trace_stop"() : () -> ()
    %138 = tpu.reciprocal %135 {approx = true} : vector<2x8x1xf32> -> vector<2x8x1xf32>
    %139 = vector.broadcast %138 : vector<2x8x1xf32> to vector<2x8x8xf32>
    %140 = arith.mulf %137, %139 : vector<2x8x8xf32>
    %141 = vector.shape_cast %140 : vector<2x8x8xf32> to vector<16x8xf32>
    %c24 = arith.constant 24 : index
    %c0_39 = arith.constant 0 : index
    %142 = vector.load %arg5[%c24, %c0_39] : memref<32x32xf32, #tpu.memory_space<vmem>>, vector<8x32xf32>
    %143 = arith.truncf %142 : vector<8x32xf32> to vector<8x32xbf16>
    %144 = arith.truncf %141 : vector<16x8xf32> to vector<16x8xbf16>
    %cst_40 = arith.constant dense<0.000000e+00> : vector<16x32xf32>
    %145 = tpu.matmul %144, %143, %cst_40 {dimension_numbers = #tpu.dot_dimension_numbers<[1], [0], [0], [1], [0, 0, 1, 1], [], []>} : vector<16x8xbf16>, vector<8x32xbf16>, vector<16x32xf32> -> vector<16x32xf32>
    %146 = arith.addf %113, %145 : vector<16x32xf32>
    %c0_41 = arith.constant 0 : index
    %c0_42 = arith.constant 0 : index
    %147 = vector.load %arg6[%c0_41, %c0_42] : memref<1x32xf32, #tpu.memory_space<vmem>>, vector<1x32xf32>
    %148 = vector.broadcast %147 : vector<1x32xf32> to vector<16x32xf32>
    %149 = arith.addf %146, %148 : vector<16x32xf32>
    %150 = arith.addf %1, %149 : vector<16x32xf32>
    %c0_43 = arith.constant 0 : index
    %c0_44 = arith.constant 0 : index
    %151 = vector.load %arg7[%c0_43, %c0_44] : memref<1x32xf32, #tpu.memory_space<vmem>>, vector<1x32xf32>
    %c0_45 = arith.constant 0 : index
    %c0_46 = arith.constant 0 : index
    %152 = vector.load %arg8[%c0_45, %c0_46] : memref<1x32xf32, #tpu.memory_space<vmem>>, vector<1x32xf32>
    %cst_47 = arith.constant dense<0.000000e+00> : vector<16xf32>
    %153 = vector.multi_reduction <add>, %150, %cst_47 [1] : vector<16x32xf32> to vector<16xf32>
    %154 = vector.shape_cast %153 : vector<16xf32> to vector<16x1xf32>
    %cst_48 = arith.constant 3.200000e+01 : f32
    %155 = vector.broadcast %cst_48 : f32 to vector<16x1xf32>
    %156 = arith.divf %154, %155 : vector<16x1xf32>
    %157 = vector.broadcast %156 : vector<16x1xf32> to vector<16x32xf32>
    %158 = arith.subf %150, %157 : vector<16x32xf32>
    %159 = arith.mulf %158, %158 : vector<16x32xf32>
    %cst_49 = arith.constant dense<0.000000e+00> : vector<16xf32>
    %160 = vector.multi_reduction <add>, %159, %cst_49 [1] : vector<16x32xf32> to vector<16xf32>
    %161 = vector.shape_cast %160 : vector<16xf32> to vector<16x1xf32>
    %cst_50 = arith.constant 3.200000e+01 : f32
    %162 = vector.broadcast %cst_50 : f32 to vector<16x1xf32>
    %163 = arith.divf %161, %162 : vector<16x1xf32>
    %cst_51 = arith.constant 9.99999974E-6 : f32
    %164 = vector.broadcast %cst_51 : f32 to vector<16x1xf32>
    %165 = arith.addf %163, %164 : vector<16x1xf32>
    %166 = math.rsqrt %165 : vector<16x1xf32>
    %167 = vector.broadcast %166 : vector<16x1xf32> to vector<16x32xf32>
    %168 = arith.mulf %158, %167 : vector<16x32xf32>
    %169 = vector.broadcast %151 : vector<1x32xf32> to vector<16x32xf32>
    %170 = arith.mulf %168, %169 : vector<16x32xf32>
    %171 = vector.broadcast %152 : vector<1x32xf32> to vector<16x32xf32>
    %172 = arith.addf %170, %171 : vector<16x32xf32>
    %c0_52 = arith.constant 0 : index
    %c0_53 = arith.constant 0 : index
    %173 = vector.load %arg9[%c0_52, %c0_53] : memref<32x32xbf16, #tpu.memory_space<vmem>>, vector<32x32xbf16>
    %c0_54 = arith.constant 0 : index
    %c0_55 = arith.constant 0 : index
    %174 = vector.load %arg10[%c0_54, %c0_55] : memref<1x32xf32, #tpu.memory_space<vmem>>, vector<1x32xf32>
    %175 = arith.truncf %172 : vector<16x32xf32> to vector<16x32xbf16>
    %cst_56 = arith.constant dense<0.000000e+00> : vector<16x32xf32>
    %176 = tpu.matmul %175, %173, %cst_56 {dimension_numbers = #tpu.dot_dimension_numbers<[1], [0], [0], [1], [0, 0, 1, 1], [], []>} : vector<16x32xbf16>, vector<32x32xbf16>, vector<16x32xf32> -> vector<16x32xf32>
    %177 = vector.broadcast %174 : vector<1x32xf32> to vector<16x32xf32>
    %178 = arith.addf %176, %177 : vector<16x32xf32>
    %c0_57 = arith.constant 0 : index
    %c0_58 = arith.constant 0 : index
    %179 = vector.load %arg11[%c0_57, %c0_58] : memref<32x64xbf16, #tpu.memory_space<vmem>>, vector<32x64xbf16>
    %c0_59 = arith.constant 0 : index
    %c0_60 = arith.constant 0 : index
    %180 = vector.load %arg12[%c0_59, %c0_60] : memref<1x64xf32, #tpu.memory_space<vmem>>, vector<1x64xf32>
    %181 = arith.truncf %3 : vector<24x32xf32> to vector<24x32xbf16>
    %cst_61 = arith.constant dense<0.000000e+00> : vector<24x64xf32>
    %182 = tpu.matmul %181, %179, %cst_61 {dimension_numbers = #tpu.dot_dimension_numbers<[1], [0], [0], [1], [0, 0, 1, 1], [], []>} : vector<24x32xbf16>, vector<32x64xbf16>, vector<24x64xf32> -> vector<24x64xf32>
    %183 = vector.broadcast %180 : vector<1x64xf32> to vector<24x64xf32>
    %184 = arith.addf %182, %183 : vector<24x64xf32>
    %185 = vector.extract_strided_slice %184 {offsets = [0, 0], sizes = [24, 32], strides = [1, 1]} : vector<24x64xf32> to vector<24x32xf32>
    %186 = vector.extract_strided_slice %184 {offsets = [0, 32], sizes = [24, 32], strides = [1, 1]} : vector<24x64xf32> to vector<24x32xf32>
    %cst_62 = arith.constant 0.000000e+00 : f32
    %187 = vector.broadcast %cst_62 : f32 to vector<16x32xf32>
    %188 = vector.extract_strided_slice %178 {offsets = [0, 0], sizes = [16, 8], strides = [1, 1]} : vector<16x32xf32> to vector<16x8xf32>
    %189 = vector.shape_cast %188 : vector<16x8xf32> to vector<2x8x8xf32>
    %190 = arith.truncf %189 : vector<2x8x8xf32> to vector<2x8x8xbf16>
    %191 = vector.extract_strided_slice %185 {offsets = [0, 0], sizes = [24, 8], strides = [1, 1]} : vector<24x32xf32> to vector<24x8xf32>
    %192 = vector.shape_cast %191 : vector<24x8xf32> to vector<2x12x8xf32>
    %193 = arith.truncf %192 : vector<2x12x8xf32> to vector<2x12x8xbf16>
    %194 = vector.extract_strided_slice %186 {offsets = [0, 0], sizes = [24, 8], strides = [1, 1]} : vector<24x32xf32> to vector<24x8xf32>
    %195 = vector.shape_cast %194 : vector<24x8xf32> to vector<2x12x8xf32>
    %196 = arith.truncf %195 : vector<2x12x8xf32> to vector<2x12x8xbf16>
    "tpu.trace_start"() <{level = 10 : i32, message = "bqd,bkd->bqk"}> : () -> ()
    %cst_63 = arith.constant dense<0.000000e+00> : vector<2x8x12xf32>
    %197 = tpu.matmul %190, %193, %cst_63 {dimension_numbers = #tpu.dot_dimension_numbers<[2], [2], [1], [1], [0, 0, 0, 1, 1, 1], [0], [0]>} : vector<2x8x8xbf16>, vector<2x12x8xbf16>, vector<2x8x12xf32> -> vector<2x8x12xf32>
    "tpu.trace_stop"() : () -> ()
    %cst_64 = arith.constant 0.353553385 : f32
    %198 = vector.broadcast %cst_64 : f32 to vector<2x8x12xf32>
    %199 = arith.mulf %197, %198 : vector<2x8x12xf32>
    %cst_65 = arith.constant dense<0xFF800000> : vector<2x8xf32>
    %200 = vector.multi_reduction <maximumf>, %199, %cst_65 [2] : vector<2x8x12xf32> to vector<2x8xf32>
    %201 = vector.shape_cast %200 : vector<2x8xf32> to vector<2x8x1xf32>
    %202 = vector.broadcast %201 : vector<2x8x1xf32> to vector<2x8x12xf32>
    %203 = arith.subf %199, %202 : vector<2x8x12xf32>
    %204 = math.exp %203 : vector<2x8x12xf32>
    %cst_66 = arith.constant dense<0.000000e+00> : vector<2x8xf32>
    %205 = vector.multi_reduction <add>, %204, %cst_66 [2] : vector<2x8x12xf32> to vector<2x8xf32>
    %206 = vector.shape_cast %205 : vector<2x8xf32> to vector<2x8x1xf32>
    %207 = arith.truncf %204 : vector<2x8x12xf32> to vector<2x8x12xbf16>
    "tpu.trace_start"() <{level = 10 : i32, message = "bqk,bkd->bqd"}> : () -> ()
    %cst_67 = arith.constant dense<0.000000e+00> : vector<2x8x8xf32>
    %208 = tpu.matmul %207, %196, %cst_67 {dimension_numbers = #tpu.dot_dimension_numbers<[2], [1], [1], [2], [0, 0, 0, 1, 1, 2], [0], [0]>} : vector<2x8x12xbf16>, vector<2x12x8xbf16>, vector<2x8x8xf32> -> vector<2x8x8xf32>
    "tpu.trace_stop"() : () -> ()
    %209 = tpu.reciprocal %206 {approx = true} : vector<2x8x1xf32> -> vector<2x8x1xf32>
    %210 = vector.broadcast %209 : vector<2x8x1xf32> to vector<2x8x8xf32>
    %211 = arith.mulf %208, %210 : vector<2x8x8xf32>
    %212 = vector.shape_cast %211 : vector<2x8x8xf32> to vector<16x8xf32>
    %c0_68 = arith.constant 0 : index
    %c0_69 = arith.constant 0 : index
    %213 = vector.load %arg13[%c0_68, %c0_69] : memref<32x32xf32, #tpu.memory_space<vmem>>, vector<8x32xf32>
    %214 = arith.truncf %213 : vector<8x32xf32> to vector<8x32xbf16>
    %215 = arith.truncf %212 : vector<16x8xf32> to vector<16x8xbf16>
    %cst_70 = arith.constant dense<0.000000e+00> : vector<16x32xf32>
    %216 = tpu.matmul %215, %214, %cst_70 {dimension_numbers = #tpu.dot_dimension_numbers<[1], [0], [0], [1], [0, 0, 1, 1], [], []>} : vector<16x8xbf16>, vector<8x32xbf16>, vector<16x32xf32> -> vector<16x32xf32>
    %217 = arith.addf %187, %216 : vector<16x32xf32>
    %218 = vector.extract_strided_slice %178 {offsets = [0, 8], sizes = [16, 8], strides = [1, 1]} : vector<16x32xf32> to vector<16x8xf32>
    %219 = vector.shape_cast %218 : vector<16x8xf32> to vector<2x8x8xf32>
    %220 = arith.truncf %219 : vector<2x8x8xf32> to vector<2x8x8xbf16>
    %221 = vector.extract_strided_slice %185 {offsets = [0, 8], sizes = [24, 8], strides = [1, 1]} : vector<24x32xf32> to vector<24x8xf32>
    %222 = vector.shape_cast %221 : vector<24x8xf32> to vector<2x12x8xf32>
    %223 = arith.truncf %222 : vector<2x12x8xf32> to vector<2x12x8xbf16>
    %224 = vector.extract_strided_slice %186 {offsets = [0, 8], sizes = [24, 8], strides = [1, 1]} : vector<24x32xf32> to vector<24x8xf32>
    %225 = vector.shape_cast %224 : vector<24x8xf32> to vector<2x12x8xf32>
    %226 = arith.truncf %225 : vector<2x12x8xf32> to vector<2x12x8xbf16>
    "tpu.trace_start"() <{level = 10 : i32, message = "bqd,bkd->bqk"}> : () -> ()
    %cst_71 = arith.constant dense<0.000000e+00> : vector<2x8x12xf32>
    %227 = tpu.matmul %220, %223, %cst_71 {dimension_numbers = #tpu.dot_dimension_numbers<[2], [2], [1], [1], [0, 0, 0, 1, 1, 1], [0], [0]>} : vector<2x8x8xbf16>, vector<2x12x8xbf16>, vector<2x8x12xf32> -> vector<2x8x12xf32>
    "tpu.trace_stop"() : () -> ()
    %cst_72 = arith.constant 0.353553385 : f32
    %228 = vector.broadcast %cst_72 : f32 to vector<2x8x12xf32>
    %229 = arith.mulf %227, %228 : vector<2x8x12xf32>
    %cst_73 = arith.constant dense<0xFF800000> : vector<2x8xf32>
    %230 = vector.multi_reduction <maximumf>, %229, %cst_73 [2] : vector<2x8x12xf32> to vector<2x8xf32>
    %231 = vector.shape_cast %230 : vector<2x8xf32> to vector<2x8x1xf32>
    %232 = vector.broadcast %231 : vector<2x8x1xf32> to vector<2x8x12xf32>
    %233 = arith.subf %229, %232 : vector<2x8x12xf32>
    %234 = math.exp %233 : vector<2x8x12xf32>
    %cst_74 = arith.constant dense<0.000000e+00> : vector<2x8xf32>
    %235 = vector.multi_reduction <add>, %234, %cst_74 [2] : vector<2x8x12xf32> to vector<2x8xf32>
    %236 = vector.shape_cast %235 : vector<2x8xf32> to vector<2x8x1xf32>
    %237 = arith.truncf %234 : vector<2x8x12xf32> to vector<2x8x12xbf16>
    "tpu.trace_start"() <{level = 10 : i32, message = "bqk,bkd->bqd"}> : () -> ()
    %cst_75 = arith.constant dense<0.000000e+00> : vector<2x8x8xf32>
    %238 = tpu.matmul %237, %226, %cst_75 {dimension_numbers = #tpu.dot_dimension_numbers<[2], [1], [1], [2], [0, 0, 0, 1, 1, 2], [0], [0]>} : vector<2x8x12xbf16>, vector<2x12x8xbf16>, vector<2x8x8xf32> -> vector<2x8x8xf32>
    "tpu.trace_stop"() : () -> ()
    %239 = tpu.reciprocal %236 {approx = true} : vector<2x8x1xf32> -> vector<2x8x1xf32>
    %240 = vector.broadcast %239 : vector<2x8x1xf32> to vector<2x8x8xf32>
    %241 = arith.mulf %238, %240 : vector<2x8x8xf32>
    %242 = vector.shape_cast %241 : vector<2x8x8xf32> to vector<16x8xf32>
    %c8_76 = arith.constant 8 : index
    %c0_77 = arith.constant 0 : index
    %243 = vector.load %arg13[%c8_76, %c0_77] : memref<32x32xf32, #tpu.memory_space<vmem>>, vector<8x32xf32>
    %244 = arith.truncf %243 : vector<8x32xf32> to vector<8x32xbf16>
    %245 = arith.truncf %242 : vector<16x8xf32> to vector<16x8xbf16>
    %cst_78 = arith.constant dense<0.000000e+00> : vector<16x32xf32>
    %246 = tpu.matmul %245, %244, %cst_78 {dimension_numbers = #tpu.dot_dimension_numbers<[1], [0], [0], [1], [0, 0, 1, 1], [], []>} : vector<16x8xbf16>, vector<8x32xbf16>, vector<16x32xf32> -> vector<16x32xf32>
    %247 = arith.addf %217, %246 : vector<16x32xf32>
    %248 = vector.extract_strided_slice %178 {offsets = [0, 16], sizes = [16, 8], strides = [1, 1]} : vector<16x32xf32> to vector<16x8xf32>
    %249 = vector.shape_cast %248 : vector<16x8xf32> to vector<2x8x8xf32>
    %250 = arith.truncf %249 : vector<2x8x8xf32> to vector<2x8x8xbf16>
    %251 = vector.extract_strided_slice %185 {offsets = [0, 16], sizes = [24, 8], strides = [1, 1]} : vector<24x32xf32> to vector<24x8xf32>
    %252 = vector.shape_cast %251 : vector<24x8xf32> to vector<2x12x8xf32>
    %253 = arith.truncf %252 : vector<2x12x8xf32> to vector<2x12x8xbf16>
    %254 = vector.extract_strided_slice %186 {offsets = [0, 16], sizes = [24, 8], strides = [1, 1]} : vector<24x32xf32> to vector<24x8xf32>
    %255 = vector.shape_cast %254 : vector<24x8xf32> to vector<2x12x8xf32>
    %256 = arith.truncf %255 : vector<2x12x8xf32> to vector<2x12x8xbf16>
    "tpu.trace_start"() <{level = 10 : i32, message = "bqd,bkd->bqk"}> : () -> ()
    %cst_79 = arith.constant dense<0.000000e+00> : vector<2x8x12xf32>
    %257 = tpu.matmul %250, %253, %cst_79 {dimension_numbers = #tpu.dot_dimension_numbers<[2], [2], [1], [1], [0, 0, 0, 1, 1, 1], [0], [0]>} : vector<2x8x8xbf16>, vector<2x12x8xbf16>, vector<2x8x12xf32> -> vector<2x8x12xf32>
    "tpu.trace_stop"() : () -> ()
    %cst_80 = arith.constant 0.353553385 : f32
    %258 = vector.broadcast %cst_80 : f32 to vector<2x8x12xf32>
    %259 = arith.mulf %257, %258 : vector<2x8x12xf32>
    %cst_81 = arith.constant dense<0xFF800000> : vector<2x8xf32>
    %260 = vector.multi_reduction <maximumf>, %259, %cst_81 [2] : vector<2x8x12xf32> to vector<2x8xf32>
    %261 = vector.shape_cast %260 : vector<2x8xf32> to vector<2x8x1xf32>
    %262 = vector.broadcast %261 : vector<2x8x1xf32> to vector<2x8x12xf32>
    %263 = arith.subf %259, %262 : vector<2x8x12xf32>
    %264 = math.exp %263 : vector<2x8x12xf32>
    %cst_82 = arith.constant dense<0.000000e+00> : vector<2x8xf32>
    %265 = vector.multi_reduction <add>, %264, %cst_82 [2] : vector<2x8x12xf32> to vector<2x8xf32>
    %266 = vector.shape_cast %265 : vector<2x8xf32> to vector<2x8x1xf32>
    %267 = arith.truncf %264 : vector<2x8x12xf32> to vector<2x8x12xbf16>
    "tpu.trace_start"() <{level = 10 : i32, message = "bqk,bkd->bqd"}> : () -> ()
    %cst_83 = arith.constant dense<0.000000e+00> : vector<2x8x8xf32>
    %268 = tpu.matmul %267, %256, %cst_83 {dimension_numbers = #tpu.dot_dimension_numbers<[2], [1], [1], [2], [0, 0, 0, 1, 1, 2], [0], [0]>} : vector<2x8x12xbf16>, vector<2x12x8xbf16>, vector<2x8x8xf32> -> vector<2x8x8xf32>
    "tpu.trace_stop"() : () -> ()
    %269 = tpu.reciprocal %266 {approx = true} : vector<2x8x1xf32> -> vector<2x8x1xf32>
    %270 = vector.broadcast %269 : vector<2x8x1xf32> to vector<2x8x8xf32>
    %271 = arith.mulf %268, %270 : vector<2x8x8xf32>
    %272 = vector.shape_cast %271 : vector<2x8x8xf32> to vector<16x8xf32>
    %c16_84 = arith.constant 16 : index
    %c0_85 = arith.constant 0 : index
    %273 = vector.load %arg13[%c16_84, %c0_85] : memref<32x32xf32, #tpu.memory_space<vmem>>, vector<8x32xf32>
    %274 = arith.truncf %273 : vector<8x32xf32> to vector<8x32xbf16>
    %275 = arith.truncf %272 : vector<16x8xf32> to vector<16x8xbf16>
    %cst_86 = arith.constant dense<0.000000e+00> : vector<16x32xf32>
    %276 = tpu.matmul %275, %274, %cst_86 {dimension_numbers = #tpu.dot_dimension_numbers<[1], [0], [0], [1], [0, 0, 1, 1], [], []>} : vector<16x8xbf16>, vector<8x32xbf16>, vector<16x32xf32> -> vector<16x32xf32>
    %277 = arith.addf %247, %276 : vector<16x32xf32>
    %278 = vector.extract_strided_slice %178 {offsets = [0, 24], sizes = [16, 8], strides = [1, 1]} : vector<16x32xf32> to vector<16x8xf32>
    %279 = vector.shape_cast %278 : vector<16x8xf32> to vector<2x8x8xf32>
    %280 = arith.truncf %279 : vector<2x8x8xf32> to vector<2x8x8xbf16>
    %281 = vector.extract_strided_slice %185 {offsets = [0, 24], sizes = [24, 8], strides = [1, 1]} : vector<24x32xf32> to vector<24x8xf32>
    %282 = vector.shape_cast %281 : vector<24x8xf32> to vector<2x12x8xf32>
    %283 = arith.truncf %282 : vector<2x12x8xf32> to vector<2x12x8xbf16>
    %284 = vector.extract_strided_slice %186 {offsets = [0, 24], sizes = [24, 8], strides = [1, 1]} : vector<24x32xf32> to vector<24x8xf32>
    %285 = vector.shape_cast %284 : vector<24x8xf32> to vector<2x12x8xf32>
    %286 = arith.truncf %285 : vector<2x12x8xf32> to vector<2x12x8xbf16>
    "tpu.trace_start"() <{level = 10 : i32, message = "bqd,bkd->bqk"}> : () -> ()
    %cst_87 = arith.constant dense<0.000000e+00> : vector<2x8x12xf32>
    %287 = tpu.matmul %280, %283, %cst_87 {dimension_numbers = #tpu.dot_dimension_numbers<[2], [2], [1], [1], [0, 0, 0, 1, 1, 1], [0], [0]>} : vector<2x8x8xbf16>, vector<2x12x8xbf16>, vector<2x8x12xf32> -> vector<2x8x12xf32>
    "tpu.trace_stop"() : () -> ()
    %cst_88 = arith.constant 0.353553385 : f32
    %288 = vector.broadcast %cst_88 : f32 to vector<2x8x12xf32>
    %289 = arith.mulf %287, %288 : vector<2x8x12xf32>
    %cst_89 = arith.constant dense<0xFF800000> : vector<2x8xf32>
    %290 = vector.multi_reduction <maximumf>, %289, %cst_89 [2] : vector<2x8x12xf32> to vector<2x8xf32>
    %291 = vector.shape_cast %290 : vector<2x8xf32> to vector<2x8x1xf32>
    %292 = vector.broadcast %291 : vector<2x8x1xf32> to vector<2x8x12xf32>
    %293 = arith.subf %289, %292 : vector<2x8x12xf32>
    %294 = math.exp %293 : vector<2x8x12xf32>
    %cst_90 = arith.constant dense<0.000000e+00> : vector<2x8xf32>
    %295 = vector.multi_reduction <add>, %294, %cst_90 [2] : vector<2x8x12xf32> to vector<2x8xf32>
    %296 = vector.shape_cast %295 : vector<2x8xf32> to vector<2x8x1xf32>
    %297 = arith.truncf %294 : vector<2x8x12xf32> to vector<2x8x12xbf16>
    "tpu.trace_start"() <{level = 10 : i32, message = "bqk,bkd->bqd"}> : () -> ()
    %cst_91 = arith.constant dense<0.000000e+00> : vector<2x8x8xf32>
    %298 = tpu.matmul %297, %286, %cst_91 {dimension_numbers = #tpu.dot_dimension_numbers<[2], [1], [1], [2], [0, 0, 0, 1, 1, 2], [0], [0]>} : vector<2x8x12xbf16>, vector<2x12x8xbf16>, vector<2x8x8xf32> -> vector<2x8x8xf32>
    "tpu.trace_stop"() : () -> ()
    %299 = tpu.reciprocal %296 {approx = true} : vector<2x8x1xf32> -> vector<2x8x1xf32>
    %300 = vector.broadcast %299 : vector<2x8x1xf32> to vector<2x8x8xf32>
    %301 = arith.mulf %298, %300 : vector<2x8x8xf32>
    %302 = vector.shape_cast %301 : vector<2x8x8xf32> to vector<16x8xf32>
    %c24_92 = arith.constant 24 : index
    %c0_93 = arith.constant 0 : index
    %303 = vector.load %arg13[%c24_92, %c0_93] : memref<32x32xf32, #tpu.memory_space<vmem>>, vector<8x32xf32>
    %304 = arith.truncf %303 : vector<8x32xf32> to vector<8x32xbf16>
    %305 = arith.truncf %302 : vector<16x8xf32> to vector<16x8xbf16>
    %cst_94 = arith.constant dense<0.000000e+00> : vector<16x32xf32>
    %306 = tpu.matmul %305, %304, %cst_94 {dimension_numbers = #tpu.dot_dimension_numbers<[1], [0], [0], [1], [0, 0, 1, 1], [], []>} : vector<16x8xbf16>, vector<8x32xbf16>, vector<16x32xf32> -> vector<16x32xf32>
    %307 = arith.addf %277, %306 : vector<16x32xf32>
    %c0_95 = arith.constant 0 : index
    %c0_96 = arith.constant 0 : index
    %308 = vector.load %arg14[%c0_95, %c0_96] : memref<1x32xf32, #tpu.memory_space<vmem>>, vector<1x32xf32>
    %309 = vector.broadcast %308 : vector<1x32xf32> to vector<16x32xf32>
    %310 = arith.addf %307, %309 : vector<16x32xf32>
    %311 = arith.addf %172, %310 : vector<16x32xf32>
    %c0_97 = arith.constant 0 : index
    %c0_98 = arith.constant 0 : index
    %312 = vector.load %arg15[%c0_97, %c0_98] : memref<1x32xf32, #tpu.memory_space<vmem>>, vector<1x32xf32>
    %c0_99 = arith.constant 0 : index
    %c0_100 = arith.constant 0 : index
    %313 = vector.load %arg16[%c0_99, %c0_100] : memref<1x32xf32, #tpu.memory_space<vmem>>, vector<1x32xf32>
    %cst_101 = arith.constant dense<0.000000e+00> : vector<16xf32>
    %314 = vector.multi_reduction <add>, %311, %cst_101 [1] : vector<16x32xf32> to vector<16xf32>
    %315 = vector.shape_cast %314 : vector<16xf32> to vector<16x1xf32>
    %cst_102 = arith.constant 3.200000e+01 : f32
    %316 = vector.broadcast %cst_102 : f32 to vector<16x1xf32>
    %317 = arith.divf %315, %316 : vector<16x1xf32>
    %318 = vector.broadcast %317 : vector<16x1xf32> to vector<16x32xf32>
    %319 = arith.subf %311, %318 : vector<16x32xf32>
    %320 = arith.mulf %319, %319 : vector<16x32xf32>
    %cst_103 = arith.constant dense<0.000000e+00> : vector<16xf32>
    %321 = vector.multi_reduction <add>, %320, %cst_103 [1] : vector<16x32xf32> to vector<16xf32>
    %322 = vector.shape_cast %321 : vector<16xf32> to vector<16x1xf32>
    %cst_104 = arith.constant 3.200000e+01 : f32
    %323 = vector.broadcast %cst_104 : f32 to vector<16x1xf32>
    %324 = arith.divf %322, %323 : vector<16x1xf32>
    %cst_105 = arith.constant 9.99999974E-6 : f32
    %325 = vector.broadcast %cst_105 : f32 to vector<16x1xf32>
    %326 = arith.addf %324, %325 : vector<16x1xf32>
    %327 = math.rsqrt %326 : vector<16x1xf32>
    %328 = vector.broadcast %327 : vector<16x1xf32> to vector<16x32xf32>
    %329 = arith.mulf %319, %328 : vector<16x32xf32>
    %330 = vector.broadcast %312 : vector<1x32xf32> to vector<16x32xf32>
    %331 = arith.mulf %329, %330 : vector<16x32xf32>
    %332 = vector.broadcast %313 : vector<1x32xf32> to vector<16x32xf32>
    %333 = arith.addf %331, %332 : vector<16x32xf32>
    %c0_106 = arith.constant 0 : index
    %c0_107 = arith.constant 0 : index
    %334 = vector.load %arg17[%c0_106, %c0_107] : memref<32x64xbf16, #tpu.memory_space<vmem>>, vector<32x64xbf16>
    %c0_108 = arith.constant 0 : index
    %c0_109 = arith.constant 0 : index
    %335 = vector.load %arg18[%c0_108, %c0_109] : memref<1x64xf32, #tpu.memory_space<vmem>>, vector<1x64xf32>
    %336 = arith.truncf %333 : vector<16x32xf32> to vector<16x32xbf16>
    %cst_110 = arith.constant dense<0.000000e+00> : vector<16x64xf32>
    %337 = tpu.matmul %336, %334, %cst_110 {dimension_numbers = #tpu.dot_dimension_numbers<[1], [0], [0], [1], [0, 0, 1, 1], [], []>} : vector<16x32xbf16>, vector<32x64xbf16>, vector<16x64xf32> -> vector<16x64xf32>
    %338 = vector.broadcast %335 : vector<1x64xf32> to vector<16x64xf32>
    %339 = arith.addf %337, %338 : vector<16x64xf32>
    %cst_111 = arith.constant 0.000000e+00 : f32
    %340 = vector.broadcast %cst_111 : f32 to vector<16x64xf32>
    %341 = arith.maximumf %339, %340 : vector<16x64xf32>
    %c0_112 = arith.constant 0 : index
    %c0_113 = arith.constant 0 : index
    %342 = vector.load %arg19[%c0_112, %c0_113] : memref<64x32xbf16, #tpu.memory_space<vmem>>, vector<64x32xbf16>
    %c0_114 = arith.constant 0 : index
    %c0_115 = arith.constant 0 : index
    %343 = vector.load %arg20[%c0_114, %c0_115] : memref<1x32xf32, #tpu.memory_space<vmem>>, vector<1x32xf32>
    %344 = arith.truncf %341 : vector<16x64xf32> to vector<16x64xbf16>
    %cst_116 = arith.constant dense<0.000000e+00> : vector<16x32xf32>
    %345 = tpu.matmul %344, %342, %cst_116 {dimension_numbers = #tpu.dot_dimension_numbers<[1], [0], [0], [1], [0, 0, 1, 1], [], []>} : vector<16x64xbf16>, vector<64x32xbf16>, vector<16x32xf32> -> vector<16x32xf32>
    %346 = vector.broadcast %343 : vector<1x32xf32> to vector<16x32xf32>
    %347 = arith.addf %345, %346 : vector<16x32xf32>
    %348 = arith.addf %333, %347 : vector<16x32xf32>
    %c0_117 = arith.constant 0 : index
    %c0_118 = arith.constant 0 : index
    %349 = vector.load %arg21[%c0_117, %c0_118] : memref<1x32xf32, #tpu.memory_space<vmem>>, vector<1x32xf32>
    %c0_119 = arith.constant 0 : index
    %c0_120 = arith.constant 0 : index
    %350 = vector.load %arg22[%c0_119, %c0_120] : memref<1x32xf32, #tpu.memory_space<vmem>>, vector<1x32xf32>
    %cst_121 = arith.constant dense<0.000000e+00> : vector<16xf32>
    %351 = vector.multi_reduction <add>, %348, %cst_121 [1] : vector<16x32xf32> to vector<16xf32>
    %352 = vector.shape_cast %351 : vector<16xf32> to vector<16x1xf32>
    %cst_122 = arith.constant 3.200000e+01 : f32
    %353 = vector.broadcast %cst_122 : f32 to vector<16x1xf32>
    %354 = arith.divf %352, %353 : vector<16x1xf32>
    %355 = vector.broadcast %354 : vector<16x1xf32> to vector<16x32xf32>
    %356 = arith.subf %348, %355 : vector<16x32xf32>
    %357 = arith.mulf %356, %356 : vector<16x32xf32>
    %cst_123 = arith.constant dense<0.000000e+00> : vector<16xf32>
    %358 = vector.multi_reduction <add>, %357, %cst_123 [1] : vector<16x32xf32> to vector<16xf32>
    %359 = vector.shape_cast %358 : vector<16xf32> to vector<16x1xf32>
    %cst_124 = arith.constant 3.200000e+01 : f32
    %360 = vector.broadcast %cst_124 : f32 to vector<16x1xf32>
    %361 = arith.divf %359, %360 : vector<16x1xf32>
    %cst_125 = arith.constant 9.99999974E-6 : f32
    %362 = vector.broadcast %cst_125 : f32 to vector<16x1xf32>
    %363 = arith.addf %361, %362 : vector<16x1xf32>
    %364 = math.rsqrt %363 : vector<16x1xf32>
    %365 = vector.broadcast %364 : vector<16x1xf32> to vector<16x32xf32>
    %366 = arith.mulf %356, %365 : vector<16x32xf32>
    %367 = vector.broadcast %349 : vector<1x32xf32> to vector<16x32xf32>
    %368 = arith.mulf %366, %367 : vector<16x32xf32>
    %369 = vector.broadcast %350 : vector<1x32xf32> to vector<16x32xf32>
    %370 = arith.addf %368, %369 : vector<16x32xf32>
    %371 = vector.shape_cast %370 : vector<16x32xf32> to vector<2x8x32xf32>
    %c0_126 = arith.constant 0 : index
    %c0_127 = arith.constant 0 : index
    %c0_128 = arith.constant 0 : index
    %372 = vector.load %arg23[%c0_126, %c0_127, %c0_128] : memref<2x8x32xf32, #tpu.memory_space<vmem>>, vector<2x8x32xf32>
    tpu.vector_store %arg23[%c0_126, %c0_127, %c0_128], %371 {strides = array<i32>} : memref<2x8x32xf32, #tpu.memory_space<vmem>>, vector<2x8x32xf32>,
    return
  }
}

</mosaic_0001>

<llo_original>
// kernel: decoder_forward.5
$region0: #{decoder_forward.5}
  #allocation0 [shape = 'u32[]', space=smem, size = 0x4, offset = 0x4, fixed_abs, tag = 'smem constant byte address 0x4 - core index']
  #allocation1 [shape = 'u32[72,128]{1,0:T(1,128)}', space=vmem, size = 0x9000, scoped, tag = 'internal scratch']
  %s0 = inlined_call_operand.vmem [shape: f32[16,32], index: 0, kind: input, shape index: {}]
  %s1 = inlined_call_operand.vmem [shape: bf16[32,128], index: 1, kind: input, shape index: {}]
  %s2 = inlined_call_operand.vmem [shape: f32[1,128], index: 2, kind: input, shape index: {}]
  %s3 = inlined_call_operand.vmem [shape: f32[16,128], index: 3, kind: output, shape index: {}]
  %s4 = sld [smem:[#allocation0]]
  $region22: #{decoder_forward.5} parent=0
    _
  %s6 = ssub.s32 1, %s4
  %s7 = scalar_select 0, %s6, %s4
  // Predicated region
  $region2: #{decoder_forward.5} parent=0 // pred_check
    _
  $region3: #{decoder_forward.5} parent=0 // pred_check_branch
    %9 = sbr.rel (0) target = $region5
  $region4: #{decoder_forward.5} parent=0 // pred_region
    _
  $region5: #{decoder_forward.5} parent=0 // pred_fallthru
    _
  // Predicated region
  $region6: #{decoder_forward.5} parent=0 // pred_check
    _
  $region7: #{decoder_forward.5} parent=0 // pred_check_branch
    %11 = sbr.rel (0) target = $region9
  $region8: #{decoder_forward.5} parent=0 // pred_region
    _
  $region9: #{decoder_forward.5} parent=0 // pred_fallthru
    _
  // Predicated region
  $region10: #{decoder_forward.5} parent=0 // pred_check
    _
  $region11: #{decoder_forward.5} parent=0 // pred_check_branch
    %13 = sbr.rel (0) target = $region13
  $region12: #{decoder_forward.5} parent=0 // pred_region
    _
  $region13: #{decoder_forward.5} parent=0 // pred_fallthru
    _
  %v15 = vld [vmem:[%s0] sm:$0xff]
  %v16 = vld [vmem:[%s0 + $0x8] sm:$0xff]
  %v17 = vld [vmem:[%s1] sm:$0xf]
  %v18 = vld [vmem:[%s1 + $0x4] sm:$0xf]
  %v19 = vld [vmem:[%s1 + $0x8] sm:$0xf]
  %v20 = vld [vmem:[%s1 + $0xc] sm:$0xf]
  %v21 = vld [vmem:[%s2] sm:$0x1]
  %v22 = vpack.c.bf16 %v16, %v15
  %v24 = vperm.slane %v21, 0
  %v30 = vunpack.c.l.b16 %v17
  %v31 = vunpack.c.l.b16 %v18
  %v32 = vunpack.c.l.b16 %v19
  %v33 = vunpack.c.l.b16 %v20
  %v34 = vpack.c.b16 %v31, %v30
  %v35 = vpack.c.b16 %v33, %v32
  %vm38 = vcmask 261120
  %v40 = vsel %vm38, %v22, 0
  %42 = vmatpush.bf16.msra.mxu0 0
  %43 = vmatpush.bf16.msra.mxu0 0
  %44 = vmatpush.bf16.msra.mxu0 0
  %45 = vmatpush.bf16.msra.mxu0 0
  %46 = vmatpush.bf16.msra.mxu0 0
  %47 = vmatpush.bf16.msra.mxu0 0
  %48 = vmatpush.bf16.msra.mxu0 %v35
  %49 = vmatpush.bf16.msra.mxu0 %v34
  %50 = vmatmul.bf16.gmra.mxu0 %v40
  %v51 = vpop.f32.mrf.mxu0
  %v52 = vadd.f32 %v24, %v51
  %v53 = vpop.f32.mrf.mxu0
  %v54 = vadd.f32 %v24, %v53
  %55 = vdwg.mxu0
  %56 = vst [vmem:[%s3] sm:$0xff] %v52
  %57 = vst [vmem:[%s3 + $0x8] sm:$0xff] %v54
  // Predicated region
  $region14: #{decoder_forward.5} parent=0 // pred_check
    _
  $region15: #{decoder_forward.5} parent=0 // pred_check_branch
    %59 = sbr.rel (0) target = $region17
  $region16: #{decoder_forward.5} parent=0 // pred_region
    _
  $region17: #{decoder_forward.5} parent=0 // pred_fallthru
    _
  // Predicated region
  $region18: #{decoder_forward.5} parent=0 // pred_check
    _
  $region19: #{decoder_forward.5} parent=0 // pred_check_branch
    %61 = sbr.rel (0) target = $region21
  $region20: #{decoder_forward.5} parent=0 // pred_region
    _
  $region21: #{decoder_forward.5} parent=0 // pred_fallthru
    _

// kernel: decoder_forward.4
$region0: #{decoder_forward.4}
  #allocation0 [shape = 'u32[]', space=smem, size = 0x4, offset = 0x4, fixed_abs, tag = 'smem constant byte address 0x4 - core index']
  #allocation1 [shape = 'u32[72,128]{1,0:T(1,128)}', space=vmem, size = 0x9000, scoped, tag = 'internal scratch']
  %s0 = inlined_call_operand.vmem [shape: f32[2,8,32], index: 0, kind: input, shape index: {}]
  %s1 = inlined_call_operand.vmem [shape: f32[2,12,32], index: 1, kind: input, shape index: {}]
  %s2 = inlined_call_operand.vmem [shape: f32[8,8], index: 2, kind: input, shape index: {}]
  %s3 = inlined_call_operand.vmem [shape: bf16[32,96], index: 3, kind: input, shape index: {}]
  %s4 = inlined_call_operand.vmem [shape: f32[1,96], index: 4, kind: input, shape index: {}]
  %s5 = inlined_call_operand.vmem [shape: f32[32,32], index: 5, kind: input, shape index: {}]
  %s6 = inlined_call_operand.vmem [shape: f32[1,32], index: 6, kind: input, shape index: {}]
  %s7 = inlined_call_operand.vmem [shape: f32[1,32], index: 7, kind: input, shape index: {}]
  %s8 = inlined_call_operand.vmem [shape: f32[1,32], index: 8, kind: input, shape index: {}]
  %s9 = inlined_call_operand.vmem [shape: bf16[32,32], index: 9, kind: input, shape index: {}]
  %s10 = inlined_call_operand.vmem [shape: f32[1,32], index: 10, kind: input, shape index: {}]
  %s11 = inlined_call_operand.vmem [shape: bf16[32,64], index: 11, kind: input, shape index: {}]
  %s12 = inlined_call_operand.vmem [shape: f32[1,64], index: 12, kind: input, shape index: {}]
  %s13 = inlined_call_operand.vmem [shape: f32[32,32], index: 13, kind: input, shape index: {}]
  %s14 = inlined_call_operand.vmem [shape: f32[1,32], index: 14, kind: input, shape index: {}]
  %s15 = inlined_call_operand.hbm [shape: f32[1,32], index: 15, kind: input, shape index: {}]
  %s16 = inlined_call_operand.hbm [shape: f32[1,32], index: 16, kind: input, shape index: {}]
  %s17 = inlined_call_operand.vmem [shape: bf16[32,64], index: 17, kind: input, shape index: {}]
  %s18 = inlined_call_operand.hbm [shape: f32[1,64], index: 18, kind: input, shape index: {}]
  %s19 = inlined_call_operand.vmem [shape: bf16[64,32], index: 19, kind: input, shape index: {}]
  %s20 = inlined_call_operand.hbm [shape: f32[1,32], index: 20, kind: input, shape index: {}]
  %s21 = inlined_call_operand.hbm [shape: f32[1,32], index: 21, kind: input, shape index: {}]
  %s22 = inlined_call_operand.hbm [shape: f32[1,32], index: 22, kind: input, shape index: {}]
  %s23 = inlined_call_operand.vmem [shape: f32[2,8,32], index: 23, kind: output, shape index: {}]
  %s24 = sld [smem:[#allocation0]]
  $region126: #{decoder_forward.4} parent=0
    _
  %s26 = ssub.s32 1, %s24
  %s27 = scalar_select 0, %s26, %s24
  $region1: #{decoder_forward.4} parent=0
    #allocation2 [shape = 'u8[512]{0}', space=vmem, size = 0x400, scoped, tag = 'input window, operand 15, single buffered']
    #allocation3 [shape = 's32[1]{0}', space=sflag, size = 0x4, scoped, tag = 'scoped memory for decoder_forward.4']
    #allocation4 [shape = 'u8[512]{0}', space=vmem, size = 0x400, scoped, tag = 'input window, operand 16, single buffered']
    #allocation5 [shape = 's32[1]{0}', space=sflag, size = 0x4, scoped, tag = 'scoped memory for decoder_forward.4']
    #allocation6 [shape = 'u8[512]{0}', space=vmem, size = 0x400, scoped, tag = 'input window, operand 18, single buffered']
    #allocation7 [shape = 'u8[512]{0}', space=vmem, size = 0x400, scoped, tag = 'input window, operand 20, single buffered']
    #allocation8 [shape = 's32[1]{0}', space=sflag, size = 0x4, scoped, tag = 'scoped memory for decoder_forward.4']
    #allocation9 [shape = 'u8[512]{0}', space=vmem, size = 0x400, scoped, tag = 'input window, operand 21, single buffered']
    #allocation10 [shape = 'u8[512]{0}', space=vmem, size = 0x400, scoped, tag = 'input window, operand 22, single buffered']
    #allocation11 [shape = 's32[1]{0}', space=sflag, size = 0x4, scoped, tag = 'scoped memory for decoder_forward.4']
    %28 = vsyncpa [#allocation3], 0
    %29 = vsyncpa [#allocation5], 0
    %30 = vsyncpa [#allocation8], 0
    %31 = vsyncpa [#allocation11], 0
    // Predicated region
    $region2: #{decoder_forward.4} parent=1 // pred_check
      _
    $region3: #{decoder_forward.4} parent=1 // pred_check_branch
      %33 = sbr.rel (0) target = $region5
    $region4: #{decoder_forward.4} parent=1 // pred_region
      _
    $region5: #{decoder_forward.4} parent=1 // pred_fallthru
      _
    // Predicated region
    $region6: #{decoder_forward.4} parent=1 // pred_check
      _
    $region7: #{decoder_forward.4} parent=1 // pred_check_branch
      %35 = sbr.rel (0) target = $region9
    $region8: #{decoder_forward.4} parent=1 // pred_region
      _
    $region9: #{decoder_forward.4} parent=1 // pred_fallthru
      _
    // Predicated region
    $region10: #{decoder_forward.4} parent=1 // pred_check
      _
    $region11: #{decoder_forward.4} parent=1 // pred_check_branch
      %37 = sbr.rel (0) target = $region13
    $region12: #{decoder_forward.4} parent=1 // pred_region
      _
    $region13: #{decoder_forward.4} parent=1 // pred_fallthru
      _
    // Predicated region
    $region14: #{decoder_forward.4} parent=1 // pred_check
      _
    $region15: #{decoder_forward.4} parent=1 // pred_check_branch
      %39 = sbr.rel (0) target = $region17
    $region16: #{decoder_forward.4} parent=1 // pred_region
      _
    $region17: #{decoder_forward.4} parent=1 // pred_fallthru
      _
    // Predicated region
    $region18: #{decoder_forward.4} parent=1 // pred_check
      _
    $region19: #{decoder_forward.4} parent=1 // pred_check_branch
      %41 = sbr.rel (0) target = $region21
    $region20: #{decoder_forward.4} parent=1 // pred_region
      _
    $region21: #{decoder_forward.4} parent=1 // pred_fallthru
      _
    // Predicated region
    $region22: #{decoder_forward.4} parent=1 // pred_check
      _
    $region23: #{decoder_forward.4} parent=1 // pred_check_branch
      %43 = sbr.rel (0) target = $region25
    $region24: #{decoder_forward.4} parent=1 // pred_region
      _
    $region25: #{decoder_forward.4} parent=1 // pred_fallthru
      _
    // Predicated region
    $region26: #{decoder_forward.4} parent=1 // pred_check
      _
    $region27: #{decoder_forward.4} parent=1 // pred_check_branch
      %45 = sbr.rel (0) target = $region29
    $region28: #{decoder_forward.4} parent=1 // pred_region
      _
    $region29: #{decoder_forward.4} parent=1 // pred_fallthru
      _
    // Predicated region
    $region30: #{decoder_forward.4} parent=1 // pred_check
      _
    $region31: #{decoder_forward.4} parent=1 // pred_check_branch
      %47 = sbr.rel (0) target = $region33
    $region32: #{decoder_forward.4} parent=1 // pred_region
      _
    $region33: #{decoder_forward.4} parent=1 // pred_fallthru
      _
    // Predicated region
    $region34: #{decoder_forward.4} parent=1 // pred_check
      _
    $region35: #{decoder_forward.4} parent=1 // pred_check_branch
      %49 = sbr.rel (0) target = $region37
    $region36: #{decoder_forward.4} parent=1 // pred_region
      _
    $region37: #{decoder_forward.4} parent=1 // pred_fallthru
      _
    // Predicated region
    $region38: #{decoder_forward.4} parent=1 // pred_check
      _
    $region39: #{decoder_forward.4} parent=1 // pred_check_branch
      %51 = sbr.rel (0) target = $region41
    $region40: #{decoder_forward.4} parent=1 // pred_region
      _
    $region41: #{decoder_forward.4} parent=1 // pred_fallthru
      _
    // Predicated region
    $region42: #{decoder_forward.4} parent=1 // pred_check
      _
    $region43: #{decoder_forward.4} parent=1 // pred_check_branch
      %53 = sbr.rel (0) target = $region45
    $region44: #{decoder_forward.4} parent=1 // pred_region
      _
    $region45: #{decoder_forward.4} parent=1 // pred_fallthru
      _
    // Predicated region
    $region46: #{decoder_forward.4} parent=1 // pred_check
      _
    $region47: #{decoder_forward.4} parent=1 // pred_check_branch
      %55 = sbr.rel (0) target = $region49
    $region48: #{decoder_forward.4} parent=1 // pred_region
      _
    $region49: #{decoder_forward.4} parent=1 // pred_fallthru
      _
    // Predicated region
    $region50: #{decoder_forward.4} parent=1 // pred_check
      _
    $region51: #{decoder_forward.4} parent=1 // pred_check_branch
      %57 = sbr.rel (0) target = $region53
    $region52: #{decoder_forward.4} parent=1 // pred_region
      _
    $region53: #{decoder_forward.4} parent=1 // pred_fallthru
      _
    // Predicated region
    $region54: #{decoder_forward.4} parent=1 // pred_check
      _
    $region55: #{decoder_forward.4} parent=1 // pred_check_branch
      %59 = sbr.rel (0) target = $region57
    $region56: #{decoder_forward.4} parent=1 // pred_region
      _
    $region57: #{decoder_forward.4} parent=1 // pred_fallthru
      _
    // Predicated region
    $region58: #{decoder_forward.4} parent=1 // pred_check
      _
    $region59: #{decoder_forward.4} parent=1 // pred_check_branch
      %61 = sbr.rel (0) target = $region61
    $region60: #{decoder_forward.4} parent=1 // pred_region
      _
    $region61: #{decoder_forward.4} parent=1 // pred_fallthru
      _
    // Predicated region
    $region62: #{decoder_forward.4} parent=1 // pred_check
      _
    $region63: #{decoder_forward.4} parent=1 // pred_check_branch
      %63 = sbr.rel (0) target = $region65
    $region64: #{decoder_forward.4} parent=1 // pred_region
      %65 = vsyncadd [#allocation3], 0
      %s67 = sshll.u32 %s15, 4
      %s68 = int_to_ptr.hbm [resolvable:$true] %s67
      %s69 = sshll.u32 [#allocation2], 4
      %s70 = int_to_ptr.vmem [resolvable:$true] %s69
      %72 = dma.hbm_to_vmem [thread:$0]  %s68, 16, %s70, [#allocation3]
    $region65: #{decoder_forward.4} parent=1 // pred_fallthru
      _
    // Predicated region
    $region66: #{decoder_forward.4} parent=1 // pred_check
      _
    $region67: #{decoder_forward.4} parent=1 // pred_check_branch
      %74 = sbr.rel (0) target = $region69
    $region68: #{decoder_forward.4} parent=1 // pred_region
      %76 = vsyncadd [#allocation5], 0
      %s78 = sshll.u32 %s16, 4
      %s79 = int_to_ptr.hbm [resolvable:$true] %s78
      %s80 = sshll.u32 [#allocation4], 4
      %s81 = int_to_ptr.vmem [resolvable:$true] %s80
      %83 = dma.hbm_to_vmem [thread:$0]  %s79, 16, %s81, [#allocation5]
    $region69: #{decoder_forward.4} parent=1 // pred_fallthru
      _
    // Predicated region
    $region70: #{decoder_forward.4} parent=1 // pred_check
      _
    $region71: #{decoder_forward.4} parent=1 // pred_check_branch
      %85 = sbr.rel (0) target = $region73
    $region72: #{decoder_forward.4} parent=1 // pred_region
      _
    $region73: #{decoder_forward.4} parent=1 // pred_fallthru
      _
    // Predicated region
    $region74: #{decoder_forward.4} parent=1 // pred_check
      _
    $region75: #{decoder_forward.4} parent=1 // pred_check_branch
      %87 = sbr.rel (0) target = $region77
    $region76: #{decoder_forward.4} parent=1 // pred_region
      %89 = vsyncadd [#allocation5], 0
      %s91 = sshll.u32 %s18, 4
      %s92 = int_to_ptr.hbm [resolvable:$true] %s91
      %s93 = sshll.u32 [#allocation6], 4
      %s94 = int_to_ptr.vmem [resolvable:$true] %s93
      %96 = dma.hbm_to_vmem [thread:$0]  %s92, 16, %s94, [#allocation5]
    $region77: #{decoder_forward.4} parent=1 // pred_fallthru
      _
    // Predicated region
    $region78: #{decoder_forward.4} parent=1 // pred_check
      _
    $region79: #{decoder_forward.4} parent=1 // pred_check_branch
      %98 = sbr.rel (0) target = $region81
    $region80: #{decoder_forward.4} parent=1 // pred_region
      _
    $region81: #{decoder_forward.4} parent=1 // pred_fallthru
      _
    // Predicated region
    $region82: #{decoder_forward.4} parent=1 // pred_check
      _
    $region83: #{decoder_forward.4} parent=1 // pred_check_branch
      %100 = sbr.rel (0) target = $region85
    $region84: #{decoder_forward.4} parent=1 // pred_region
      %102 = vsyncadd [#allocation8], 0
      %s104 = sshll.u32 %s20, 4
      %s105 = int_to_ptr.hbm [resolvable:$true] %s104
      %s106 = sshll.u32 [#allocation7], 4
      %s107 = int_to_ptr.vmem [resolvable:$true] %s106
      %109 = dma.hbm_to_vmem [thread:$0]  %s105, 16, %s107, [#allocation8]
    $region85: #{decoder_forward.4} parent=1 // pred_fallthru
      _
    // Predicated region
    $region86: #{decoder_forward.4} parent=1 // pred_check
      _
    $region87: #{decoder_forward.4} parent=1 // pred_check_branch
      %111 = sbr.rel (0) target = $region89
    $region88: #{decoder_forward.4} parent=1 // pred_region
      %113 = vsyncadd [#allocation8], 0
      %s115 = sshll.u32 %s21, 4
      %s116 = int_to_ptr.hbm [resolvable:$true] %s115
      %s117 = sshll.u32 [#allocation9], 4
      %s118 = int_to_ptr.vmem [resolvable:$true] %s117
      %120 = dma.hbm_to_vmem [thread:$0]  %s116, 16, %s118, [#allocation8]
    $region89: #{decoder_forward.4} parent=1 // pred_fallthru
      _
    // Predicated region
    $region90: #{decoder_forward.4} parent=1 // pred_check
      _
    $region91: #{decoder_forward.4} parent=1 // pred_check_branch
      %122 = sbr.rel (0) target = $region93
    $region92: #{decoder_forward.4} parent=1 // pred_region
      %124 = vsyncadd [#allocation11], 0
      %s126 = sshll.u32 %s22, 4
      %s127 = int_to_ptr.hbm [resolvable:$true] %s126
      %s128 = sshll.u32 [#allocation10], 4
      %s129 = int_to_ptr.vmem [resolvable:$true] %s128
      %131 = dma.hbm_to_vmem [thread:$0]  %s127, 16, %s129, [#allocation11]
    $region93: #{decoder_forward.4} parent=1 // pred_fallthru
      _
    // Predicated region
    $region94: #{decoder_forward.4} parent=1 // pred_check
      _
    $region95: #{decoder_forward.4} parent=1 // pred_check_branch
      %133 = sbr.rel (0) target = $region97
    $region96: #{decoder_forward.4} parent=1 // pred_region
      %135 = dma.done [#allocation3], 16
    $region97: #{decoder_forward.4} parent=1 // pred_fallthru
      _
    // Predicated region
    $region98: #{decoder_forward.4} parent=1 // pred_check
      _
    $region99: #{decoder_forward.4} parent=1 // pred_check_branch
      %137 = sbr.rel (0) target = $region101
    $region100: #{decoder_forward.4} parent=1 // pred_region
      %139 = dma.done [#allocation5], 16
    $region101: #{decoder_forward.4} parent=1 // pred_fallthru
      _
    // Predicated region
    $region102: #{decoder_forward.4} parent=1 // pred_check
      _
    $region103: #{decoder_forward.4} parent=1 // pred_check_branch
      %141 = sbr.rel (0) target = $region105
    $region104: #{decoder_forward.4} parent=1 // pred_region
      %143 = dma.done [#allocation5], 16
    $region105: #{decoder_forward.4} parent=1 // pred_fallthru
      _
    // Predicated region
    $region106: #{decoder_forward.4} parent=1 // pred_check
      _
    $region107: #{decoder_forward.4} parent=1 // pred_check_branch
      %145 = sbr.rel (0) target = $region109
    $region108: #{decoder_forward.4} parent=1 // pred_region
      %147 = dma.done [#allocation8], 16
    $region109: #{decoder_forward.4} parent=1 // pred_fallthru
      _
    // Predicated region
    $region110: #{decoder_forward.4} parent=1 // pred_check
      _
    $region111: #{decoder_forward.4} parent=1 // pred_check_branch
      %149 = sbr.rel (0) target = $region113
    $region112: #{decoder_forward.4} parent=1 // pred_region
      %151 = dma.done [#allocation8], 16
    $region113: #{decoder_forward.4} parent=1 // pred_fallthru
      _
    // Predicated region
    $region114: #{decoder_forward.4} parent=1 // pred_check
      _
    $region115: #{decoder_forward.4} parent=1 // pred_check_branch
      %153 = sbr.rel (0) target = $region117
    $region116: #{decoder_forward.4} parent=1 // pred_region
      %155 = dma.done [#allocation11], 16
    $region117: #{decoder_forward.4} parent=1 // pred_fallthru
      _
    %v157 = vld [vmem:[%s0] sm:$0xff]
    %v158 = vld [vmem:[%s0 + $0x8] sm:$0xff]
    %v159 = vld [vmem:[%s1] sm:$0xff]
    %v160 = vld [vmem:[%s1 + $0x8] sm:$0xf]
    %v161 = vld [vmem:[%s1 + $0x10] sm:$0xff]
    %v162 = vld [vmem:[%s1 + $0x18] sm:$0xf]
    %v167 = vrot.slane %v159, 4
    %v168 = vrot.slane %v161, 4
    %v169 = vld [vmem:[%s2] sm:$0xff]
    %v170 = vld [vmem:[%s3] sm:$0xf]
    %v171 = vld [vmem:[%s3 + $0x4] sm:$0xf]
    %v172 = vld [vmem:[%s3 + $0x8] sm:$0xf]
    %v173 = vld [vmem:[%s3 + $0xc] sm:$0xf]
    %v174 = vld [vmem:[%s4] sm:$0x1]
    %v175 = vpack.c.bf16 %v158, %v157
    %v177 = vperm.slane %v174, 0
    %v183 = vunpack.c.l.b16 %v170
    %v184 = vunpack.c.l.b16 %v171
    %v185 = vunpack.c.l.b16 %v172
    %v186 = vunpack.c.l.b16 %v173
    %v187 = vpack.c.b16 %v184, %v183
    %v188 = vpack.c.b16 %v186, %v185
    %vm191 = vcmask 261120
    %v193 = vsel %vm191, %v175, 0
    %195 = vmatpush.bf16.msra.mxu0 0
    %196 = vmatpush.bf16.msra.mxu0 0
    %197 = vmatpush.bf16.msra.mxu0 0
    %198 = vmatpush.bf16.msra.mxu0 0
    %199 = vmatpush.bf16.msra.mxu0 0
    %200 = vmatpush.bf16.msra.mxu0 0
    %201 = vmatpush.bf16.msra.mxu0 %v188
    %202 = vmatpush.bf16.msra.mxu0 %v187
    %203 = vmatmul.bf16.gmra.mxu0 %v193
    %v204 = vpop.f32.mrf.mxu0
    %v205 = vadd.f32 %v177, %v204
    %v206 = vpop.f32.mrf.mxu0
    %v207 = vadd.f32 %v177, %v206
    %208 = vdwg.mxu0
    %v209 = vpack.c.bf16 %v205, %v205
    %v210 = vpack.c.bf16 %v207, %v207
    %v212 = vunpack.c.l.b16 %v209
    %v213 = vpack.c.b16 %v212, %v212
    %214 = vrot.lane.b32.xlu0 %v213, 96
    %v215 = vpop.permute.xlu0 %214
    %vm216 = vcmask 64512
    %v218 = vsel %vm216, %v209, 0
    %v221 = vsel %vm216, %v215, 0
    %223 = vmatpush.bf16.xpose.msra.mxu0 0
    %224 = vmatpush.bf16.xpose.msra.mxu0 0
    %225 = vmatpush.bf16.xpose.msra.mxu0 0
    %226 = vmatpush.bf16.xpose.msra.mxu0 0
    %227 = vmatpush.bf16.xpose.msra.mxu0 0
    %228 = vmatpush.bf16.xpose.msra.mxu0 0
    %229 = vmatpush.bf16.xpose.msra.mxu0 0
    %230 = vmatpush.bf16.xpose.msra.mxu0 %v221
    %231 = vmatmul.bf16.gmra.mxu0 %v218
    %v232 = vpop.f32.mrf.mxu0
    %v233 = vadd.f32 0.0, %v232
    %v234 = vpop.f32.mrf.mxu0
    %235 = vdwg.mxu0
    %v237 = vunpack.c.l.b16 %v210
    %v238 = vpack.c.b16 %v237, %v237
    %239 = vrot.lane.b32.xlu0 %v238, 96
    %v240 = vpop.permute.xlu0 %239
    %v242 = vsel %vm216, %v210, 0
    %v245 = vsel %vm216, %v240, 0
    %247 = vmatpush.bf16.xpose.msra.mxu0 0
    %248 = vmatpush.bf16.xpose.msra.mxu0 0
    %249 = vmatpush.bf16.xpose.msra.mxu0 0
    %250 = vmatpush.bf16.xpose.msra.mxu0 0
    %251 = vmatpush.bf16.xpose.msra.mxu0 0
    %252 = vmatpush.bf16.xpose.msra.mxu0 0
    %253 = vmatpush.bf16.xpose.msra.mxu0 0
    %254 = vmatpush.bf16.xpose.msra.mxu0 %v245
    %255 = vmatmul.bf16.gmra.mxu0 %v242
    %v256 = vpop.f32.mrf.mxu0
    %v257 = vadd.f32 0.0, %v256
    %v258 = vpop.f32.mrf.mxu0
    %259 = vdwg.mxu0
    %v260 = vmul.f32 %v233, 0.35355338
    %v261 = vmul.f32 %v257, 0.35355338
    %v262 = vadd.f32 %v260, %v169
    %v263 = vadd.f32 %v261, %v169
    %v264 = vsel %vm216, %v262, -inf
    %265 = vmax.xlane.f32.xlu0 %v264
    %v266 = vpop.xlane.xlu0 %265
    %v267 = vsel %vm216, %v263, -inf
    %268 = vmax.xlane.f32.xlu0 %v267
    %v269 = vpop.xlane.xlu0 %268
    %v270 = vsub.f32 %v262, %v266
    %v271 = vsub.f32 %v263, %v269
    %v272 = vmul.f32 %v270, 1.442695
    %v273 = vpow.pop %v272
    %v274 = vmul.f32 %v271, 1.442695
    %v275 = vpow.pop %v274
    %v276 = vsel %vm216, %v273, 0.0
    %277 = vadd.xlane.f32.xlu0 %v276
    %v278 = vpop.xlane.xlu0 %277
    %v279 = vsel %vm216, %v275, 0.0
    %280 = vadd.xlane.f32.xlu0 %v279
    %v281 = vpop.xlane.xlu0 %280
    %v282 = vpack.c.bf16 %v273, %v273
    %v283 = vpack.c.bf16 %v275, %v275
    %284 = vrot.lane.b32.xlu0 %v213, 64
    %v285 = vpop.permute.xlu0 %284
    %v287 = vsel %vm216, %v282, 0
    %vm289 = vcmask 1043456
    %v291 = vsel %vm289, %v285, 0
    %293 = vmatpush.bf16.msra.mxu0 0
    %294 = vmatpush.bf16.msra.mxu0 0
    %295 = vmatpush.bf16.msra.mxu0 0
    %296 = vmatpush.bf16.msra.mxu0 0
    %297 = vmatpush.bf16.msra.mxu0 0
    %298 = vmatpush.bf16.msra.mxu0 0
    %299 = vmatpush.bf16.msra.mxu0 0
    %300 = vmatpush.bf16.msra.mxu0 %v291
    %301 = vmatmul.bf16.gmra.mxu0 %v287
    %v302 = vpop.f32.mrf.mxu0
    %v303 = vadd.f32 0.0, %v302
    %v304 = vpop.f32.mrf.mxu0
    %305 = vdwg.mxu0
    %306 = vrot.lane.b32.xlu0 %v238, 64
    %v307 = vpop.permute.xlu0 %306
    %v309 = vsel %vm216, %v283, 0
    %v312 = vsel %vm289, %v307, 0
    %314 = vmatpush.bf16.msra.mxu0 0
    %315 = vmatpush.bf16.msra.mxu0 0
    %316 = vmatpush.bf16.msra.mxu0 0
    %317 = vmatpush.bf16.msra.mxu0 0
    %318 = vmatpush.bf16.msra.mxu0 0
    %319 = vmatpush.bf16.msra.mxu0 0
    %320 = vmatpush.bf16.msra.mxu0 0
    %321 = vmatpush.bf16.msra.mxu0 %v312
    %322 = vmatmul.bf16.gmra.mxu0 %v309
    %v323 = vpop.f32.mrf.mxu0
    %v324 = vadd.f32 0.0, %v323
    %v325 = vpop.f32.mrf.mxu0
    %326 = vdwg.mxu0
    %v327 = vrcp.pop %v278
    %v328 = vrcp.pop %v281
    %v329 = vmul.f32 %v303, %v327
    %v330 = vmul.f32 %v324, %v328
    %v331 = vld [vmem:[%s5] sm:$0xff]
    %v332 = vpack.c.bf16 %v331, %v331
    %v333 = vpack.c.bf16 %v330, %v329
    %334 = vrot.lane.b32.xlu0 %v213, 120
    %v335 = vpop.permute.xlu0 %334
    %336 = vrot.lane.b32.xlu0 %v213, 88
    %v337 = vpop.permute.xlu0 %336
    %v339 = vsel %vm216, %v335, 0
    %v342 = vsel %vm216, %v337, 0
    %344 = vmatpush.bf16.xpose.msra.mxu0 0
    %345 = vmatpush.bf16.xpose.msra.mxu0 0
    %346 = vmatpush.bf16.xpose.msra.mxu0 0
    %347 = vmatpush.bf16.xpose.msra.mxu0 0
    %348 = vmatpush.bf16.xpose.msra.mxu0 0
    %349 = vmatpush.bf16.xpose.msra.mxu0 0
    %350 = vmatpush.bf16.xpose.msra.mxu0 0
    %351 = vmatpush.bf16.xpose.msra.mxu0 %v342
    %352 = vmatmul.bf16.gmra.mxu0 %v339
    %v353 = vpop.f32.mrf.mxu0
    %v354 = vadd.f32 0.0, %v353
    %v355 = vpop.f32.mrf.mxu0
    %356 = vdwg.mxu0
    %357 = vrot.lane.b32.xlu0 %v238, 120
    %v358 = vpop.permute.xlu0 %357
    %359 = vrot.lane.b32.xlu0 %v238, 88
    %v360 = vpop.permute.xlu0 %359
    %v362 = vsel %vm216, %v358, 0
    %v365 = vsel %vm216, %v360, 0
    %367 = vmatpush.bf16.xpose.msra.mxu0 0
    %368 = vmatpush.bf16.xpose.msra.mxu0 0
    %369 = vmatpush.bf16.xpose.msra.mxu0 0
    %370 = vmatpush.bf16.xpose.msra.mxu0 0
    %371 = vmatpush.bf16.xpose.msra.mxu0 0
    %372 = vmatpush.bf16.xpose.msra.mxu0 0
    %373 = vmatpush.bf16.xpose.msra.mxu0 0
    %374 = vmatpush.bf16.xpose.msra.mxu0 %v365
    %375 = vmatmul.bf16.gmra.mxu0 %v362
    %v376 = vpop.f32.mrf.mxu0
    %v377 = vadd.f32 0.0, %v376
    %v378 = vpop.f32.mrf.mxu0
    %379 = vdwg.mxu0
    %v380 = vmul.f32 %v354, 0.35355338
    %v381 = vmul.f32 %v377, 0.35355338
    %v382 = vadd.f32 %v380, %v169
    %v383 = vadd.f32 %v381, %v169
    %v384 = vsel %vm216, %v382, -inf
    %385 = vmax.xlane.f32.xlu0 %v384
    %v386 = vpop.xlane.xlu0 %385
    %v387 = vsel %vm216, %v383, -inf
    %388 = vmax.xlane.f32.xlu0 %v387
    %v389 = vpop.xlane.xlu0 %388
    %v390 = vsub.f32 %v382, %v386
    %v391 = vsub.f32 %v383, %v389
    %v392 = vmul.f32 %v390, 1.442695
    %v393 = vpow.pop %v392
    %v394 = vmul.f32 %v391, 1.442695
    %v395 = vpow.pop %v394
    %v396 = vsel %vm216, %v393, 0.0
    %397 = vadd.xlane.f32.xlu0 %v396
    %v398 = vpop.xlane.xlu0 %397
    %v399 = vsel %vm216, %v395, 0.0
    %400 = vadd.xlane.f32.xlu0 %v399
    %v401 = vpop.xlane.xlu0 %400
    %v402 = vpack.c.bf16 %v393, %v393
    %v403 = vpack.c.bf16 %v395, %v395
    %404 = vrot.lane.b32.xlu0 %v213, 56
    %v405 = vpop.permute.xlu0 %404
    %v407 = vsel %vm216, %v402, 0
    %v410 = vsel %vm289, %v405, 0
    %412 = vmatpush.bf16.msra.mxu0 0
    %413 = vmatpush.bf16.msra.mxu0 0
    %414 = vmatpush.bf16.msra.mxu0 0
    %415 = vmatpush.bf16.msra.mxu0 0
    %416 = vmatpush.bf16.msra.mxu0 0
    %417 = vmatpush.bf16.msra.mxu0 0
    %418 = vmatpush.bf16.msra.mxu0 0
    %419 = vmatpush.bf16.msra.mxu0 %v410
    %420 = vmatmul.bf16.gmra.mxu0 %v407
    %v421 = vpop.f32.mrf.mxu0
    %v422 = vadd.f32 0.0, %v421
    %v423 = vpop.f32.mrf.mxu0
    %424 = vdwg.mxu0
    %425 = vrot.lane.b32.xlu0 %v238, 56
    %v426 = vpop.permute.xlu0 %425
    %v428 = vsel %vm216, %v403, 0
    %v431 = vsel %vm289, %v426, 0
    %433 = vmatpush.bf16.msra.mxu0 0
    %434 = vmatpush.bf16.msra.mxu0 0
    %435 = vmatpush.bf16.msra.mxu0 0
    %436 = vmatpush.bf16.msra.mxu0 0
    %437 = vmatpush.bf16.msra.mxu0 0
    %438 = vmatpush.bf16.msra.mxu0 0
    %439 = vmatpush.bf16.msra.mxu0 0
    %440 = vmatpush.bf16.msra.mxu0 %v431
    %441 = vmatmul.bf16.gmra.mxu0 %v428
    %v442 = vpop.f32.mrf.mxu0
    %v443 = vadd.f32 0.0, %v442
    %v444 = vpop.f32.mrf.mxu0
    %445 = vdwg.mxu0
    %v446 = vrcp.pop %v398
    %v447 = vrcp.pop %v401
    %v448 = vmul.f32 %v422, %v446
    %v449 = vmul.f32 %v443, %v447
    %v450 = vld [vmem:[%s5 + $0x8] sm:$0xff]
    %v451 = vpack.c.bf16 %v450, %v450
    %v452 = vpack.c.bf16 %v449, %v448
    %v454 = vsel %vm216, %v452, 0
    %v457 = vsel %vm289, %v451, 0
    %459 = vmatpush.bf16.msra.mxu0 0
    %460 = vmatpush.bf16.msra.mxu0 0
    %461 = vmatpush.bf16.msra.mxu0 0
    %462 = vmatpush.bf16.msra.mxu0 0
    %463 = vmatpush.bf16.msra.mxu0 0
    %464 = vmatpush.bf16.msra.mxu0 0
    %465 = vmatpush.bf16.msra.mxu0 0
    %466 = vmatpush.bf16.msra.mxu0 %v457
    %467 = vmatmul.bf16.gmra.mxu0 %v454
    %v468 = vpop.f32.mrf.mxu0
    %v469 = vadd.f32 0.0, %v468
    %v470 = vpop.f32.mrf.mxu0
    %v471 = vadd.f32 0.0, %v470
    %472 = vdwg.mxu0
    %v474 = vsel %vm216, %v333, 0
    %v477 = vsel %vm289, %v332, 0
    %479 = vmatpush.bf16.msra.mxu0 0
    %480 = vmatpush.bf16.msra.mxu0 0
    %481 = vmatpush.bf16.msra.mxu0 0
    %482 = vmatpush.bf16.msra.mxu0 0
    %483 = vmatpush.bf16.msra.mxu0 0
    %484 = vmatpush.bf16.msra.mxu0 0
    %485 = vmatpush.bf16.msra.mxu0 0
    %486 = vmatpush.bf16.msra.mxu0 %v477
    %487 = vmatmul.bf16.gmra.mxu0 %v474
    %v488 = vpop.f32.mrf.mxu0
    %v489 = vadd.f32 %v469, %v488
    %v490 = vpop.f32.mrf.mxu0
    %v491 = vadd.f32 %v471, %v490
    %492 = vdwg.mxu0
    %493 = vrot.lane.b32.xlu0 %v213, 112
    %v494 = vpop.permute.xlu0 %493
    %495 = vrot.lane.b32.xlu0 %v213, 80
    %v496 = vpop.permute.xlu0 %495
    %v498 = vsel %vm216, %v494, 0
    %v501 = vsel %vm216, %v496, 0
    %503 = vmatpush.bf16.xpose.msra.mxu0 0
    %504 = vmatpush.bf16.xpose.msra.mxu0 0
    %505 = vmatpush.bf16.xpose.msra.mxu0 0
    %506 = vmatpush.bf16.xpose.msra.mxu0 0
    %507 = vmatpush.bf16.xpose.msra.mxu0 0
    %508 = vmatpush.bf16.xpose.msra.mxu0 0
    %509 = vmatpush.bf16.xpose.msra.mxu0 0
    %510 = vmatpush.bf16.xpose.msra.mxu0 %v501
    %511 = vmatmul.bf16.gmra.mxu0 %v498
    %v512 = vpop.f32.mrf.mxu0
    %v513 = vadd.f32 0.0, %v512
    %v514 = vpop.f32.mrf.mxu0
    %515 = vdwg.mxu0
    %516 = vrot.lane.b32.xlu0 %v238, 112
    %v517 = vpop.permute.xlu0 %516
    %518 = vrot.lane.b32.xlu0 %v238, 80
    %v519 = vpop.permute.xlu0 %518
    %v521 = vsel %vm216, %v517, 0
    %v524 = vsel %vm216, %v519, 0
    %526 = vmatpush.bf16.xpose.msra.mxu0 0
    %527 = vmatpush.bf16.xpose.msra.mxu0 0
    %528 = vmatpush.bf16.xpose.msra.mxu0 0
    %529 = vmatpush.bf16.xpose.msra.mxu0 0
    %530 = vmatpush.bf16.xpose.msra.mxu0 0
    %531 = vmatpush.bf16.xpose.msra.mxu0 0
    %532 = vmatpush.bf16.xpose.msra.mxu0 0
    %533 = vmatpush.bf16.xpose.msra.mxu0 %v524
    %534 = vmatmul.bf16.gmra.mxu0 %v521
    %v535 = vpop.f32.mrf.mxu0
    %v536 = vadd.f32 0.0, %v535
    %v537 = vpop.f32.mrf.mxu0
    %538 = vdwg.mxu0
    %v539 = vmul.f32 %v513, 0.35355338
    %v540 = vmul.f32 %v536, 0.35355338
    %v541 = vadd.f32 %v539, %v169
    %v542 = vadd.f32 %v540, %v169
    %v543 = vsel %vm216, %v541, -inf
    %544 = vmax.xlane.f32.xlu0 %v543
    %v545 = vpop.xlane.xlu0 %544
    %v546 = vsel %vm216, %v542, -inf
    %547 = vmax.xlane.f32.xlu0 %v546
    %v548 = vpop.xlane.xlu0 %547
    %v549 = vsub.f32 %v541, %v545
    %v550 = vsub.f32 %v542, %v548
    %v551 = vmul.f32 %v549, 1.442695
    %v552 = vpow.pop %v551
    %v553 = vmul.f32 %v550, 1.442695
    %v554 = vpow.pop %v553
    %v555 = vsel %vm216, %v552, 0.0
    %556 = vadd.xlane.f32.xlu0 %v555
    %v557 = vpop.xlane.xlu0 %556
    %v558 = vsel %vm216, %v554, 0.0
    %559 = vadd.xlane.f32.xlu0 %v558
    %v560 = vpop.xlane.xlu0 %559
    %v561 = vpack.c.bf16 %v552, %v552
    %v562 = vpack.c.bf16 %v554, %v554
    %563 = vrot.lane.b32.xlu0 %v213, 48
    %v564 = vpop.permute.xlu0 %563
    %v566 = vsel %vm216, %v561, 0
    %v569 = vsel %vm289, %v564, 0
    %571 = vmatpush.bf16.msra.mxu0 0
    %572 = vmatpush.bf16.msra.mxu0 0
    %573 = vmatpush.bf16.msra.mxu0 0
    %574 = vmatpush.bf16.msra.mxu0 0
    %575 = vmatpush.bf16.msra.mxu0 0
    %576 = vmatpush.bf16.msra.mxu0 0
    %577 = vmatpush.bf16.msra.mxu0 0
    %578 = vmatpush.bf16.msra.mxu0 %v569
    %579 = vmatmul.bf16.gmra.mxu0 %v566
    %v580 = vpop.f32.mrf.mxu0
    %v581 = vadd.f32 0.0, %v580
    %v582 = vpop.f32.mrf.mxu0
    %583 = vdwg.mxu0
    %584 = vrot.lane.b32.xlu0 %v238, 48
    %v585 = vpop.permute.xlu0 %584
    %v587 = vsel %vm216, %v562, 0
    %v590 = vsel %vm289, %v585, 0
    %592 = vmatpush.bf16.msra.mxu0 0
    %593 = vmatpush.bf16.msra.mxu0 0
    %594 = vmatpush.bf16.msra.mxu0 0
    %595 = vmatpush.bf16.msra.mxu0 0
    %596 = vmatpush.bf16.msra.mxu0 0
    %597 = vmatpush.bf16.msra.mxu0 0
    %598 = vmatpush.bf16.msra.mxu0 0
    %599 = vmatpush.bf16.msra.mxu0 %v590
    %600 = vmatmul.bf16.gmra.mxu0 %v587
    %v601 = vpop.f32.mrf.mxu0
    %v602 = vadd.f32 0.0, %v601
    %v603 = vpop.f32.mrf.mxu0
    %604 = vdwg.mxu0
    %v605 = vrcp.pop %v557
    %v606 = vrcp.pop %v560
    %v607 = vmul.f32 %v581, %v605
    %v608 = vmul.f32 %v602, %v606
    %v609 = vld [vmem:[%s5 + $0x10] sm:$0xff]
    %v610 = vpack.c.bf16 %v609, %v609
    %v611 = vpack.c.bf16 %v608, %v607
    %v613 = vsel %vm216, %v611, 0
    %v616 = vsel %vm289, %v610, 0
    %618 = vmatpush.bf16.msra.mxu0 0
    %619 = vmatpush.bf16.msra.mxu0 0
    %620 = vmatpush.bf16.msra.mxu0 0
    %621 = vmatpush.bf16.msra.mxu0 0
    %622 = vmatpush.bf16.msra.mxu0 0
    %623 = vmatpush.bf16.msra.mxu0 0
    %624 = vmatpush.bf16.msra.mxu0 0
    %625 = vmatpush.bf16.msra.mxu0 %v616
    %626 = vmatmul.bf16.gmra.mxu0 %v613
    %v627 = vpop.f32.mrf.mxu0
    %v628 = vadd.f32 0.0, %v627
    %v629 = vpop.f32.mrf.mxu0
    %v630 = vadd.f32 0.0, %v629
    %631 = vdwg.mxu0
    %v632 = vadd.f32 %v489, %v628
    %v633 = vadd.f32 %v491, %v630
    %634 = vrot.lane.b32.xlu0 %v213, 104
    %v635 = vpop.permute.xlu0 %634
    %636 = vrot.lane.b32.xlu0 %v213, 72
    %v637 = vpop.permute.xlu0 %636
    %v639 = vsel %vm216, %v635, 0
    %v642 = vsel %vm216, %v637, 0
    %644 = vmatpush.bf16.xpose.msra.mxu0 0
    %645 = vmatpush.bf16.xpose.msra.mxu0 0
    %646 = vmatpush.bf16.xpose.msra.mxu0 0
    %647 = vmatpush.bf16.xpose.msra.mxu0 0
    %648 = vmatpush.bf16.xpose.msra.mxu0 0
    %649 = vmatpush.bf16.xpose.msra.mxu0 0
    %650 = vmatpush.bf16.xpose.msra.mxu0 0
    %651 = vmatpush.bf16.xpose.msra.mxu0 %v642
    %652 = vmatmul.bf16.gmra.mxu0 %v639
    %v653 = vpop.f32.mrf.mxu0
    %v654 = vadd.f32 0.0, %v653
    %v655 = vpop.f32.mrf.mxu0
    %656 = vdwg.mxu0
    %657 = vrot.lane.b32.xlu0 %v238, 104
    %v658 = vpop.permute.xlu0 %657
    %659 = vrot.lane.b32.xlu0 %v238, 72
    %v660 = vpop.permute.xlu0 %659
    %v662 = vsel %vm216, %v658, 0
    %v665 = vsel %vm216, %v660, 0
    %667 = vmatpush.bf16.xpose.msra.mxu0 0
    %668 = vmatpush.bf16.xpose.msra.mxu0 0
    %669 = vmatpush.bf16.xpose.msra.mxu0 0
    %670 = vmatpush.bf16.xpose.msra.mxu0 0
    %671 = vmatpush.bf16.xpose.msra.mxu0 0
    %672 = vmatpush.bf16.xpose.msra.mxu0 0
    %673 = vmatpush.bf16.xpose.msra.mxu0 0
    %674 = vmatpush.bf16.xpose.msra.mxu0 %v665
    %675 = vmatmul.bf16.gmra.mxu0 %v662
    %v676 = vpop.f32.mrf.mxu0
    %v677 = vadd.f32 0.0, %v676
    %v678 = vpop.f32.mrf.mxu0
    %679 = vdwg.mxu0
    %v680 = vmul.f32 %v654, 0.35355338
    %v681 = vmul.f32 %v677, 0.35355338
    %v682 = vadd.f32 %v680, %v169
    %v683 = vadd.f32 %v681, %v169
    %v684 = vsel %vm216, %v682, -inf
    %685 = vmax.xlane.f32.xlu0 %v684
    %v686 = vpop.xlane.xlu0 %685
    %v687 = vsel %vm216, %v683, -inf
    %688 = vmax.xlane.f32.xlu0 %v687
    %v689 = vpop.xlane.xlu0 %688
    %v690 = vsub.f32 %v682, %v686
    %v691 = vsub.f32 %v683, %v689
    %v692 = vmul.f32 %v690, 1.442695
    %v693 = vpow.pop %v692
    %v694 = vmul.f32 %v691, 1.442695
    %v695 = vpow.pop %v694
    %v696 = vsel %vm216, %v693, 0.0
    %697 = vadd.xlane.f32.xlu0 %v696
    %v698 = vpop.xlane.xlu0 %697
    %v699 = vsel %vm216, %v695, 0.0
    %700 = vadd.xlane.f32.xlu0 %v699
    %v701 = vpop.xlane.xlu0 %700
    %v702 = vpack.c.bf16 %v693, %v693
    %v703 = vpack.c.bf16 %v695, %v695
    %704 = vrot.lane.b32.xlu0 %v213, 40
    %v705 = vpop.permute.xlu0 %704
    %v707 = vsel %vm216, %v702, 0
    %v710 = vsel %vm289, %v705, 0
    %712 = vmatpush.bf16.msra.mxu0 0
    %713 = vmatpush.bf16.msra.mxu0 0
    %714 = vmatpush.bf16.msra.mxu0 0
    %715 = vmatpush.bf16.msra.mxu0 0
    %716 = vmatpush.bf16.msra.mxu0 0
    %717 = vmatpush.bf16.msra.mxu0 0
    %718 = vmatpush.bf16.msra.mxu0 0
    %719 = vmatpush.bf16.msra.mxu0 %v710
    %720 = vmatmul.bf16.gmra.mxu0 %v707
    %v721 = vpop.f32.mrf.mxu0
    %v722 = vadd.f32 0.0, %v721
    %v723 = vpop.f32.mrf.mxu0
    %724 = vdwg.mxu0
    %725 = vrot.lane.b32.xlu0 %v238, 40
    %v726 = vpop.permute.xlu0 %725
    %v728 = vsel %vm216, %v703, 0
    %v731 = vsel %vm289, %v726, 0
    %733 = vmatpush.bf16.msra.mxu0 0
    %734 = vmatpush.bf16.msra.mxu0 0
    %735 = vmatpush.bf16.msra.mxu0 0
    %736 = vmatpush.bf16.msra.mxu0 0
    %737 = vmatpush.bf16.msra.mxu0 0
    %738 = vmatpush.bf16.msra.mxu0 0
    %739 = vmatpush.bf16.msra.mxu0 0
    %740 = vmatpush.bf16.msra.mxu0 %v731
    %741 = vmatmul.bf16.gmra.mxu0 %v728
    %v742 = vpop.f32.mrf.mxu0
    %v743 = vadd.f32 0.0, %v742
    %v744 = vpop.f32.mrf.mxu0
    %745 = vdwg.mxu0
    %v746 = vrcp.pop %v698
    %v747 = vrcp.pop %v701
    %v748 = vmul.f32 %v722, %v746
    %v749 = vmul.f32 %v743, %v747
    %v750 = vld [vmem:[%s5 + $0x18] sm:$0xff]
    %v751 = vpack.c.bf16 %v750, %v750
    %v752 = vpack.c.bf16 %v749, %v748
    %v754 = vsel %vm216, %v752, 0
    %v757 = vsel %vm289, %v751, 0
    %759 = vmatpush.bf16.msra.mxu0 0
    %760 = vmatpush.bf16.msra.mxu0 0
    %761 = vmatpush.bf16.msra.mxu0 0
    %762 = vmatpush.bf16.msra.mxu0 0
    %763 = vmatpush.bf16.msra.mxu0 0
    %764 = vmatpush.bf16.msra.mxu0 0
    %765 = vmatpush.bf16.msra.mxu0 0
    %766 = vmatpush.bf16.msra.mxu0 %v757
    %767 = vmatmul.bf16.gmra.mxu0 %v754
    %v768 = vpop.f32.mrf.mxu0
    %v769 = vadd.f32 0.0, %v768
    %v770 = vpop.f32.mrf.mxu0
    %v771 = vadd.f32 0.0, %v770
    %772 = vdwg.mxu0
    %v773 = vadd.f32 %v632, %v769
    %v774 = vadd.f32 %v633, %v771
    %v775 = vld [vmem:[%s6] sm:$0x1]
    %v777 = vperm.slane %v775, 0
    %v779 = vadd.f32 %v773, %v777
    %v780 = vadd.f32 %v774, %v777
    %v781 = vadd.f32 %v157, %v779
    %v782 = vadd.f32 %v158, %v780
    %v783 = vld [vmem:[%s7] sm:$0x1]
    %v784 = vld [vmem:[%s8] sm:$0x1]
    %v785 = vsel %vm191, %v781, 0.0
    %786 = vadd.xlane.f32.xlu0 %v785
    %v787 = vpop.xlane.xlu0 %786
    %v788 = vsel %vm191, %v782, 0.0
    %789 = vadd.xlane.f32.xlu0 %v788
    %v790 = vpop.xlane.xlu0 %789
    %v791 = vrcp.pop 32.0
    %v792 = vmul.f32 32.0, %v791
    %v793 = vsub.f32 1.0, %v792
    %v794 = vmul.f32 %v791, %v793
    %v795 = vadd.f32 %v791, %v794
    %vm796 = vweird.f32 %v791
    %v797 = vsel %vm796, %v791, %v795
    %v798 = vmul.f32 %v787, %v797
    %v799 = vmul.f32 %v790, %v797
    %v800 = vsub.f32 %v781, %v798
    %v801 = vsub.f32 %v782, %v799
    %v802 = vmul.f32 %v800, %v800
    %v803 = vmul.f32 %v801, %v801
    %v804 = vsel %vm191, %v802, 0.0
    %805 = vadd.xlane.f32.xlu0 %v804
    %v806 = vpop.xlane.xlu0 %805
    %v807 = vsel %vm191, %v803, 0.0
    %808 = vadd.xlane.f32.xlu0 %v807
    %v809 = vpop.xlane.xlu0 %808
    %v810 = vmul.f32 %v806, %v797
    %v811 = vmul.f32 %v809, %v797
    %v812 = vadd.f32 %v810, 1e-05
    %v813 = vadd.f32 %v811, 1e-05
    %v814 = vrsqrt.pop %v812
    %v815 = vmul.f32 %v814, %v812
    %v816 = vmul.f32 %v815, %v814
    %v817 = vmul.f32 0.5, %v816
    %v818 = vsub.f32 1.5, %v817
    %v819 = vmul.f32 %v814, %v818
    %vm820 = vweird.f32 %v812
    %vm821 = vweird.f32 %v814
    %vm822 = vmor %vm820, %vm821
    %v823 = vsel %vm822, %v814, %v819
    %v824 = vrsqrt.pop %v813
    %v825 = vmul.f32 %v824, %v813
    %v826 = vmul.f32 %v825, %v824
    %v827 = vmul.f32 0.5, %v826
    %v828 = vsub.f32 1.5, %v827
    %v829 = vmul.f32 %v824, %v828
    %vm830 = vweird.f32 %v813
    %vm831 = vweird.f32 %v824
    %vm832 = vmor %vm830, %vm831
    %v833 = vsel %vm832, %v824, %v829
    %v834 = vmul.f32 %v800, %v823
    %v835 = vmul.f32 %v801, %v833
    %v837 = vperm.slane %v783, 0
    %v839 = vmul.f32 %v834, %v837
    %v840 = vmul.f32 %v835, %v837
    %v842 = vperm.slane %v784, 0
    %v844 = vadd.f32 %v839, %v842
    %v845 = vadd.f32 %v840, %v842
    %v846 = vld [vmem:[%s9] sm:$0xf]
    %v847 = vld [vmem:[%s9 + $0x4] sm:$0xf]
    %v848 = vld [vmem:[%s9 + $0x8] sm:$0xf]
    %v849 = vld [vmem:[%s9 + $0xc] sm:$0xf]
    %v850 = vld [vmem:[%s10] sm:$0x1]
    %v851 = vpack.c.bf16 %v845, %v844
    %v853 = vperm.slane %v850, 0
    %v859 = vunpack.c.l.b16 %v846
    %v860 = vunpack.c.l.b16 %v847
    %v861 = vunpack.c.l.b16 %v848
    %v862 = vunpack.c.l.b16 %v849
    %v863 = vpack.c.b16 %v860, %v859
    %v864 = vpack.c.b16 %v862, %v861
    %v868 = vsel %vm191, %v851, 0
    %870 = vmatpush.bf16.msra.mxu0 0
    %871 = vmatpush.bf16.msra.mxu0 0
    %872 = vmatpush.bf16.msra.mxu0 0
    %873 = vmatpush.bf16.msra.mxu0 0
    %874 = vmatpush.bf16.msra.mxu0 0
    %875 = vmatpush.bf16.msra.mxu0 0
    %876 = vmatpush.bf16.msra.mxu0 %v864
    %877 = vmatpush.bf16.msra.mxu0 %v863
    %878 = vmatmul.bf16.gmra.mxu0 %v868
    %v879 = vpop.f32.mrf.mxu0
    %v880 = vadd.f32 %v853, %v879
    %v881 = vpop.f32.mrf.mxu0
    %v882 = vadd.f32 %v853, %v881
    %883 = vdwg.mxu0
    %v884 = vld [vmem:[%s11] sm:$0xf]
    %v885 = vld [vmem:[%s11 + $0x4] sm:$0xf]
    %v886 = vld [vmem:[%s11 + $0x8] sm:$0xf]
    %v887 = vld [vmem:[%s11 + $0xc] sm:$0xf]
    %v888 = vld [vmem:[%s12] sm:$0x1]
    %889 = vst [vmem:[#allocation1] ss:$2 sm:$0xff] %v159
    %s890 = scalar_lea.vmem [#allocation1], 1
    %891 = vst [vmem:[%s890] ss:$2 sm:$0xff] %v167
    %s892 = scalar_lea.vmem [#allocation1], 16
    %893 = vst [vmem:[%s892] ss:$2 sm:$0xff] %v160
    %s894 = scalar_lea.vmem [#allocation1], 17
    %895 = vst [vmem:[%s894] ss:$2 sm:$0xff] %v161
    %s896 = scalar_lea.vmem [#allocation1], 32
    %897 = vst [vmem:[%s896] ss:$2 sm:$0xff] %v168
    %s898 = scalar_lea.vmem [#allocation1], 33
    %899 = vst [vmem:[%s898] ss:$2 sm:$0xff] %v162
    %v900 = vld.sshfl [vmem:[#allocation1] sm:$0xff pattern:$0x75316420]
    %v901 = vld.sshfl [vmem:[#allocation1 + $0x10] sm:$0xff pattern:$0x75316420]
    %v902 = vld.sshfl [vmem:[#allocation1 + $0x20] sm:$0xff pattern:$0x75316420]
    %v906 = vpack.c.bf16 %v901, %v900
    %v907 = vpack.c.bf16 %v902, %v902
    %v909 = vperm.slane %v888, 0
    %v915 = vunpack.c.l.b16 %v884
    %v916 = vunpack.c.l.b16 %v885
    %v917 = vunpack.c.l.b16 %v886
    %v918 = vunpack.c.l.b16 %v887
    %v919 = vpack.c.b16 %v916, %v915
    %v920 = vpack.c.b16 %v918, %v917
    %v924 = vsel %vm191, %v906, 0
    %v927 = vsel %vm191, %v907, 0
    %929 = vmatpush.bf16.msra.mxu0 0
    %930 = vmatpush.bf16.msra.mxu0 0
    %931 = vmatpush.bf16.msra.mxu0 0
    %932 = vmatpush.bf16.msra.mxu0 0
    %933 = vmatpush.bf16.msra.mxu0 0
    %934 = vmatpush.bf16.msra.mxu0 0
    %935 = vmatpush.bf16.msra.mxu0 %v920
    %936 = vmatpush.bf16.msra.mxu0 %v919
    %937 = vmatmul.bf16.gmra.mxu0 %v924
    %v938 = vpop.f32.mrf.mxu0
    %v939 = vadd.f32 %v909, %v938
    %v940 = vpop.f32.mrf.mxu0
    %v941 = vadd.f32 %v909, %v940
    %942 = vmatmul.bf16.gmra.mxu0 %v927
    %v943 = vpop.f32.mrf.mxu0
    %v944 = vadd.f32 %v909, %v943
    %v945 = vpop.f32.mrf.mxu0
    %946 = vdwg.mxu0
    %v947 = vpack.c.bf16 %v880, %v880
    %v948 = vpack.c.bf16 %v882, %v882
    %v952 = vrot.slane %v939, 4
    %v953 = vrot.slane %v941, 4
    %v954 = vrot.slane %v944, 4
    %955 = vst [vmem:[#allocation1] ss:$2 sm:$0xff] %v939
    %s956 = scalar_lea.vmem [#allocation1], 1
    %957 = vst [vmem:[%s956] ss:$2 sm:$0xff] %v952
    %s958 = scalar_lea.vmem [#allocation1], 16
    %959 = vst [vmem:[%s958] ss:$2 sm:$0xff] %v941
    %v960 = vld.sshfl [vmem:[#allocation1] sm:$0xff pattern:$0x75316420]
    %v961 = vld.sshfl [vmem:[#allocation1 + $0x10] sm:$0xff pattern:$0x75316420]
    %s962 = scalar_lea.vmem [#allocation1], 32
    %963 = vst [vmem:[%s962] ss:$2 sm:$0xff] %v953
    %s964 = scalar_lea.vmem [#allocation1], 33
    %965 = vst [vmem:[%s964] ss:$2 sm:$0xff] %v944
    %s966 = scalar_lea.vmem [#allocation1], 48
    %967 = vst [vmem:[%s966] ss:$2 sm:$0xff] %v954
    %v968 = vld.sshfl [vmem:[#allocation1 + $0x20] sm:$0xff pattern:$0x75316420]
    %v969 = vld.sshfl [vmem:[#allocation1 + $0x30] sm:$0xff pattern:$0x75316420]
    %v974 = vpack.c.bf16 %v960, %v960
    %v975 = vpack.c.bf16 %v961, %v961
    %v976 = vpack.c.bf16 %v968, %v968
    %v977 = vpack.c.bf16 %v969, %v969
    %978 = vst [vmem:[#allocation1] ss:$2 sm:$0xff] %v939
    %s979 = scalar_lea.vmem [#allocation1], 1
    %980 = vst [vmem:[%s979] ss:$2 sm:$0xff] %v952
    %s981 = scalar_lea.vmem [#allocation1], 16
    %982 = vst [vmem:[%s981] ss:$2 sm:$0xff] %v941
    %v983 = vld.sshfl [vmem:[#allocation1] sm:$0xff pattern:$0x75316420]
    %v984 = vld.sshfl [vmem:[#allocation1 + $0x10] sm:$0xff pattern:$0x75316420]
    %s985 = scalar_lea.vmem [#allocation1], 32
    %986 = vst [vmem:[%s985] ss:$2 sm:$0xff] %v953
    %s987 = scalar_lea.vmem [#allocation1], 33
    %988 = vst [vmem:[%s987] ss:$2 sm:$0xff] %v944
    %s989 = scalar_lea.vmem [#allocation1], 48
    %990 = vst [vmem:[%s989] ss:$2 sm:$0xff] %v954
    %v991 = vld.sshfl [vmem:[#allocation1 + $0x20] sm:$0xff pattern:$0x75316420]
    %v992 = vld.sshfl [vmem:[#allocation1 + $0x30] sm:$0xff pattern:$0x75316420]
    %v997 = vpack.c.bf16 %v983, %v983
    %v998 = vpack.c.bf16 %v984, %v984
    %v999 = vpack.c.bf16 %v991, %v991
    %v1000 = vpack.c.bf16 %v992, %v992
    %v1003 = vunpack.c.l.b16 %v974
    %v1004 = vunpack.c.l.b16 %v975
    %v1005 = vpack.c.b16 %v1004, %v1003
    %v1007 = vsel %vm216, %v947, 0
    %v1010 = vsel %vm216, %v1005, 0
    %1012 = vmatpush.bf16.xpose.msra.mxu0 0
    %1013 = vmatpush.bf16.xpose.msra.mxu0 0
    %1014 = vmatpush.bf16.xpose.msra.mxu0 0
    %1015 = vmatpush.bf16.xpose.msra.mxu0 0
    %1016 = vmatpush.bf16.xpose.msra.mxu0 0
    %1017 = vmatpush.bf16.xpose.msra.mxu0 0
    %1018 = vmatpush.bf16.xpose.msra.mxu0 0
    %1019 = vmatpush.bf16.xpose.msra.mxu0 %v1010
    %1020 = vmatmul.bf16.gmra.mxu0 %v1007
    %v1021 = vpop.f32.mrf.mxu0
    %v1022 = vadd.f32 0.0, %v1021
    %v1023 = vpop.f32.mrf.mxu0
    %1024 = vdwg.mxu0
    %v1027 = vunpack.c.l.b16 %v976
    %v1028 = vunpack.c.l.b16 %v977
    %v1029 = vpack.c.b16 %v1028, %v1027
    %v1031 = vsel %vm216, %v948, 0
    %v1034 = vsel %vm216, %v1029, 0
    %1036 = vmatpush.bf16.xpose.msra.mxu0 0
    %1037 = vmatpush.bf16.xpose.msra.mxu0 0
    %1038 = vmatpush.bf16.xpose.msra.mxu0 0
    %1039 = vmatpush.bf16.xpose.msra.mxu0 0
    %1040 = vmatpush.bf16.xpose.msra.mxu0 0
    %1041 = vmatpush.bf16.xpose.msra.mxu0 0
    %1042 = vmatpush.bf16.xpose.msra.mxu0 0
    %1043 = vmatpush.bf16.xpose.msra.mxu0 %v1034
    %1044 = vmatmul.bf16.gmra.mxu0 %v1031
    %v1045 = vpop.f32.mrf.mxu0
    %v1046 = vadd.f32 0.0, %v1045
    %v1047 = vpop.f32.mrf.mxu0
    %1048 = vdwg.mxu0
    %v1049 = vmul.f32 %v1022, 0.35355338
    %v1050 = vmul.f32 %v1046, 0.35355338
    %vm1051 = vcmask 97280
    %v1052 = vsel %vm1051, %v1049, -inf
    %1053 = vmax.xlane.f32.xlu0 %v1052
    %v1054 = vpop.xlane.xlu0 %1053
    %v1055 = vsel %vm1051, %v1050, -inf
    %1056 = vmax.xlane.f32.xlu0 %v1055
    %v1057 = vpop.xlane.xlu0 %1056
    %v1058 = vsub.f32 %v1049, %v1054
    %v1059 = vsub.f32 %v1050, %v1057
    %v1060 = vmul.f32 %v1058, 1.442695
    %v1061 = vpow.pop %v1060
    %v1062 = vmul.f32 %v1059, 1.442695
    %v1063 = vpow.pop %v1062
    %v1064 = vsel %vm1051, %v1061, 0.0
    %1065 = vadd.xlane.f32.xlu0 %v1064
    %v1066 = vpop.xlane.xlu0 %1065
    %v1067 = vsel %vm1051, %v1063, 0.0
    %1068 = vadd.xlane.f32.xlu0 %v1067
    %v1069 = vpop.xlane.xlu0 %1068
    %v1070 = vpack.c.bf16 %v1061, %v1061
    %v1071 = vpack.c.bf16 %v1063, %v1063
    %v1074 = vunpack.c.l.b16 %v997
    %v1075 = vunpack.c.l.b16 %v998
    %v1076 = vpack.c.b16 %v1075, %v1074
    %1077 = vrot.lane.b32.xlu0 %v1076, 96
    %v1078 = vpop.permute.xlu0 %1077
    %v1080 = vsel %vm1051, %v1070, 0
    %vm1082 = vcmask 1045504
    %v1084 = vsel %vm1082, %v1078, 0
    %1086 = vmatpush.bf16.msra.mxu0 0
    %1087 = vmatpush.bf16.msra.mxu0 0
    %1088 = vmatpush.bf16.msra.mxu0 0
    %1089 = vmatpush.bf16.msra.mxu0 0
    %1090 = vmatpush.bf16.msra.mxu0 0
    %1091 = vmatpush.bf16.msra.mxu0 0
    %1092 = vmatpush.bf16.msra.mxu0 0
    %1093 = vmatpush.bf16.msra.mxu0 %v1084
    %1094 = vmatmul.bf16.gmra.mxu0 %v1080
    %v1095 = vpop.f32.mrf.mxu0
    %v1096 = vadd.f32 0.0, %v1095
    %v1097 = vpop.f32.mrf.mxu0
    %1098 = vdwg.mxu0
    %v1101 = vunpack.c.l.b16 %v999
    %v1102 = vunpack.c.l.b16 %v1000
    %v1103 = vpack.c.b16 %v1102, %v1101
    %1104 = vrot.lane.b32.xlu0 %v1103, 96
    %v1105 = vpop.permute.xlu0 %1104
    %v1107 = vsel %vm1051, %v1071, 0
    %v1110 = vsel %vm1082, %v1105, 0
    %1112 = vmatpush.bf16.msra.mxu0 0
    %1113 = vmatpush.bf16.msra.mxu0 0
    %1114 = vmatpush.bf16.msra.mxu0 0
    %1115 = vmatpush.bf16.msra.mxu0 0
    %1116 = vmatpush.bf16.msra.mxu0 0
    %1117 = vmatpush.bf16.msra.mxu0 0
    %1118 = vmatpush.bf16.msra.mxu0 0
    %1119 = vmatpush.bf16.msra.mxu0 %v1110
    %1120 = vmatmul.bf16.gmra.mxu0 %v1107
    %v1121 = vpop.f32.mrf.mxu0
    %v1122 = vadd.f32 0.0, %v1121
    %v1123 = vpop.f32.mrf.mxu0
    %1124 = vdwg.mxu0
    %v1125 = vrcp.pop %v1066
    %v1126 = vrcp.pop %v1069
    %v1127 = vmul.f32 %v1096, %v1125
    %v1128 = vmul.f32 %v1122, %v1126
    %v1129 = vld [vmem:[%s13] sm:$0xff]
    %v1130 = vpack.c.bf16 %v1129, %v1129
    %v1131 = vpack.c.bf16 %v1128, %v1127
    %1132 = vst [vmem:[#allocation1] ss:$2 sm:$0xff] %v939
    %s1133 = scalar_lea.vmem [#allocation1], 1
    %1134 = vst [vmem:[%s1133] ss:$2 sm:$0xff] %v952
    %s1135 = scalar_lea.vmem [#allocation1], 16
    %1136 = vst [vmem:[%s1135] ss:$2 sm:$0xff] %v941
    %v1137 = vld.sshfl [vmem:[#allocation1] sm:$0xff pattern:$0x75316420]
    %v1138 = vld.sshfl [vmem:[#allocation1 + $0x10] sm:$0xff pattern:$0x75316420]
    %s1139 = scalar_lea.vmem [#allocation1], 32
    %1140 = vst [vmem:[%s1139] ss:$2 sm:$0xff] %v953
    %s1141 = scalar_lea.vmem [#allocation1], 33
    %1142 = vst [vmem:[%s1141] ss:$2 sm:$0xff] %v944
    %s1143 = scalar_lea.vmem [#allocation1], 48
    %1144 = vst [vmem:[%s1143] ss:$2 sm:$0xff] %v954
    %v1145 = vld.sshfl [vmem:[#allocation1 + $0x20] sm:$0xff pattern:$0x75316420]
    %v1146 = vld.sshfl [vmem:[#allocation1 + $0x30] sm:$0xff pattern:$0x75316420]
    %v1151 = vpack.c.bf16 %v1137, %v1137
    %v1152 = vpack.c.bf16 %v1138, %v1138
    %v1153 = vpack.c.bf16 %v1145, %v1145
    %v1154 = vpack.c.bf16 %v1146, %v1146
    %1155 = vst [vmem:[#allocation1] ss:$2 sm:$0xff] %v939
    %s1156 = scalar_lea.vmem [#allocation1], 1
    %1157 = vst [vmem:[%s1156] ss:$2 sm:$0xff] %v952
    %s1158 = scalar_lea.vmem [#allocation1], 16
    %1159 = vst [vmem:[%s1158] ss:$2 sm:$0xff] %v941
    %v1160 = vld.sshfl [vmem:[#allocation1] sm:$0xff pattern:$0x75316420]
    %v1161 = vld.sshfl [vmem:[#allocation1 + $0x10] sm:$0xff pattern:$0x75316420]
    %s1162 = scalar_lea.vmem [#allocation1], 32
    %1163 = vst [vmem:[%s1162] ss:$2 sm:$0xff] %v953
    %s1164 = scalar_lea.vmem [#allocation1], 33
    %1165 = vst [vmem:[%s1164] ss:$2 sm:$0xff] %v944
    %s1166 = scalar_lea.vmem [#allocation1], 48
    %1167 = vst [vmem:[%s1166] ss:$2 sm:$0xff] %v954
    %v1168 = vld.sshfl [vmem:[#allocation1 + $0x20] sm:$0xff pattern:$0x75316420]
    %v1169 = vld.sshfl [vmem:[#allocation1 + $0x30] sm:$0xff pattern:$0x75316420]
    %v1174 = vpack.c.bf16 %v1160, %v1160
    %v1175 = vpack.c.bf16 %v1161, %v1161
    %v1176 = vpack.c.bf16 %v1168, %v1168
    %v1177 = vpack.c.bf16 %v1169, %v1169
    %v1179 = vunpack.c.l.b16 %v947
    %v1180 = vpack.c.b16 %v1179, %v1179
    %1181 = vrot.lane.b32.xlu0 %v1180, 120
    %v1182 = vpop.permute.xlu0 %1181
    %v1185 = vunpack.c.l.b16 %v1151
    %v1186 = vunpack.c.l.b16 %v1152
    %v1187 = vpack.c.b16 %v1186, %v1185
    %1188 = vrot.lane.b32.xlu0 %v1187, 120
    %v1189 = vpop.permute.xlu0 %1188
    %v1191 = vsel %vm216, %v1182, 0
    %v1194 = vsel %vm216, %v1189, 0
    %1196 = vmatpush.bf16.xpose.msra.mxu0 0
    %1197 = vmatpush.bf16.xpose.msra.mxu0 0
    %1198 = vmatpush.bf16.xpose.msra.mxu0 0
    %1199 = vmatpush.bf16.xpose.msra.mxu0 0
    %1200 = vmatpush.bf16.xpose.msra.mxu0 0
    %1201 = vmatpush.bf16.xpose.msra.mxu0 0
    %1202 = vmatpush.bf16.xpose.msra.mxu0 0
    %1203 = vmatpush.bf16.xpose.msra.mxu0 %v1194
    %1204 = vmatmul.bf16.gmra.mxu0 %v1191
    %v1205 = vpop.f32.mrf.mxu0
    %v1206 = vadd.f32 0.0, %v1205
    %v1207 = vpop.f32.mrf.mxu0
    %1208 = vdwg.mxu0
    %v1210 = vunpack.c.l.b16 %v948
    %v1211 = vpack.c.b16 %v1210, %v1210
    %1212 = vrot.lane.b32.xlu0 %v1211, 120
    %v1213 = vpop.permute.xlu0 %1212
    %v1216 = vunpack.c.l.b16 %v1153
    %v1217 = vunpack.c.l.b16 %v1154
    %v1218 = vpack.c.b16 %v1217, %v1216
    %1219 = vrot.lane.b32.xlu0 %v1218, 120
    %v1220 = vpop.permute.xlu0 %1219
    %v1222 = vsel %vm216, %v1213, 0
    %v1225 = vsel %vm216, %v1220, 0
    %1227 = vmatpush.bf16.xpose.msra.mxu0 0
    %1228 = vmatpush.bf16.xpose.msra.mxu0 0
    %1229 = vmatpush.bf16.xpose.msra.mxu0 0
    %1230 = vmatpush.bf16.xpose.msra.mxu0 0
    %1231 = vmatpush.bf16.xpose.msra.mxu0 0
    %1232 = vmatpush.bf16.xpose.msra.mxu0 0
    %1233 = vmatpush.bf16.xpose.msra.mxu0 0
    %1234 = vmatpush.bf16.xpose.msra.mxu0 %v1225
    %1235 = vmatmul.bf16.gmra.mxu0 %v1222
    %v1236 = vpop.f32.mrf.mxu0
    %v1237 = vadd.f32 0.0, %v1236
    %v1238 = vpop.f32.mrf.mxu0
    %1239 = vdwg.mxu0
    %v1240 = vmul.f32 %v1206, 0.35355338
    %v1241 = vmul.f32 %v1237, 0.35355338
    %v1242 = vsel %vm1051, %v1240, -inf
    %1243 = vmax.xlane.f32.xlu0 %v1242
    %v1244 = vpop.xlane.xlu0 %1243
    %v1245 = vsel %vm1051, %v1241, -inf
    %1246 = vmax.xlane.f32.xlu0 %v1245
    %v1247 = vpop.xlane.xlu0 %1246
    %v1248 = vsub.f32 %v1240, %v1244
    %v1249 = vsub.f32 %v1241, %v1247
    %v1250 = vmul.f32 %v1248, 1.442695
    %v1251 = vpow.pop %v1250
    %v1252 = vmul.f32 %v1249, 1.442695
    %v1253 = vpow.pop %v1252
    %v1254 = vsel %vm1051, %v1251, 0.0
    %1255 = vadd.xlane.f32.xlu0 %v1254
    %v1256 = vpop.xlane.xlu0 %1255
    %v1257 = vsel %vm1051, %v1253, 0.0
    %1258 = vadd.xlane.f32.xlu0 %v1257
    %v1259 = vpop.xlane.xlu0 %1258
    %v1260 = vpack.c.bf16 %v1251, %v1251
    %v1261 = vpack.c.bf16 %v1253, %v1253
    %v1264 = vunpack.c.l.b16 %v1174
    %v1265 = vunpack.c.l.b16 %v1175
    %v1266 = vpack.c.b16 %v1265, %v1264
    %1267 = vrot.lane.b32.xlu0 %v1266, 88
    %v1268 = vpop.permute.xlu0 %1267
    %v1270 = vsel %vm1051, %v1260, 0
    %v1273 = vsel %vm1082, %v1268, 0
    %1275 = vmatpush.bf16.msra.mxu0 0
    %1276 = vmatpush.bf16.msra.mxu0 0
    %1277 = vmatpush.bf16.msra.mxu0 0
    %1278 = vmatpush.bf16.msra.mxu0 0
    %1279 = vmatpush.bf16.msra.mxu0 0
    %1280 = vmatpush.bf16.msra.mxu0 0
    %1281 = vmatpush.bf16.msra.mxu0 0
    %1282 = vmatpush.bf16.msra.mxu0 %v1273
    %1283 = vmatmul.bf16.gmra.mxu0 %v1270
    %v1284 = vpop.f32.mrf.mxu0
    %v1285 = vadd.f32 0.0, %v1284
    %v1286 = vpop.f32.mrf.mxu0
    %1287 = vdwg.mxu0
    %v1290 = vunpack.c.l.b16 %v1176
    %v1291 = vunpack.c.l.b16 %v1177
    %v1292 = vpack.c.b16 %v1291, %v1290
    %1293 = vrot.lane.b32.xlu0 %v1292, 88
    %v1294 = vpop.permute.xlu0 %1293
    %v1296 = vsel %vm1051, %v1261, 0
    %v1299 = vsel %vm1082, %v1294, 0
    %1301 = vmatpush.bf16.msra.mxu0 0
    %1302 = vmatpush.bf16.msra.mxu0 0
    %1303 = vmatpush.bf16.msra.mxu0 0
    %1304 = vmatpush.bf16.msra.mxu0 0
    %1305 = vmatpush.bf16.msra.mxu0 0
    %1306 = vmatpush.bf16.msra.mxu0 0
    %1307 = vmatpush.bf16.msra.mxu0 0
    %1308 = vmatpush.bf16.msra.mxu0 %v1299
    %1309 = vmatmul.bf16.gmra.mxu0 %v1296
    %v1310 = vpop.f32.mrf.mxu0
    %v1311 = vadd.f32 0.0, %v1310
    %v1312 = vpop.f32.mrf.mxu0
    %1313 = vdwg.mxu0
    %v1314 = vrcp.pop %v1256
    %v1315 = vrcp.pop %v1259
    %v1316 = vmul.f32 %v1285, %v1314
    %v1317 = vmul.f32 %v1311, %v1315
    %v1318 = vld [vmem:[%s13 + $0x8] sm:$0xff]
    %v1319 = vpack.c.bf16 %v1318, %v1318
    %v1320 = vpack.c.bf16 %v1317, %v1316
    %v1322 = vsel %vm216, %v1320, 0
    %v1325 = vsel %vm289, %v1319, 0
    %1327 = vmatpush.bf16.msra.mxu0 0
    %1328 = vmatpush.bf16.msra.mxu0 0
    %1329 = vmatpush.bf16.msra.mxu0 0
    %1330 = vmatpush.bf16.msra.mxu0 0
    %1331 = vmatpush.bf16.msra.mxu0 0
    %1332 = vmatpush.bf16.msra.mxu0 0
    %1333 = vmatpush.bf16.msra.mxu0 0
    %1334 = vmatpush.bf16.msra.mxu0 %v1325
    %1335 = vmatmul.bf16.gmra.mxu0 %v1322
    %v1336 = vpop.f32.mrf.mxu0
    %v1337 = vadd.f32 0.0, %v1336
    %v1338 = vpop.f32.mrf.mxu0
    %v1339 = vadd.f32 0.0, %v1338
    %1340 = vdwg.mxu0
    %v1342 = vsel %vm216, %v1131, 0
    %v1345 = vsel %vm289, %v1130, 0
    %1347 = vmatpush.bf16.msra.mxu0 0
    %1348 = vmatpush.bf16.msra.mxu0 0
    %1349 = vmatpush.bf16.msra.mxu0 0
    %1350 = vmatpush.bf16.msra.mxu0 0
    %1351 = vmatpush.bf16.msra.mxu0 0
    %1352 = vmatpush.bf16.msra.mxu0 0
    %1353 = vmatpush.bf16.msra.mxu0 0
    %1354 = vmatpush.bf16.msra.mxu0 %v1345
    %1355 = vmatmul.bf16.gmra.mxu0 %v1342
    %v1356 = vpop.f32.mrf.mxu0
    %v1357 = vadd.f32 %v1337, %v1356
    %v1358 = vpop.f32.mrf.mxu0
    %v1359 = vadd.f32 %v1339, %v1358
    %1360 = vdwg.mxu0
    %1361 = vst [vmem:[#allocation1] ss:$2 sm:$0xff] %v939
    %s1362 = scalar_lea.vmem [#allocation1], 1
    %1363 = vst [vmem:[%s1362] ss:$2 sm:$0xff] %v952
    %s1364 = scalar_lea.vmem [#allocation1], 16
    %1365 = vst [vmem:[%s1364] ss:$2 sm:$0xff] %v941
    %v1366 = vld.sshfl [vmem:[#allocation1] sm:$0xff pattern:$0x75316420]
    %v1367 = vld.sshfl [vmem:[#allocation1 + $0x10] sm:$0xff pattern:$0x75316420]
    %s1368 = scalar_lea.vmem [#allocation1], 32
    %1369 = vst [vmem:[%s1368] ss:$2 sm:$0xff] %v953
    %s1370 = scalar_lea.vmem [#allocation1], 33
    %1371 = vst [vmem:[%s1370] ss:$2 sm:$0xff] %v944
    %s1372 = scalar_lea.vmem [#allocation1], 48
    %1373 = vst [vmem:[%s1372] ss:$2 sm:$0xff] %v954
    %v1374 = vld.sshfl [vmem:[#allocation1 + $0x20] sm:$0xff pattern:$0x75316420]
    %v1375 = vld.sshfl [vmem:[#allocation1 + $0x30] sm:$0xff pattern:$0x75316420]
    %v1380 = vpack.c.bf16 %v1366, %v1366
    %v1381 = vpack.c.bf16 %v1367, %v1367
    %v1382 = vpack.c.bf16 %v1374, %v1374
    %v1383 = vpack.c.bf16 %v1375, %v1375
    %1384 = vst [vmem:[#allocation1] ss:$2 sm:$0xff] %v939
    %s1385 = scalar_lea.vmem [#allocation1], 1
    %1386 = vst [vmem:[%s1385] ss:$2 sm:$0xff] %v952
    %s1387 = scalar_lea.vmem [#allocation1], 16
    %1388 = vst [vmem:[%s1387] ss:$2 sm:$0xff] %v941
    %v1389 = vld.sshfl [vmem:[#allocation1] sm:$0xff pattern:$0x75316420]
    %v1390 = vld.sshfl [vmem:[#allocation1 + $0x10] sm:$0xff pattern:$0x75316420]
    %s1391 = scalar_lea.vmem [#allocation1], 32
    %1392 = vst [vmem:[%s1391] ss:$2 sm:$0xff] %v953
    %s1393 = scalar_lea.vmem [#allocation1], 33
    %1394 = vst [vmem:[%s1393] ss:$2 sm:$0xff] %v944
    %s1395 = scalar_lea.vmem [#allocation1], 48
    %1396 = vst [vmem:[%s1395] ss:$2 sm:$0xff] %v954
    %v1397 = vld.sshfl [vmem:[#allocation1 + $0x20] sm:$0xff pattern:$0x75316420]
    %v1398 = vld.sshfl [vmem:[#allocation1 + $0x30] sm:$0xff pattern:$0x75316420]
    %v1403 = vpack.c.bf16 %v1389, %v1389
    %v1404 = vpack.c.bf16 %v1390, %v1390
    %v1405 = vpack.c.bf16 %v1397, %v1397
    %v1406 = vpack.c.bf16 %v1398, %v1398
    %1407 = vrot.lane.b32.xlu0 %v1180, 112
    %v1408 = vpop.permute.xlu0 %1407
    %v1411 = vunpack.c.l.b16 %v1380
    %v1412 = vunpack.c.l.b16 %v1381
    %v1413 = vpack.c.b16 %v1412, %v1411
    %1414 = vrot.lane.b32.xlu0 %v1413, 112
    %v1415 = vpop.permute.xlu0 %1414
    %v1417 = vsel %vm216, %v1408, 0
    %v1420 = vsel %vm216, %v1415, 0
    %1422 = vmatpush.bf16.xpose.msra.mxu0 0
    %1423 = vmatpush.bf16.xpose.msra.mxu0 0
    %1424 = vmatpush.bf16.xpose.msra.mxu0 0
    %1425 = vmatpush.bf16.xpose.msra.mxu0 0
    %1426 = vmatpush.bf16.xpose.msra.mxu0 0
    %1427 = vmatpush.bf16.xpose.msra.mxu0 0
    %1428 = vmatpush.bf16.xpose.msra.mxu0 0
    %1429 = vmatpush.bf16.xpose.msra.mxu0 %v1420
    %1430 = vmatmul.bf16.gmra.mxu0 %v1417
    %v1431 = vpop.f32.mrf.mxu0
    %v1432 = vadd.f32 0.0, %v1431
    %v1433 = vpop.f32.mrf.mxu0
    %1434 = vdwg.mxu0
    %1435 = vrot.lane.b32.xlu0 %v1211, 112
    %v1436 = vpop.permute.xlu0 %1435
    %v1439 = vunpack.c.l.b16 %v1382
    %v1440 = vunpack.c.l.b16 %v1383
    %v1441 = vpack.c.b16 %v1440, %v1439
    %1442 = vrot.lane.b32.xlu0 %v1441, 112
    %v1443 = vpop.permute.xlu0 %1442
    %v1445 = vsel %vm216, %v1436, 0
    %v1448 = vsel %vm216, %v1443, 0
    %1450 = vmatpush.bf16.xpose.msra.mxu0 0
    %1451 = vmatpush.bf16.xpose.msra.mxu0 0
    %1452 = vmatpush.bf16.xpose.msra.mxu0 0
    %1453 = vmatpush.bf16.xpose.msra.mxu0 0
    %1454 = vmatpush.bf16.xpose.msra.mxu0 0
    %1455 = vmatpush.bf16.xpose.msra.mxu0 0
    %1456 = vmatpush.bf16.xpose.msra.mxu0 0
    %1457 = vmatpush.bf16.xpose.msra.mxu0 %v1448
    %1458 = vmatmul.bf16.gmra.mxu0 %v1445
    %v1459 = vpop.f32.mrf.mxu0
    %v1460 = vadd.f32 0.0, %v1459
    %v1461 = vpop.f32.mrf.mxu0
    %1462 = vdwg.mxu0
    %v1463 = vmul.f32 %v1432, 0.35355338
    %v1464 = vmul.f32 %v1460, 0.35355338
    %v1465 = vsel %vm1051, %v1463, -inf
    %1466 = vmax.xlane.f32.xlu0 %v1465
    %v1467 = vpop.xlane.xlu0 %1466
    %v1468 = vsel %vm1051, %v1464, -inf
    %1469 = vmax.xlane.f32.xlu0 %v1468
    %v1470 = vpop.xlane.xlu0 %1469
    %v1471 = vsub.f32 %v1463, %v1467
    %v1472 = vsub.f32 %v1464, %v1470
    %v1473 = vmul.f32 %v1471, 1.442695
    %v1474 = vpow.pop %v1473
    %v1475 = vmul.f32 %v1472, 1.442695
    %v1476 = vpow.pop %v1475
    %v1477 = vsel %vm1051, %v1474, 0.0
    %1478 = vadd.xlane.f32.xlu0 %v1477
    %v1479 = vpop.xlane.xlu0 %1478
    %v1480 = vsel %vm1051, %v1476, 0.0
    %1481 = vadd.xlane.f32.xlu0 %v1480
    %v1482 = vpop.xlane.xlu0 %1481
    %v1483 = vpack.c.bf16 %v1474, %v1474
    %v1484 = vpack.c.bf16 %v1476, %v1476
    %v1487 = vunpack.c.l.b16 %v1403
    %v1488 = vunpack.c.l.b16 %v1404
    %v1489 = vpack.c.b16 %v1488, %v1487
    %1490 = vrot.lane.b32.xlu0 %v1489, 80
    %v1491 = vpop.permute.xlu0 %1490
    %v1493 = vsel %vm1051, %v1483, 0
    %v1496 = vsel %vm1082, %v1491, 0
    %1498 = vmatpush.bf16.msra.mxu0 0
    %1499 = vmatpush.bf16.msra.mxu0 0
    %1500 = vmatpush.bf16.msra.mxu0 0
    %1501 = vmatpush.bf16.msra.mxu0 0
    %1502 = vmatpush.bf16.msra.mxu0 0
    %1503 = vmatpush.bf16.msra.mxu0 0
    %1504 = vmatpush.bf16.msra.mxu0 0
    %1505 = vmatpush.bf16.msra.mxu0 %v1496
    %1506 = vmatmul.bf16.gmra.mxu0 %v1493
    %v1507 = vpop.f32.mrf.mxu0
    %v1508 = vadd.f32 0.0, %v1507
    %v1509 = vpop.f32.mrf.mxu0
    %1510 = vdwg.mxu0
    %v1513 = vunpack.c.l.b16 %v1405
    %v1514 = vunpack.c.l.b16 %v1406
    %v1515 = vpack.c.b16 %v1514, %v1513
    %1516 = vrot.lane.b32.xlu0 %v1515, 80
    %v1517 = vpop.permute.xlu0 %1516
    %v1519 = vsel %vm1051, %v1484, 0
    %v1522 = vsel %vm1082, %v1517, 0
    %1524 = vmatpush.bf16.msra.mxu0 0
    %1525 = vmatpush.bf16.msra.mxu0 0
    %1526 = vmatpush.bf16.msra.mxu0 0
    %1527 = vmatpush.bf16.msra.mxu0 0
    %1528 = vmatpush.bf16.msra.mxu0 0
    %1529 = vmatpush.bf16.msra.mxu0 0
    %1530 = vmatpush.bf16.msra.mxu0 0
    %1531 = vmatpush.bf16.msra.mxu0 %v1522
    %1532 = vmatmul.bf16.gmra.mxu0 %v1519
    %v1533 = vpop.f32.mrf.mxu0
    %v1534 = vadd.f32 0.0, %v1533
    %v1535 = vpop.f32.mrf.mxu0
    %1536 = vdwg.mxu0
    %v1537 = vrcp.pop %v1479
    %v1538 = vrcp.pop %v1482
    %v1539 = vmul.f32 %v1508, %v1537
    %v1540 = vmul.f32 %v1534, %v1538
    %v1541 = vld [vmem:[%s13 + $0x10] sm:$0xff]
    %v1542 = vpack.c.bf16 %v1541, %v1541
    %v1543 = vpack.c.bf16 %v1540, %v1539
    %v1545 = vsel %vm216, %v1543, 0
    %v1548 = vsel %vm289, %v1542, 0
    %1550 = vmatpush.bf16.msra.mxu0 0
    %1551 = vmatpush.bf16.msra.mxu0 0
    %1552 = vmatpush.bf16.msra.mxu0 0
    %1553 = vmatpush.bf16.msra.mxu0 0
    %1554 = vmatpush.bf16.msra.mxu0 0
    %1555 = vmatpush.bf16.msra.mxu0 0
    %1556 = vmatpush.bf16.msra.mxu0 0
    %1557 = vmatpush.bf16.msra.mxu0 %v1548
    %1558 = vmatmul.bf16.gmra.mxu0 %v1545
    %v1559 = vpop.f32.mrf.mxu0
    %v1560 = vadd.f32 0.0, %v1559
    %v1561 = vpop.f32.mrf.mxu0
    %v1562 = vadd.f32 0.0, %v1561
    %1563 = vdwg.mxu0
    %v1564 = vadd.f32 %v1357, %v1560
    %v1565 = vadd.f32 %v1359, %v1562
    %1566 = vst [vmem:[#allocation1] ss:$2 sm:$0xff] %v939
    %s1567 = scalar_lea.vmem [#allocation1], 1
    %1568 = vst [vmem:[%s1567] ss:$2 sm:$0xff] %v952
    %s1569 = scalar_lea.vmem [#allocation1], 16
    %1570 = vst [vmem:[%s1569] ss:$2 sm:$0xff] %v941
    %v1571 = vld.sshfl [vmem:[#allocation1] sm:$0xff pattern:$0x75316420]
    %v1572 = vld.sshfl [vmem:[#allocation1 + $0x10] sm:$0xff pattern:$0x75316420]
    %s1573 = scalar_lea.vmem [#allocation1], 32
    %1574 = vst [vmem:[%s1573] ss:$2 sm:$0xff] %v953
    %s1575 = scalar_lea.vmem [#allocation1], 33
    %1576 = vst [vmem:[%s1575] ss:$2 sm:$0xff] %v944
    %s1577 = scalar_lea.vmem [#allocation1], 48
    %1578 = vst [vmem:[%s1577] ss:$2 sm:$0xff] %v954
    %v1579 = vld.sshfl [vmem:[#allocation1 + $0x20] sm:$0xff pattern:$0x75316420]
    %v1580 = vld.sshfl [vmem:[#allocation1 + $0x30] sm:$0xff pattern:$0x75316420]
    %v1585 = vpack.c.bf16 %v1571, %v1571
    %v1586 = vpack.c.bf16 %v1572, %v1572
    %v1587 = vpack.c.bf16 %v1579, %v1579
    %v1588 = vpack.c.bf16 %v1580, %v1580
    %1589 = vst [vmem:[#allocation1] ss:$2 sm:$0xff] %v939
    %s1590 = scalar_lea.vmem [#allocation1], 1
    %1591 = vst [vmem:[%s1590] ss:$2 sm:$0xff] %v952
    %s1592 = scalar_lea.vmem [#allocation1], 16
    %1593 = vst [vmem:[%s1592] ss:$2 sm:$0xff] %v941
    %v1594 = vld.sshfl [vmem:[#allocation1] sm:$0xff pattern:$0x75316420]
    %v1595 = vld.sshfl [vmem:[#allocation1 + $0x10] sm:$0xff pattern:$0x75316420]
    %s1596 = scalar_lea.vmem [#allocation1], 32
    %1597 = vst [vmem:[%s1596] ss:$2 sm:$0xff] %v953
    %s1598 = scalar_lea.vmem [#allocation1], 33
    %1599 = vst [vmem:[%s1598] ss:$2 sm:$0xff] %v944
    %s1600 = scalar_lea.vmem [#allocation1], 48
    %1601 = vst [vmem:[%s1600] ss:$2 sm:$0xff] %v954
    %v1602 = vld.sshfl [vmem:[#allocation1 + $0x20] sm:$0xff pattern:$0x75316420]
    %v1603 = vld.sshfl [vmem:[#allocation1 + $0x30] sm:$0xff pattern:$0x75316420]
    %v1608 = vpack.c.bf16 %v1594, %v1594
    %v1609 = vpack.c.bf16 %v1595, %v1595
    %v1610 = vpack.c.bf16 %v1602, %v1602
    %v1611 = vpack.c.bf16 %v1603, %v1603
    %1612 = vrot.lane.b32.xlu0 %v1180, 104
    %v1613 = vpop.permute.xlu0 %1612
    %v1616 = vunpack.c.l.b16 %v1585
    %v1617 = vunpack.c.l.b16 %v1586
    %v1618 = vpack.c.b16 %v1617, %v1616
    %1619 = vrot.lane.b32.xlu0 %v1618, 104
    %v1620 = vpop.permute.xlu0 %1619
    %v1622 = vsel %vm216, %v1613, 0
    %v1625 = vsel %vm216, %v1620, 0
    %1627 = vmatpush.bf16.xpose.msra.mxu0 0
    %1628 = vmatpush.bf16.xpose.msra.mxu0 0
    %1629 = vmatpush.bf16.xpose.msra.mxu0 0
    %1630 = vmatpush.bf16.xpose.msra.mxu0 0
    %1631 = vmatpush.bf16.xpose.msra.mxu0 0
    %1632 = vmatpush.bf16.xpose.msra.mxu0 0
    %1633 = vmatpush.bf16.xpose.msra.mxu0 0
    %1634 = vmatpush.bf16.xpose.msra.mxu0 %v1625
    %1635 = vmatmul.bf16.gmra.mxu0 %v1622
    %v1636 = vpop.f32.mrf.mxu0
    %v1637 = vadd.f32 0.0, %v1636
    %v1638 = vpop.f32.mrf.mxu0
    %1639 = vdwg.mxu0
    %1640 = vrot.lane.b32.xlu0 %v1211, 104
    %v1641 = vpop.permute.xlu0 %1640
    %v1644 = vunpack.c.l.b16 %v1587
    %v1645 = vunpack.c.l.b16 %v1588
    %v1646 = vpack.c.b16 %v1645, %v1644
    %1647 = vrot.lane.b32.xlu0 %v1646, 104
    %v1648 = vpop.permute.xlu0 %1647
    %v1650 = vsel %vm216, %v1641, 0
    %v1653 = vsel %vm216, %v1648, 0
    %1655 = vmatpush.bf16.xpose.msra.mxu0 0
    %1656 = vmatpush.bf16.xpose.msra.mxu0 0
    %1657 = vmatpush.bf16.xpose.msra.mxu0 0
    %1658 = vmatpush.bf16.xpose.msra.mxu0 0
    %1659 = vmatpush.bf16.xpose.msra.mxu0 0
    %1660 = vmatpush.bf16.xpose.msra.mxu0 0
    %1661 = vmatpush.bf16.xpose.msra.mxu0 0
    %1662 = vmatpush.bf16.xpose.msra.mxu0 %v1653
    %1663 = vmatmul.bf16.gmra.mxu0 %v1650
    %v1664 = vpop.f32.mrf.mxu0
    %v1665 = vadd.f32 0.0, %v1664
    %v1666 = vpop.f32.mrf.mxu0
    %1667 = vdwg.mxu0
    %v1668 = vmul.f32 %v1637, 0.35355338
    %v1669 = vmul.f32 %v1665, 0.35355338
    %v1670 = vsel %vm1051, %v1668, -inf
    %1671 = vmax.xlane.f32.xlu0 %v1670
    %v1672 = vpop.xlane.xlu0 %1671
    %v1673 = vsel %vm1051, %v1669, -inf
    %1674 = vmax.xlane.f32.xlu0 %v1673
    %v1675 = vpop.xlane.xlu0 %1674
    %v1676 = vsub.f32 %v1668, %v1672
    %v1677 = vsub.f32 %v1669, %v1675
    %v1678 = vmul.f32 %v1676, 1.442695
    %v1679 = vpow.pop %v1678
    %v1680 = vmul.f32 %v1677, 1.442695
    %v1681 = vpow.pop %v1680
    %v1682 = vsel %vm1051, %v1679, 0.0
    %1683 = vadd.xlane.f32.xlu0 %v1682
    %v1684 = vpop.xlane.xlu0 %1683
    %v1685 = vsel %vm1051, %v1681, 0.0
    %1686 = vadd.xlane.f32.xlu0 %v1685
    %v1687 = vpop.xlane.xlu0 %1686
    %v1688 = vpack.c.bf16 %v1679, %v1679
    %v1689 = vpack.c.bf16 %v1681, %v1681
    %v1692 = vunpack.c.l.b16 %v1608
    %v1693 = vunpack.c.l.b16 %v1609
    %v1694 = vpack.c.b16 %v1693, %v1692
    %1695 = vrot.lane.b32.xlu0 %v1694, 72
    %v1696 = vpop.permute.xlu0 %1695
    %v1698 = vsel %vm1051, %v1688, 0
    %v1701 = vsel %vm1082, %v1696, 0
    %1703 = vmatpush.bf16.msra.mxu0 0
    %1704 = vmatpush.bf16.msra.mxu0 0
    %1705 = vmatpush.bf16.msra.mxu0 0
    %1706 = vmatpush.bf16.msra.mxu0 0
    %1707 = vmatpush.bf16.msra.mxu0 0
    %1708 = vmatpush.bf16.msra.mxu0 0
    %1709 = vmatpush.bf16.msra.mxu0 0
    %1710 = vmatpush.bf16.msra.mxu0 %v1701
    %1711 = vmatmul.bf16.gmra.mxu0 %v1698
    %v1712 = vpop.f32.mrf.mxu0
    %v1713 = vadd.f32 0.0, %v1712
    %v1714 = vpop.f32.mrf.mxu0
    %1715 = vdwg.mxu0
    %v1718 = vunpack.c.l.b16 %v1610
    %v1719 = vunpack.c.l.b16 %v1611
    %v1720 = vpack.c.b16 %v1719, %v1718
    %1721 = vrot.lane.b32.xlu0 %v1720, 72
    %v1722 = vpop.permute.xlu0 %1721
    %v1724 = vsel %vm1051, %v1689, 0
    %v1727 = vsel %vm1082, %v1722, 0
    %1729 = vmatpush.bf16.msra.mxu0 0
    %1730 = vmatpush.bf16.msra.mxu0 0
    %1731 = vmatpush.bf16.msra.mxu0 0
    %1732 = vmatpush.bf16.msra.mxu0 0
    %1733 = vmatpush.bf16.msra.mxu0 0
    %1734 = vmatpush.bf16.msra.mxu0 0
    %1735 = vmatpush.bf16.msra.mxu0 0
    %1736 = vmatpush.bf16.msra.mxu0 %v1727
    %1737 = vmatmul.bf16.gmra.mxu0 %v1724
    %v1738 = vpop.f32.mrf.mxu0
    %v1739 = vadd.f32 0.0, %v1738
    %v1740 = vpop.f32.mrf.mxu0
    %1741 = vdwg.mxu0
    %v1742 = vrcp.pop %v1684
    %v1743 = vrcp.pop %v1687
    %v1744 = vmul.f32 %v1713, %v1742
    %v1745 = vmul.f32 %v1739, %v1743
    %v1746 = vld [vmem:[%s13 + $0x18] sm:$0xff]
    %v1747 = vpack.c.bf16 %v1746, %v1746
    %v1748 = vpack.c.bf16 %v1745, %v1744
    %v1750 = vsel %vm216, %v1748, 0
    %v1753 = vsel %vm289, %v1747, 0
    %1755 = vmatpush.bf16.msra.mxu0 0
    %1756 = vmatpush.bf16.msra.mxu0 0
    %1757 = vmatpush.bf16.msra.mxu0 0
    %1758 = vmatpush.bf16.msra.mxu0 0
    %1759 = vmatpush.bf16.msra.mxu0 0
    %1760 = vmatpush.bf16.msra.mxu0 0
    %1761 = vmatpush.bf16.msra.mxu0 0
    %1762 = vmatpush.bf16.msra.mxu0 %v1753
    %1763 = vmatmul.bf16.gmra.mxu0 %v1750
    %v1764 = vpop.f32.mrf.mxu0
    %v1765 = vadd.f32 0.0, %v1764
    %v1766 = vpop.f32.mrf.mxu0
    %v1767 = vadd.f32 0.0, %v1766
    %1768 = vdwg.mxu0
    %v1769 = vadd.f32 %v1564, %v1765
    %v1770 = vadd.f32 %v1565, %v1767
    %v1771 = vld [vmem:[%s14] sm:$0x1]
    %v1773 = vperm.slane %v1771, 0
    %v1775 = vadd.f32 %v1769, %v1773
    %v1776 = vadd.f32 %v1770, %v1773
    %v1777 = vadd.f32 %v844, %v1775
    %v1778 = vadd.f32 %v845, %v1776
    %v1779 = vld [vmem:[#allocation2] sm:$0x1]
    %v1780 = vld [vmem:[#allocation4] sm:$0x1]
    %v1781 = vsel %vm191, %v1777, 0.0
    %1782 = vadd.xlane.f32.xlu0 %v1781
    %v1783 = vpop.xlane.xlu0 %1782
    %v1784 = vsel %vm191, %v1778, 0.0
    %1785 = vadd.xlane.f32.xlu0 %v1784
    %v1786 = vpop.xlane.xlu0 %1785
    %v1787 = vmul.f32 %v1783, %v797
    %v1788 = vmul.f32 %v1786, %v797
    %v1789 = vsub.f32 %v1777, %v1787
    %v1790 = vsub.f32 %v1778, %v1788
    %v1791 = vmul.f32 %v1789, %v1789
    %v1792 = vmul.f32 %v1790, %v1790
    %v1793 = vsel %vm191, %v1791, 0.0
    %1794 = vadd.xlane.f32.xlu0 %v1793
    %v1795 = vpop.xlane.xlu0 %1794
    %v1796 = vsel %vm191, %v1792, 0.0
    %1797 = vadd.xlane.f32.xlu0 %v1796
    %v1798 = vpop.xlane.xlu0 %1797
    %v1799 = vmul.f32 %v1795, %v797
    %v1800 = vmul.f32 %v1798, %v797
    %v1801 = vadd.f32 %v1799, 1e-05
    %v1802 = vadd.f32 %v1800, 1e-05
    %v1803 = vrsqrt.pop %v1801
    %v1804 = vmul.f32 %v1803, %v1801
    %v1805 = vmul.f32 %v1804, %v1803
    %v1806 = vmul.f32 0.5, %v1805
    %v1807 = vsub.f32 1.5, %v1806
    %v1808 = vmul.f32 %v1803, %v1807
    %vm1809 = vweird.f32 %v1801
    %vm1810 = vweird.f32 %v1803
    %vm1811 = vmor %vm1809, %vm1810
    %v1812 = vsel %vm1811, %v1803, %v1808
    %v1813 = vrsqrt.pop %v1802
    %v1814 = vmul.f32 %v1813, %v1802
    %v1815 = vmul.f32 %v1814, %v1813
    %v1816 = vmul.f32 0.5, %v1815
    %v1817 = vsub.f32 1.5, %v1816
    %v1818 = vmul.f32 %v1813, %v1817
    %vm1819 = vweird.f32 %v1802
    %vm1820 = vweird.f32 %v1813
    %vm1821 = vmor %vm1819, %vm1820
    %v1822 = vsel %vm1821, %v1813, %v1818
    %v1823 = vmul.f32 %v1789, %v1812
    %v1824 = vmul.f32 %v1790, %v1822
    %v1826 = vperm.slane %v1779, 0
    %v1828 = vmul.f32 %v1823, %v1826
    %v1829 = vmul.f32 %v1824, %v1826
    %v1831 = vperm.slane %v1780, 0
    %v1833 = vadd.f32 %v1828, %v1831
    %v1834 = vadd.f32 %v1829, %v1831
    %v1835 = vld [vmem:[%s17] sm:$0xf]
    %v1836 = vld [vmem:[%s17 + $0x4] sm:$0xf]
    %v1837 = vld [vmem:[%s17 + $0x8] sm:$0xf]
    %v1838 = vld [vmem:[%s17 + $0xc] sm:$0xf]
    %v1839 = vld [vmem:[#allocation6] sm:$0x1]
    %v1840 = vpack.c.bf16 %v1834, %v1833
    %v1842 = vperm.slane %v1839, 0
    %v1848 = vunpack.c.l.b16 %v1835
    %v1849 = vunpack.c.l.b16 %v1836
    %v1850 = vunpack.c.l.b16 %v1837
    %v1851 = vunpack.c.l.b16 %v1838
    %v1852 = vpack.c.b16 %v1849, %v1848
    %v1853 = vpack.c.b16 %v1851, %v1850
    %v1857 = vsel %vm191, %v1840, 0
    %1859 = vmatpush.bf16.msra.mxu0 0
    %1860 = vmatpush.bf16.msra.mxu0 0
    %1861 = vmatpush.bf16.msra.mxu0 0
    %1862 = vmatpush.bf16.msra.mxu0 0
    %1863 = vmatpush.bf16.msra.mxu0 0
    %1864 = vmatpush.bf16.msra.mxu0 0
    %1865 = vmatpush.bf16.msra.mxu0 %v1853
    %1866 = vmatpush.bf16.msra.mxu0 %v1852
    %1867 = vmatmul.bf16.gmra.mxu0 %v1857
    %v1868 = vpop.f32.mrf.mxu0
    %v1869 = vadd.f32 %v1842, %v1868
    %v1870 = vpop.f32.mrf.mxu0
    %v1871 = vadd.f32 %v1842, %v1870
    %1872 = vdwg.mxu0
    %v1873 = vmax.f32 %v1869, 0.0
    %v1874 = vmax.f32 %v1871, 0.0
    %v1875 = vld [vmem:[%s19] sm:$0xf]
    %v1876 = vld [vmem:[%s19 + $0x4] sm:$0xf]
    %v1877 = vld [vmem:[%s19 + $0x8] sm:$0xf]
    %v1878 = vld [vmem:[%s19 + $0xc] sm:$0xf]
    %v1879 = vld [vmem:[%s19 + $0x10] sm:$0xf]
    %v1880 = vld [vmem:[%s19 + $0x14] sm:$0xf]
    %v1881 = vld [vmem:[%s19 + $0x18] sm:$0xf]
    %v1882 = vld [vmem:[%s19 + $0x1c] sm:$0xf]
    %v1883 = vld [vmem:[#allocation7] sm:$0x1]
    %v1884 = vpack.c.bf16 %v1874, %v1873
    %v1886 = vperm.slane %v1883, 0
    %v1896 = vunpack.c.l.b16 %v1875
    %v1897 = vunpack.c.l.b16 %v1876
    %v1898 = vunpack.c.l.b16 %v1877
    %v1899 = vunpack.c.l.b16 %v1878
    %v1900 = vunpack.c.l.b16 %v1879
    %v1901 = vunpack.c.l.b16 %v1880
    %v1902 = vunpack.c.l.b16 %v1881
    %v1903 = vunpack.c.l.b16 %v1882
    %v1904 = vpack.c.b16 %v1897, %v1896
    %v1905 = vpack.c.b16 %v1899, %v1898
    %v1906 = vpack.c.b16 %v1901, %v1900
    %v1907 = vpack.c.b16 %v1903, %v1902
    %vm1912 = vcmask 523264
    %v1914 = vsel %vm1912, %v1884, 0
    %1916 = vmatpush.bf16.msra.mxu0 0
    %1917 = vmatpush.bf16.msra.mxu0 0
    %1918 = vmatpush.bf16.msra.mxu0 0
    %1919 = vmatpush.bf16.msra.mxu0 0
    %1920 = vmatpush.bf16.msra.mxu0 %v1907
    %1921 = vmatpush.bf16.msra.mxu0 %v1906
    %1922 = vmatpush.bf16.msra.mxu0 %v1905
    %1923 = vmatpush.bf16.msra.mxu0 %v1904
    %1924 = vmatmul.bf16.gmra.mxu0 %v1914
    %v1925 = vpop.f32.mrf.mxu0
    %v1926 = vadd.f32 %v1886, %v1925
    %v1927 = vpop.f32.mrf.mxu0
    %v1928 = vadd.f32 %v1886, %v1927
    %1929 = vdwg.mxu0
    %v1930 = vadd.f32 %v1833, %v1926
    %v1931 = vadd.f32 %v1834, %v1928
    %v1932 = vld [vmem:[#allocation9] sm:$0x1]
    %v1933 = vld [vmem:[#allocation10] sm:$0x1]
    %v1934 = vsel %vm191, %v1930, 0.0
    %1935 = vadd.xlane.f32.xlu0 %v1934
    %v1936 = vpop.xlane.xlu0 %1935
    %v1937 = vsel %vm191, %v1931, 0.0
    %1938 = vadd.xlane.f32.xlu0 %v1937
    %v1939 = vpop.xlane.xlu0 %1938
    %v1940 = vmul.f32 %v1936, %v797
    %v1941 = vmul.f32 %v1939, %v797
    %v1942 = vsub.f32 %v1930, %v1940
    %v1943 = vsub.f32 %v1931, %v1941
    %v1944 = vmul.f32 %v1942, %v1942
    %v1945 = vmul.f32 %v1943, %v1943
    %v1946 = vsel %vm191, %v1944, 0.0
    %1947 = vadd.xlane.f32.xlu0 %v1946
    %v1948 = vpop.xlane.xlu0 %1947
    %v1949 = vsel %vm191, %v1945, 0.0
    %1950 = vadd.xlane.f32.xlu0 %v1949
    %v1951 = vpop.xlane.xlu0 %1950
    %v1952 = vmul.f32 %v1948, %v797
    %v1953 = vmul.f32 %v1951, %v797
    %v1954 = vadd.f32 %v1952, 1e-05
    %v1955 = vadd.f32 %v1953, 1e-05
    %v1956 = vrsqrt.pop %v1954
    %v1957 = vmul.f32 %v1956, %v1954
    %v1958 = vmul.f32 %v1957, %v1956
    %v1959 = vmul.f32 0.5, %v1958
    %v1960 = vsub.f32 1.5, %v1959
    %v1961 = vmul.f32 %v1956, %v1960
    %vm1962 = vweird.f32 %v1954
    %vm1963 = vweird.f32 %v1956
    %vm1964 = vmor %vm1962, %vm1963
    %v1965 = vsel %vm1964, %v1956, %v1961
    %v1966 = vrsqrt.pop %v1955
    %v1967 = vmul.f32 %v1966, %v1955
    %v1968 = vmul.f32 %v1967, %v1966
    %v1969 = vmul.f32 0.5, %v1968
    %v1970 = vsub.f32 1.5, %v1969
    %v1971 = vmul.f32 %v1966, %v1970
    %vm1972 = vweird.f32 %v1955
    %vm1973 = vweird.f32 %v1966
    %vm1974 = vmor %vm1972, %vm1973
    %v1975 = vsel %vm1974, %v1966, %v1971
    %v1976 = vmul.f32 %v1942, %v1965
    %v1977 = vmul.f32 %v1943, %v1975
    %v1979 = vperm.slane %v1932, 0
    %v1981 = vmul.f32 %v1976, %v1979
    %v1982 = vmul.f32 %v1977, %v1979
    %v1984 = vperm.slane %v1933, 0
    %v1986 = vadd.f32 %v1981, %v1984
    %v1987 = vadd.f32 %v1982, %v1984
    %1988 = vst.msk [vmem:[%s23] sm:$0xff] %vm191, %v1986
    %1989 = vst.msk [vmem:[%s23 + $0x8] sm:$0xff] %vm191, %v1987
    // Predicated region
    $region118: #{decoder_forward.4} parent=1 // pred_check
      _
    $region119: #{decoder_forward.4} parent=1 // pred_check_branch
      %1991 = sbr.rel (0) target = $region121
    $region120: #{decoder_forward.4} parent=1 // pred_region
      _
    $region121: #{decoder_forward.4} parent=1 // pred_fallthru
      _
    // Predicated region
    $region122: #{decoder_forward.4} parent=1 // pred_check
      _
    $region123: #{decoder_forward.4} parent=1 // pred_check_branch
      %1993 = sbr.rel (0) target = $region125
    $region124: #{decoder_forward.4} parent=1 // pred_region
      _
    $region125: #{decoder_forward.4} parent=1 // pred_fallthru
      _
    %1994 = vsyncpa [#allocation3], 1
    %1995 = vsyncpa [#allocation5], 1
    %1996 = vsyncpa [#allocation8], 1
    %1997 = vsyncpa [#allocation11], 1

// kernel: decoder_forward.3
$region0: #{decoder_forward.3}
  #allocation0 [shape = 'u32[]', space=smem, size = 0x4, offset = 0x4, fixed_abs, tag = 'smem constant byte address 0x4 - core index']
  #allocation1 [shape = 'u32[72,128]{1,0:T(1,128)}', space=vmem, size = 0x9000, scoped, tag = 'internal scratch']
  %s0 = inlined_call_operand.vmem [shape: f32[2,8,32], index: 0, kind: input, shape index: {}]
  %s1 = inlined_call_operand.vmem [shape: f32[2,12,32], index: 1, kind: input, shape index: {}]
  %s2 = inlined_call_operand.vmem [shape: f32[8,8], index: 2, kind: input, shape index: {}]
  %s3 = inlined_call_operand.vmem [shape: bf16[32,96], index: 3, kind: input, shape index: {}]
  %s4 = inlined_call_operand.vmem [shape: f32[1,96], index: 4, kind: input, shape index: {}]
  %s5 = inlined_call_operand.vmem [shape: f32[32,32], index: 5, kind: input, shape index: {}]
  %s6 = inlined_call_operand.vmem [shape: f32[1,32], index: 6, kind: input, shape index: {}]
  %s7 = inlined_call_operand.vmem [shape: f32[1,32], index: 7, kind: input, shape index: {}]
  %s8 = inlined_call_operand.vmem [shape: f32[1,32], index: 8, kind: input, shape index: {}]
  %s9 = inlined_call_operand.vmem [shape: bf16[32,32], index: 9, kind: input, shape index: {}]
  %s10 = inlined_call_operand.vmem [shape: f32[1,32], index: 10, kind: input, shape index: {}]
  %s11 = inlined_call_operand.vmem [shape: bf16[32,64], index: 11, kind: input, shape index: {}]
  %s12 = inlined_call_operand.vmem [shape: f32[1,64], index: 12, kind: input, shape index: {}]
  %s13 = inlined_call_operand.vmem [shape: f32[32,32], index: 13, kind: input, shape index: {}]
  %s14 = inlined_call_operand.vmem [shape: f32[1,32], index: 14, kind: input, shape index: {}]
  %s15 = inlined_call_operand.vmem [shape: f32[1,32], index: 15, kind: input, shape index: {}]
  %s16 = inlined_call_operand.vmem [shape: f32[1,32], index: 16, kind: input, shape index: {}]
  %s17 = inlined_call_operand.vmem [shape: bf16[32,64], index: 17, kind: input, shape index: {}]
  %s18 = inlined_call_operand.vmem [shape: f32[1,64], index: 18, kind: input, shape index: {}]
  %s19 = inlined_call_operand.vmem [shape: bf16[64,32], index: 19, kind: input, shape index: {}]
  %s20 = inlined_call_operand.vmem [shape: f32[1,32], index: 20, kind: input, shape index: {}]
  %s21 = inlined_call_operand.vmem [shape: f32[1,32], index: 21, kind: input, shape index: {}]
  %s22 = inlined_call_operand.vmem [shape: f32[1,32], index: 22, kind: input, shape index: {}]
  %s23 = inlined_call_operand.vmem [shape: f32[2,8,32], index: 23, kind: output, shape index: {}]
  %s24 = sld [smem:[#allocation0]]
  $region102: #{decoder_forward.3} parent=0
    _
  %s26 = ssub.s32 1, %s24
  %s27 = scalar_select 0, %s26, %s24
  // Predicated region
  $region2: #{decoder_forward.3} parent=0 // pred_check
    _
  $region3: #{decoder_forward.3} parent=0 // pred_check_branch
    %29 = sbr.rel (0) target = $region5
  $region4: #{decoder_forward.3} parent=0 // pred_region
    _
  $region5: #{decoder_forward.3} parent=0 // pred_fallthru
    _
  // Predicated region
  $region6: #{decoder_forward.3} parent=0 // pred_check
    _
  $region7: #{decoder_forward.3} parent=0 // pred_check_branch
    %31 = sbr.rel (0) target = $region9
  $region8: #{decoder_forward.3} parent=0 // pred_region
    _
  $region9: #{decoder_forward.3} parent=0 // pred_fallthru
    _
  // Predicated region
  $region10: #{decoder_forward.3} parent=0 // pred_check
    _
  $region11: #{decoder_forward.3} parent=0 // pred_check_branch
    %33 = sbr.rel (0) target = $region13
  $region12: #{decoder_forward.3} parent=0 // pred_region
    _
  $region13: #{decoder_forward.3} parent=0 // pred_fallthru
    _
  // Predicated region
  $region14: #{decoder_forward.3} parent=0 // pred_check
    _
  $region15: #{decoder_forward.3} parent=0 // pred_check_branch
    %35 = sbr.rel (0) target = $region17
  $region16: #{decoder_forward.3} parent=0 // pred_region
    _
  $region17: #{decoder_forward.3} parent=0 // pred_fallthru
    _
  // Predicated region
  $region18: #{decoder_forward.3} parent=0 // pred_check
    _
  $region19: #{decoder_forward.3} parent=0 // pred_check_branch
    %37 = sbr.rel (0) target = $region21
  $region20: #{decoder_forward.3} parent=0 // pred_region
    _
  $region21: #{decoder_forward.3} parent=0 // pred_fallthru
    _
  // Predicated region
  $region22: #{decoder_forward.3} parent=0 // pred_check
    _
  $region23: #{decoder_forward.3} parent=0 // pred_check_branch
    %39 = sbr.rel (0) target = $region25
  $region24: #{decoder_forward.3} parent=0 // pred_region
    _
  $region25: #{decoder_forward.3} parent=0 // pred_fallthru
    _
  // Predicated region
  $region26: #{decoder_forward.3} parent=0 // pred_check
    _
  $region27: #{decoder_forward.3} parent=0 // pred_check_branch
    %41 = sbr.rel (0) target = $region29
  $region28: #{decoder_forward.3} parent=0 // pred_region
    _
  $region29: #{decoder_forward.3} parent=0 // pred_fallthru
    _
  // Predicated region
  $region30: #{decoder_forward.3} parent=0 // pred_check
    _
  $region31: #{decoder_forward.3} parent=0 // pred_check_branch
    %43 = sbr.rel (0) target = $region33
  $region32: #{decoder_forward.3} parent=0 // pred_region
    _
  $region33: #{decoder_forward.3} parent=0 // pred_fallthru
    _
  // Predicated region
  $region34: #{decoder_forward.3} parent=0 // pred_check
    _
  $region35: #{decoder_forward.3} parent=0 // pred_check_branch
    %45 = sbr.rel (0) target = $region37
  $region36: #{decoder_forward.3} parent=0 // pred_region
    _
  $region37: #{decoder_forward.3} parent=0 // pred_fallthru
    _
  // Predicated region
  $region38: #{decoder_forward.3} parent=0 // pred_check
    _
  $region39: #{decoder_forward.3} parent=0 // pred_check_branch
    %47 = sbr.rel (0) target = $region41
  $region40: #{decoder_forward.3} parent=0 // pred_region
    _
  $region41: #{decoder_forward.3} parent=0 // pred_fallthru
    _
  // Predicated region
  $region42: #{decoder_forward.3} parent=0 // pred_check
    _
  $region43: #{decoder_forward.3} parent=0 // pred_check_branch
    %49 = sbr.rel (0) target = $region45
  $region44: #{decoder_forward.3} parent=0 // pred_region
    _
  $region45: #{decoder_forward.3} parent=0 // pred_fallthru
    _
  // Predicated region
  $region46: #{decoder_forward.3} parent=0 // pred_check
    _
  $region47: #{decoder_forward.3} parent=0 // pred_check_branch
    %51 = sbr.rel (0) target = $region49
  $region48: #{decoder_forward.3} parent=0 // pred_region
    _
  $region49: #{decoder_forward.3} parent=0 // pred_fallthru
    _
  // Predicated region
  $region50: #{decoder_forward.3} parent=0 // pred_check
    _
  $region51: #{decoder_forward.3} parent=0 // pred_check_branch
    %53 = sbr.rel (0) target = $region53
  $region52: #{decoder_forward.3} parent=0 // pred_region
    _
  $region53: #{decoder_forward.3} parent=0 // pred_fallthru
    _
  // Predicated region
  $region54: #{decoder_forward.3} parent=0 // pred_check
    _
  $region55: #{decoder_forward.3} parent=0 // pred_check_branch
    %55 = sbr.rel (0) target = $region57
  $region56: #{decoder_forward.3} parent=0 // pred_region
    _
  $region57: #{decoder_forward.3} parent=0 // pred_fallthru
    _
  // Predicated region
  $region58: #{decoder_forward.3} parent=0 // pred_check
    _
  $region59: #{decoder_forward.3} parent=0 // pred_check_branch
    %57 = sbr.rel (0) target = $region61
  $region60: #{decoder_forward.3} parent=0 // pred_region
    _
  $region61: #{decoder_forward.3} parent=0 // pred_fallthru
    _
  // Predicated region
  $region62: #{decoder_forward.3} parent=0 // pred_check
    _
  $region63: #{decoder_forward.3} parent=0 // pred_check_branch
    %59 = sbr.rel (0) target = $region65
  $region64: #{decoder_forward.3} parent=0 // pred_region
    _
  $region65: #{decoder_forward.3} parent=0 // pred_fallthru
    _
  // Predicated region
  $region66: #{decoder_forward.3} parent=0 // pred_check
    _
  $region67: #{decoder_forward.3} parent=0 // pred_check_branch
    %61 = sbr.rel (0) target = $region69
  $region68: #{decoder_forward.3} parent=0 // pred_region
    _
  $region69: #{decoder_forward.3} parent=0 // pred_fallthru
    _
  // Predicated region
  $region70: #{decoder_forward.3} parent=0 // pred_check
    _
  $region71: #{decoder_forward.3} parent=0 // pred_check_branch
    %63 = sbr.rel (0) target = $region73
  $region72: #{decoder_forward.3} parent=0 // pred_region
    _
  $region73: #{decoder_forward.3} parent=0 // pred_fallthru
    _
  // Predicated region
  $region74: #{decoder_forward.3} parent=0 // pred_check
    _
  $region75: #{decoder_forward.3} parent=0 // pred_check_branch
    %65 = sbr.rel (0) target = $region77
  $region76: #{decoder_forward.3} parent=0 // pred_region
    _
  $region77: #{decoder_forward.3} parent=0 // pred_fallthru
    _
  // Predicated region
  $region78: #{decoder_forward.3} parent=0 // pred_check
    _
  $region79: #{decoder_forward.3} parent=0 // pred_check_branch
    %67 = sbr.rel (0) target = $region81
  $region80: #{decoder_forward.3} parent=0 // pred_region
    _
  $region81: #{decoder_forward.3} parent=0 // pred_fallthru
    _
  // Predicated region
  $region82: #{decoder_forward.3} parent=0 // pred_check
    _
  $region83: #{decoder_forward.3} parent=0 // pred_check_branch
    %69 = sbr.rel (0) target = $region85
  $region84: #{decoder_forward.3} parent=0 // pred_region
    _
  $region85: #{decoder_forward.3} parent=0 // pred_fallthru
    _
  // Predicated region
  $region86: #{decoder_forward.3} parent=0 // pred_check
    _
  $region87: #{decoder_forward.3} parent=0 // pred_check_branch
    %71 = sbr.rel (0) target = $region89
  $region88: #{decoder_forward.3} parent=0 // pred_region
    _
  $region89: #{decoder_forward.3} parent=0 // pred_fallthru
    _
  // Predicated region
  $region90: #{decoder_forward.3} parent=0 // pred_check
    _
  $region91: #{decoder_forward.3} parent=0 // pred_check_branch
    %73 = sbr.rel (0) target = $region93
  $region92: #{decoder_forward.3} parent=0 // pred_region
    _
  $region93: #{decoder_forward.3} parent=0 // pred_fallthru
    _
  %v75 = vld [vmem:[%s0] sm:$0xff]
  %v76 = vld [vmem:[%s0 + $0x8] sm:$0xff]
  %v77 = vld [vmem:[%s1] sm:$0xff]
  %v78 = vld [vmem:[%s1 + $0x8] sm:$0xf]
  %v79 = vld [vmem:[%s1 + $0x10] sm:$0xff]
  %v80 = vld [vmem:[%s1 + $0x18] sm:$0xf]
  %v85 = vrot.slane %v77, 4
  %v86 = vrot.slane %v79, 4
  %v87 = vld [vmem:[%s2] sm:$0xff]
  %v88 = vld [vmem:[%s3] sm:$0xf]
  %v89 = vld [vmem:[%s3 + $0x4] sm:$0xf]
  %v90 = vld [vmem:[%s3 + $0x8] sm:$0xf]
  %v91 = vld [vmem:[%s3 + $0xc] sm:$0xf]
  %v92 = vld [vmem:[%s4] sm:$0x1]
  %v93 = vpack.c.bf16 %v76, %v75
  %v95 = vperm.slane %v92, 0
  %v101 = vunpack.c.l.b16 %v88
  %v102 = vunpack.c.l.b16 %v89
  %v103 = vunpack.c.l.b16 %v90
  %v104 = vunpack.c.l.b16 %v91
  %v105 = vpack.c.b16 %v102, %v101
  %v106 = vpack.c.b16 %v104, %v103
  %vm109 = vcmask 261120
  %v111 = vsel %vm109, %v93, 0
  %113 = vmatpush.bf16.msra.mxu0 0
  %114 = vmatpush.bf16.msra.mxu0 0
  %115 = vmatpush.bf16.msra.mxu0 0
  %116 = vmatpush.bf16.msra.mxu0 0
  %117 = vmatpush.bf16.msra.mxu0 0
  %118 = vmatpush.bf16.msra.mxu0 0
  %119 = vmatpush.bf16.msra.mxu0 %v106
  %120 = vmatpush.bf16.msra.mxu0 %v105
  %121 = vmatmul.bf16.gmra.mxu0 %v111
  %v122 = vpop.f32.mrf.mxu0
  %v123 = vadd.f32 %v95, %v122
  %v124 = vpop.f32.mrf.mxu0
  %v125 = vadd.f32 %v95, %v124
  %126 = vdwg.mxu0
  %v127 = vpack.c.bf16 %v123, %v123
  %v128 = vpack.c.bf16 %v125, %v125
  %v130 = vunpack.c.l.b16 %v127
  %v131 = vpack.c.b16 %v130, %v130
  %132 = vrot.lane.b32.xlu0 %v131, 96
  %v133 = vpop.permute.xlu0 %132
  %vm134 = vcmask 64512
  %v136 = vsel %vm134, %v127, 0
  %v139 = vsel %vm134, %v133, 0
  %141 = vmatpush.bf16.xpose.msra.mxu0 0
  %142 = vmatpush.bf16.xpose.msra.mxu0 0
  %143 = vmatpush.bf16.xpose.msra.mxu0 0
  %144 = vmatpush.bf16.xpose.msra.mxu0 0
  %145 = vmatpush.bf16.xpose.msra.mxu0 0
  %146 = vmatpush.bf16.xpose.msra.mxu0 0
  %147 = vmatpush.bf16.xpose.msra.mxu0 0
  %148 = vmatpush.bf16.xpose.msra.mxu0 %v139
  %149 = vmatmul.bf16.gmra.mxu0 %v136
  %v150 = vpop.f32.mrf.mxu0
  %v151 = vadd.f32 0.0, %v150
  %v152 = vpop.f32.mrf.mxu0
  %153 = vdwg.mxu0
  %v155 = vunpack.c.l.b16 %v128
  %v156 = vpack.c.b16 %v155, %v155
  %157 = vrot.lane.b32.xlu0 %v156, 96
  %v158 = vpop.permute.xlu0 %157
  %v160 = vsel %vm134, %v128, 0
  %v163 = vsel %vm134, %v158, 0
  %165 = vmatpush.bf16.xpose.msra.mxu0 0
  %166 = vmatpush.bf16.xpose.msra.mxu0 0
  %167 = vmatpush.bf16.xpose.msra.mxu0 0
  %168 = vmatpush.bf16.xpose.msra.mxu0 0
  %169 = vmatpush.bf16.xpose.msra.mxu0 0
  %170 = vmatpush.bf16.xpose.msra.mxu0 0
  %171 = vmatpush.bf16.xpose.msra.mxu0 0
  %172 = vmatpush.bf16.xpose.msra.mxu0 %v163
  %173 = vmatmul.bf16.gmra.mxu0 %v160
  %v174 = vpop.f32.mrf.mxu0
  %v175 = vadd.f32 0.0, %v174
  %v176 = vpop.f32.mrf.mxu0
  %177 = vdwg.mxu0
  %v178 = vmul.f32 %v151, 0.35355338
  %v179 = vmul.f32 %v175, 0.35355338
  %v180 = vadd.f32 %v178, %v87
  %v181 = vadd.f32 %v179, %v87
  %v182 = vsel %vm134, %v180, -inf
  %183 = vmax.xlane.f32.xlu0 %v182
  %v184 = vpop.xlane.xlu0 %183
  %v185 = vsel %vm134, %v181, -inf
  %186 = vmax.xlane.f32.xlu0 %v185
  %v187 = vpop.xlane.xlu0 %186
  %v188 = vsub.f32 %v180, %v184
  %v189 = vsub.f32 %v181, %v187
  %v190 = vmul.f32 %v188, 1.442695
  %v191 = vpow.pop %v190
  %v192 = vmul.f32 %v189, 1.442695
  %v193 = vpow.pop %v192
  %v194 = vsel %vm134, %v191, 0.0
  %195 = vadd.xlane.f32.xlu0 %v194
  %v196 = vpop.xlane.xlu0 %195
  %v197 = vsel %vm134, %v193, 0.0
  %198 = vadd.xlane.f32.xlu0 %v197
  %v199 = vpop.xlane.xlu0 %198
  %v200 = vpack.c.bf16 %v191, %v191
  %v201 = vpack.c.bf16 %v193, %v193
  %202 = vrot.lane.b32.xlu0 %v131, 64
  %v203 = vpop.permute.xlu0 %202
  %v205 = vsel %vm134, %v200, 0
  %vm207 = vcmask 1043456
  %v209 = vsel %vm207, %v203, 0
  %211 = vmatpush.bf16.msra.mxu0 0
  %212 = vmatpush.bf16.msra.mxu0 0
  %213 = vmatpush.bf16.msra.mxu0 0
  %214 = vmatpush.bf16.msra.mxu0 0
  %215 = vmatpush.bf16.msra.mxu0 0
  %216 = vmatpush.bf16.msra.mxu0 0
  %217 = vmatpush.bf16.msra.mxu0 0
  %218 = vmatpush.bf16.msra.mxu0 %v209
  %219 = vmatmul.bf16.gmra.mxu0 %v205
  %v220 = vpop.f32.mrf.mxu0
  %v221 = vadd.f32 0.0, %v220
  %v222 = vpop.f32.mrf.mxu0
  %223 = vdwg.mxu0
  %224 = vrot.lane.b32.xlu0 %v156, 64
  %v225 = vpop.permute.xlu0 %224
  %v227 = vsel %vm134, %v201, 0
  %v230 = vsel %vm207, %v225, 0
  %232 = vmatpush.bf16.msra.mxu0 0
  %233 = vmatpush.bf16.msra.mxu0 0
  %234 = vmatpush.bf16.msra.mxu0 0
  %235 = vmatpush.bf16.msra.mxu0 0
  %236 = vmatpush.bf16.msra.mxu0 0
  %237 = vmatpush.bf16.msra.mxu0 0
  %238 = vmatpush.bf16.msra.mxu0 0
  %239 = vmatpush.bf16.msra.mxu0 %v230
  %240 = vmatmul.bf16.gmra.mxu0 %v227
  %v241 = vpop.f32.mrf.mxu0
  %v242 = vadd.f32 0.0, %v241
  %v243 = vpop.f32.mrf.mxu0
  %244 = vdwg.mxu0
  %v245 = vrcp.pop %v196
  %v246 = vrcp.pop %v199
  %v247 = vmul.f32 %v221, %v245
  %v248 = vmul.f32 %v242, %v246
  %v249 = vld [vmem:[%s5] sm:$0xff]
  %v250 = vpack.c.bf16 %v249, %v249
  %v251 = vpack.c.bf16 %v248, %v247
  %252 = vrot.lane.b32.xlu0 %v131, 120
  %v253 = vpop.permute.xlu0 %252
  %254 = vrot.lane.b32.xlu0 %v131, 88
  %v255 = vpop.permute.xlu0 %254
  %v257 = vsel %vm134, %v253, 0
  %v260 = vsel %vm134, %v255, 0
  %262 = vmatpush.bf16.xpose.msra.mxu0 0
  %263 = vmatpush.bf16.xpose.msra.mxu0 0
  %264 = vmatpush.bf16.xpose.msra.mxu0 0
  %265 = vmatpush.bf16.xpose.msra.mxu0 0
  %266 = vmatpush.bf16.xpose.msra.mxu0 0
  %267 = vmatpush.bf16.xpose.msra.mxu0 0
  %268 = vmatpush.bf16.xpose.msra.mxu0 0
  %269 = vmatpush.bf16.xpose.msra.mxu0 %v260
  %270 = vmatmul.bf16.gmra.mxu0 %v257
  %v271 = vpop.f32.mrf.mxu0
  %v272 = vadd.f32 0.0, %v271
  %v273 = vpop.f32.mrf.mxu0
  %274 = vdwg.mxu0
  %275 = vrot.lane.b32.xlu0 %v156, 120
  %v276 = vpop.permute.xlu0 %275
  %277 = vrot.lane.b32.xlu0 %v156, 88
  %v278 = vpop.permute.xlu0 %277
  %v280 = vsel %vm134, %v276, 0
  %v283 = vsel %vm134, %v278, 0
  %285 = vmatpush.bf16.xpose.msra.mxu0 0
  %286 = vmatpush.bf16.xpose.msra.mxu0 0
  %287 = vmatpush.bf16.xpose.msra.mxu0 0
  %288 = vmatpush.bf16.xpose.msra.mxu0 0
  %289 = vmatpush.bf16.xpose.msra.mxu0 0
  %290 = vmatpush.bf16.xpose.msra.mxu0 0
  %291 = vmatpush.bf16.xpose.msra.mxu0 0
  %292 = vmatpush.bf16.xpose.msra.mxu0 %v283
  %293 = vmatmul.bf16.gmra.mxu0 %v280
  %v294 = vpop.f32.mrf.mxu0
  %v295 = vadd.f32 0.0, %v294
  %v296 = vpop.f32.mrf.mxu0
  %297 = vdwg.mxu0
  %v298 = vmul.f32 %v272, 0.35355338
  %v299 = vmul.f32 %v295, 0.35355338
  %v300 = vadd.f32 %v298, %v87
  %v301 = vadd.f32 %v299, %v87
  %v302 = vsel %vm134, %v300, -inf
  %303 = vmax.xlane.f32.xlu0 %v302
  %v304 = vpop.xlane.xlu0 %303
  %v305 = vsel %vm134, %v301, -inf
  %306 = vmax.xlane.f32.xlu0 %v305
  %v307 = vpop.xlane.xlu0 %306
  %v308 = vsub.f32 %v300, %v304
  %v309 = vsub.f32 %v301, %v307
  %v310 = vmul.f32 %v308, 1.442695
  %v311 = vpow.pop %v310
  %v312 = vmul.f32 %v309, 1.442695
  %v313 = vpow.pop %v312
  %v314 = vsel %vm134, %v311, 0.0
  %315 = vadd.xlane.f32.xlu0 %v314
  %v316 = vpop.xlane.xlu0 %315
  %v317 = vsel %vm134, %v313, 0.0
  %318 = vadd.xlane.f32.xlu0 %v317
  %v319 = vpop.xlane.xlu0 %318
  %v320 = vpack.c.bf16 %v311, %v311
  %v321 = vpack.c.bf16 %v313, %v313
  %322 = vrot.lane.b32.xlu0 %v131, 56
  %v323 = vpop.permute.xlu0 %322
  %v325 = vsel %vm134, %v320, 0
  %v328 = vsel %vm207, %v323, 0
  %330 = vmatpush.bf16.msra.mxu0 0
  %331 = vmatpush.bf16.msra.mxu0 0
  %332 = vmatpush.bf16.msra.mxu0 0
  %333 = vmatpush.bf16.msra.mxu0 0
  %334 = vmatpush.bf16.msra.mxu0 0
  %335 = vmatpush.bf16.msra.mxu0 0
  %336 = vmatpush.bf16.msra.mxu0 0
  %337 = vmatpush.bf16.msra.mxu0 %v328
  %338 = vmatmul.bf16.gmra.mxu0 %v325
  %v339 = vpop.f32.mrf.mxu0
  %v340 = vadd.f32 0.0, %v339
  %v341 = vpop.f32.mrf.mxu0
  %342 = vdwg.mxu0
  %343 = vrot.lane.b32.xlu0 %v156, 56
  %v344 = vpop.permute.xlu0 %343
  %v346 = vsel %vm134, %v321, 0
  %v349 = vsel %vm207, %v344, 0
  %351 = vmatpush.bf16.msra.mxu0 0
  %352 = vmatpush.bf16.msra.mxu0 0
  %353 = vmatpush.bf16.msra.mxu0 0
  %354 = vmatpush.bf16.msra.mxu0 0
  %355 = vmatpush.bf16.msra.mxu0 0
  %356 = vmatpush.bf16.msra.mxu0 0
  %357 = vmatpush.bf16.msra.mxu0 0
  %358 = vmatpush.bf16.msra.mxu0 %v349
  %359 = vmatmul.bf16.gmra.mxu0 %v346
  %v360 = vpop.f32.mrf.mxu0
  %v361 = vadd.f32 0.0, %v360
  %v362 = vpop.f32.mrf.mxu0
  %363 = vdwg.mxu0
  %v364 = vrcp.pop %v316
  %v365 = vrcp.pop %v319
  %v366 = vmul.f32 %v340, %v364
  %v367 = vmul.f32 %v361, %v365
  %v368 = vld [vmem:[%s5 + $0x8] sm:$0xff]
  %v369 = vpack.c.bf16 %v368, %v368
  %v370 = vpack.c.bf16 %v367, %v366
  %v372 = vsel %vm134, %v370, 0
  %v375 = vsel %vm207, %v369, 0
  %377 = vmatpush.bf16.msra.mxu0 0
  %378 = vmatpush.bf16.msra.mxu0 0
  %379 = vmatpush.bf16.msra.mxu0 0
  %380 = vmatpush.bf16.msra.mxu0 0
  %381 = vmatpush.bf16.msra.mxu0 0
  %382 = vmatpush.bf16.msra.mxu0 0
  %383 = vmatpush.bf16.msra.mxu0 0
  %384 = vmatpush.bf16.msra.mxu0 %v375
  %385 = vmatmul.bf16.gmra.mxu0 %v372
  %v386 = vpop.f32.mrf.mxu0
  %v387 = vadd.f32 0.0, %v386
  %v388 = vpop.f32.mrf.mxu0
  %v389 = vadd.f32 0.0, %v388
  %390 = vdwg.mxu0
  %v392 = vsel %vm134, %v251, 0
  %v395 = vsel %vm207, %v250, 0
  %397 = vmatpush.bf16.msra.mxu0 0
  %398 = vmatpush.bf16.msra.mxu0 0
  %399 = vmatpush.bf16.msra.mxu0 0
  %400 = vmatpush.bf16.msra.mxu0 0
  %401 = vmatpush.bf16.msra.mxu0 0
  %402 = vmatpush.bf16.msra.mxu0 0
  %403 = vmatpush.bf16.msra.mxu0 0
  %404 = vmatpush.bf16.msra.mxu0 %v395
  %405 = vmatmul.bf16.gmra.mxu0 %v392
  %v406 = vpop.f32.mrf.mxu0
  %v407 = vadd.f32 %v387, %v406
  %v408 = vpop.f32.mrf.mxu0
  %v409 = vadd.f32 %v389, %v408
  %410 = vdwg.mxu0
  %411 = vrot.lane.b32.xlu0 %v131, 112
  %v412 = vpop.permute.xlu0 %411
  %413 = vrot.lane.b32.xlu0 %v131, 80
  %v414 = vpop.permute.xlu0 %413
  %v416 = vsel %vm134, %v412, 0
  %v419 = vsel %vm134, %v414, 0
  %421 = vmatpush.bf16.xpose.msra.mxu0 0
  %422 = vmatpush.bf16.xpose.msra.mxu0 0
  %423 = vmatpush.bf16.xpose.msra.mxu0 0
  %424 = vmatpush.bf16.xpose.msra.mxu0 0
  %425 = vmatpush.bf16.xpose.msra.mxu0 0
  %426 = vmatpush.bf16.xpose.msra.mxu0 0
  %427 = vmatpush.bf16.xpose.msra.mxu0 0
  %428 = vmatpush.bf16.xpose.msra.mxu0 %v419
  %429 = vmatmul.bf16.gmra.mxu0 %v416
  %v430 = vpop.f32.mrf.mxu0
  %v431 = vadd.f32 0.0, %v430
  %v432 = vpop.f32.mrf.mxu0
  %433 = vdwg.mxu0
  %434 = vrot.lane.b32.xlu0 %v156, 112
  %v435 = vpop.permute.xlu0 %434
  %436 = vrot.lane.b32.xlu0 %v156, 80
  %v437 = vpop.permute.xlu0 %436
  %v439 = vsel %vm134, %v435, 0
  %v442 = vsel %vm134, %v437, 0
  %444 = vmatpush.bf16.xpose.msra.mxu0 0
  %445 = vmatpush.bf16.xpose.msra.mxu0 0
  %446 = vmatpush.bf16.xpose.msra.mxu0 0
  %447 = vmatpush.bf16.xpose.msra.mxu0 0
  %448 = vmatpush.bf16.xpose.msra.mxu0 0
  %449 = vmatpush.bf16.xpose.msra.mxu0 0
  %450 = vmatpush.bf16.xpose.msra.mxu0 0
  %451 = vmatpush.bf16.xpose.msra.mxu0 %v442
  %452 = vmatmul.bf16.gmra.mxu0 %v439
  %v453 = vpop.f32.mrf.mxu0
  %v454 = vadd.f32 0.0, %v453
  %v455 = vpop.f32.mrf.mxu0
  %456 = vdwg.mxu0
  %v457 = vmul.f32 %v431, 0.35355338
  %v458 = vmul.f32 %v454, 0.35355338
  %v459 = vadd.f32 %v457, %v87
  %v460 = vadd.f32 %v458, %v87
  %v461 = vsel %vm134, %v459, -inf
  %462 = vmax.xlane.f32.xlu0 %v461
  %v463 = vpop.xlane.xlu0 %462
  %v464 = vsel %vm134, %v460, -inf
  %465 = vmax.xlane.f32.xlu0 %v464
  %v466 = vpop.xlane.xlu0 %465
  %v467 = vsub.f32 %v459, %v463
  %v468 = vsub.f32 %v460, %v466
  %v469 = vmul.f32 %v467, 1.442695
  %v470 = vpow.pop %v469
  %v471 = vmul.f32 %v468, 1.442695
  %v472 = vpow.pop %v471
  %v473 = vsel %vm134, %v470, 0.0
  %474 = vadd.xlane.f32.xlu0 %v473
  %v475 = vpop.xlane.xlu0 %474
  %v476 = vsel %vm134, %v472, 0.0
  %477 = vadd.xlane.f32.xlu0 %v476
  %v478 = vpop.xlane.xlu0 %477
  %v479 = vpack.c.bf16 %v470, %v470
  %v480 = vpack.c.bf16 %v472, %v472
  %481 = vrot.lane.b32.xlu0 %v131, 48
  %v482 = vpop.permute.xlu0 %481
  %v484 = vsel %vm134, %v479, 0
  %v487 = vsel %vm207, %v482, 0
  %489 = vmatpush.bf16.msra.mxu0 0
  %490 = vmatpush.bf16.msra.mxu0 0
  %491 = vmatpush.bf16.msra.mxu0 0
  %492 = vmatpush.bf16.msra.mxu0 0
  %493 = vmatpush.bf16.msra.mxu0 0
  %494 = vmatpush.bf16.msra.mxu0 0
  %495 = vmatpush.bf16.msra.mxu0 0
  %496 = vmatpush.bf16.msra.mxu0 %v487
  %497 = vmatmul.bf16.gmra.mxu0 %v484
  %v498 = vpop.f32.mrf.mxu0
  %v499 = vadd.f32 0.0, %v498
  %v500 = vpop.f32.mrf.mxu0
  %501 = vdwg.mxu0
  %502 = vrot.lane.b32.xlu0 %v156, 48
  %v503 = vpop.permute.xlu0 %502
  %v505 = vsel %vm134, %v480, 0
  %v508 = vsel %vm207, %v503, 0
  %510 = vmatpush.bf16.msra.mxu0 0
  %511 = vmatpush.bf16.msra.mxu0 0
  %512 = vmatpush.bf16.msra.mxu0 0
  %513 = vmatpush.bf16.msra.mxu0 0
  %514 = vmatpush.bf16.msra.mxu0 0
  %515 = vmatpush.bf16.msra.mxu0 0
  %516 = vmatpush.bf16.msra.mxu0 0
  %517 = vmatpush.bf16.msra.mxu0 %v508
  %518 = vmatmul.bf16.gmra.mxu0 %v505
  %v519 = vpop.f32.mrf.mxu0
  %v520 = vadd.f32 0.0, %v519
  %v521 = vpop.f32.mrf.mxu0
  %522 = vdwg.mxu0
  %v523 = vrcp.pop %v475
  %v524 = vrcp.pop %v478
  %v525 = vmul.f32 %v499, %v523
  %v526 = vmul.f32 %v520, %v524
  %v527 = vld [vmem:[%s5 + $0x10] sm:$0xff]
  %v528 = vpack.c.bf16 %v527, %v527
  %v529 = vpack.c.bf16 %v526, %v525
  %v531 = vsel %vm134, %v529, 0
  %v534 = vsel %vm207, %v528, 0
  %536 = vmatpush.bf16.msra.mxu0 0
  %537 = vmatpush.bf16.msra.mxu0 0
  %538 = vmatpush.bf16.msra.mxu0 0
  %539 = vmatpush.bf16.msra.mxu0 0
  %540 = vmatpush.bf16.msra.mxu0 0
  %541 = vmatpush.bf16.msra.mxu0 0
  %542 = vmatpush.bf16.msra.mxu0 0
  %543 = vmatpush.bf16.msra.mxu0 %v534
  %544 = vmatmul.bf16.gmra.mxu0 %v531
  %v545 = vpop.f32.mrf.mxu0
  %v546 = vadd.f32 0.0, %v545
  %v547 = vpop.f32.mrf.mxu0
  %v548 = vadd.f32 0.0, %v547
  %549 = vdwg.mxu0
  %v550 = vadd.f32 %v407, %v546
  %v551 = vadd.f32 %v409, %v548
  %552 = vrot.lane.b32.xlu0 %v131, 104
  %v553 = vpop.permute.xlu0 %552
  %554 = vrot.lane.b32.xlu0 %v131, 72
  %v555 = vpop.permute.xlu0 %554
  %v557 = vsel %vm134, %v553, 0
  %v560 = vsel %vm134, %v555, 0
  %562 = vmatpush.bf16.xpose.msra.mxu0 0
  %563 = vmatpush.bf16.xpose.msra.mxu0 0
  %564 = vmatpush.bf16.xpose.msra.mxu0 0
  %565 = vmatpush.bf16.xpose.msra.mxu0 0
  %566 = vmatpush.bf16.xpose.msra.mxu0 0
  %567 = vmatpush.bf16.xpose.msra.mxu0 0
  %568 = vmatpush.bf16.xpose.msra.mxu0 0
  %569 = vmatpush.bf16.xpose.msra.mxu0 %v560
  %570 = vmatmul.bf16.gmra.mxu0 %v557
  %v571 = vpop.f32.mrf.mxu0
  %v572 = vadd.f32 0.0, %v571
  %v573 = vpop.f32.mrf.mxu0
  %574 = vdwg.mxu0
  %575 = vrot.lane.b32.xlu0 %v156, 104
  %v576 = vpop.permute.xlu0 %575
  %577 = vrot.lane.b32.xlu0 %v156, 72
  %v578 = vpop.permute.xlu0 %577
  %v580 = vsel %vm134, %v576, 0
  %v583 = vsel %vm134, %v578, 0
  %585 = vmatpush.bf16.xpose.msra.mxu0 0
  %586 = vmatpush.bf16.xpose.msra.mxu0 0
  %587 = vmatpush.bf16.xpose.msra.mxu0 0
  %588 = vmatpush.bf16.xpose.msra.mxu0 0
  %589 = vmatpush.bf16.xpose.msra.mxu0 0
  %590 = vmatpush.bf16.xpose.msra.mxu0 0
  %591 = vmatpush.bf16.xpose.msra.mxu0 0
  %592 = vmatpush.bf16.xpose.msra.mxu0 %v583
  %593 = vmatmul.bf16.gmra.mxu0 %v580
  %v594 = vpop.f32.mrf.mxu0
  %v595 = vadd.f32 0.0, %v594
  %v596 = vpop.f32.mrf.mxu0
  %597 = vdwg.mxu0
  %v598 = vmul.f32 %v572, 0.35355338
  %v599 = vmul.f32 %v595, 0.35355338
  %v600 = vadd.f32 %v598, %v87
  %v601 = vadd.f32 %v599, %v87
  %v602 = vsel %vm134, %v600, -inf
  %603 = vmax.xlane.f32.xlu0 %v602
  %v604 = vpop.xlane.xlu0 %603
  %v605 = vsel %vm134, %v601, -inf
  %606 = vmax.xlane.f32.xlu0 %v605
  %v607 = vpop.xlane.xlu0 %606
  %v608 = vsub.f32 %v600, %v604
  %v609 = vsub.f32 %v601, %v607
  %v610 = vmul.f32 %v608, 1.442695
  %v611 = vpow.pop %v610
  %v612 = vmul.f32 %v609, 1.442695
  %v613 = vpow.pop %v612
  %v614 = vsel %vm134, %v611, 0.0
  %615 = vadd.xlane.f32.xlu0 %v614
  %v616 = vpop.xlane.xlu0 %615
  %v617 = vsel %vm134, %v613, 0.0
  %618 = vadd.xlane.f32.xlu0 %v617
  %v619 = vpop.xlane.xlu0 %618
  %v620 = vpack.c.bf16 %v611, %v611
  %v621 = vpack.c.bf16 %v613, %v613
  %622 = vrot.lane.b32.xlu0 %v131, 40
  %v623 = vpop.permute.xlu0 %622
  %v625 = vsel %vm134, %v620, 0
  %v628 = vsel %vm207, %v623, 0
  %630 = vmatpush.bf16.msra.mxu0 0
  %631 = vmatpush.bf16.msra.mxu0 0
  %632 = vmatpush.bf16.msra.mxu0 0
  %633 = vmatpush.bf16.msra.mxu0 0
  %634 = vmatpush.bf16.msra.mxu0 0
  %635 = vmatpush.bf16.msra.mxu0 0
  %636 = vmatpush.bf16.msra.mxu0 0
  %637 = vmatpush.bf16.msra.mxu0 %v628
  %638 = vmatmul.bf16.gmra.mxu0 %v625
  %v639 = vpop.f32.mrf.mxu0
  %v640 = vadd.f32 0.0, %v639
  %v641 = vpop.f32.mrf.mxu0
  %642 = vdwg.mxu0
  %643 = vrot.lane.b32.xlu0 %v156, 40
  %v644 = vpop.permute.xlu0 %643
  %v646 = vsel %vm134, %v621, 0
  %v649 = vsel %vm207, %v644, 0
  %651 = vmatpush.bf16.msra.mxu0 0
  %652 = vmatpush.bf16.msra.mxu0 0
  %653 = vmatpush.bf16.msra.mxu0 0
  %654 = vmatpush.bf16.msra.mxu0 0
  %655 = vmatpush.bf16.msra.mxu0 0
  %656 = vmatpush.bf16.msra.mxu0 0
  %657 = vmatpush.bf16.msra.mxu0 0
  %658 = vmatpush.bf16.msra.mxu0 %v649
  %659 = vmatmul.bf16.gmra.mxu0 %v646
  %v660 = vpop.f32.mrf.mxu0
  %v661 = vadd.f32 0.0, %v660
  %v662 = vpop.f32.mrf.mxu0
  %663 = vdwg.mxu0
  %v664 = vrcp.pop %v616
  %v665 = vrcp.pop %v619
  %v666 = vmul.f32 %v640, %v664
  %v667 = vmul.f32 %v661, %v665
  %v668 = vld [vmem:[%s5 + $0x18] sm:$0xff]
  %v669 = vpack.c.bf16 %v668, %v668
  %v670 = vpack.c.bf16 %v667, %v666
  %v672 = vsel %vm134, %v670, 0
  %v675 = vsel %vm207, %v669, 0
  %677 = vmatpush.bf16.msra.mxu0 0
  %678 = vmatpush.bf16.msra.mxu0 0
  %679 = vmatpush.bf16.msra.mxu0 0
  %680 = vmatpush.bf16.msra.mxu0 0
  %681 = vmatpush.bf16.msra.mxu0 0
  %682 = vmatpush.bf16.msra.mxu0 0
  %683 = vmatpush.bf16.msra.mxu0 0
  %684 = vmatpush.bf16.msra.mxu0 %v675
  %685 = vmatmul.bf16.gmra.mxu0 %v672
  %v686 = vpop.f32.mrf.mxu0
  %v687 = vadd.f32 0.0, %v686
  %v688 = vpop.f32.mrf.mxu0
  %v689 = vadd.f32 0.0, %v688
  %690 = vdwg.mxu0
  %v691 = vadd.f32 %v550, %v687
  %v692 = vadd.f32 %v551, %v689
  %v693 = vld [vmem:[%s6] sm:$0x1]
  %v695 = vperm.slane %v693, 0
  %v697 = vadd.f32 %v691, %v695
  %v698 = vadd.f32 %v692, %v695
  %v699 = vadd.f32 %v75, %v697
  %v700 = vadd.f32 %v76, %v698
  %v701 = vld [vmem:[%s7] sm:$0x1]
  %v702 = vld [vmem:[%s8] sm:$0x1]
  %v703 = vsel %vm109, %v699, 0.0
  %704 = vadd.xlane.f32.xlu0 %v703
  %v705 = vpop.xlane.xlu0 %704
  %v706 = vsel %vm109, %v700, 0.0
  %707 = vadd.xlane.f32.xlu0 %v706
  %v708 = vpop.xlane.xlu0 %707
  %v709 = vrcp.pop 32.0
  %v710 = vmul.f32 32.0, %v709
  %v711 = vsub.f32 1.0, %v710
  %v712 = vmul.f32 %v709, %v711
  %v713 = vadd.f32 %v709, %v712
  %vm714 = vweird.f32 %v709
  %v715 = vsel %vm714, %v709, %v713
  %v716 = vmul.f32 %v705, %v715
  %v717 = vmul.f32 %v708, %v715
  %v718 = vsub.f32 %v699, %v716
  %v719 = vsub.f32 %v700, %v717
  %v720 = vmul.f32 %v718, %v718
  %v721 = vmul.f32 %v719, %v719
  %v722 = vsel %vm109, %v720, 0.0
  %723 = vadd.xlane.f32.xlu0 %v722
  %v724 = vpop.xlane.xlu0 %723
  %v725 = vsel %vm109, %v721, 0.0
  %726 = vadd.xlane.f32.xlu0 %v725
  %v727 = vpop.xlane.xlu0 %726
  %v728 = vmul.f32 %v724, %v715
  %v729 = vmul.f32 %v727, %v715
  %v730 = vadd.f32 %v728, 1e-05
  %v731 = vadd.f32 %v729, 1e-05
  %v732 = vrsqrt.pop %v730
  %v733 = vmul.f32 %v732, %v730
  %v734 = vmul.f32 %v733, %v732
  %v735 = vmul.f32 0.5, %v734
  %v736 = vsub.f32 1.5, %v735
  %v737 = vmul.f32 %v732, %v736
  %vm738 = vweird.f32 %v730
  %vm739 = vweird.f32 %v732
  %vm740 = vmor %vm738, %vm739
  %v741 = vsel %vm740, %v732, %v737
  %v742 = vrsqrt.pop %v731
  %v743 = vmul.f32 %v742, %v731
  %v744 = vmul.f32 %v743, %v742
  %v745 = vmul.f32 0.5, %v744
  %v746 = vsub.f32 1.5, %v745
  %v747 = vmul.f32 %v742, %v746
  %vm748 = vweird.f32 %v731
  %vm749 = vweird.f32 %v742
  %vm750 = vmor %vm748, %vm749
  %v751 = vsel %vm750, %v742, %v747
  %v752 = vmul.f32 %v718, %v741
  %v753 = vmul.f32 %v719, %v751
  %v755 = vperm.slane %v701, 0
  %v757 = vmul.f32 %v752, %v755
  %v758 = vmul.f32 %v753, %v755
  %v760 = vperm.slane %v702, 0
  %v762 = vadd.f32 %v757, %v760
  %v763 = vadd.f32 %v758, %v760
  %v764 = vld [vmem:[%s9] sm:$0xf]
  %v765 = vld [vmem:[%s9 + $0x4] sm:$0xf]
  %v766 = vld [vmem:[%s9 + $0x8] sm:$0xf]
  %v767 = vld [vmem:[%s9 + $0xc] sm:$0xf]
  %v768 = vld [vmem:[%s10] sm:$0x1]
  %v769 = vpack.c.bf16 %v763, %v762
  %v771 = vperm.slane %v768, 0
  %v777 = vunpack.c.l.b16 %v764
  %v778 = vunpack.c.l.b16 %v765
  %v779 = vunpack.c.l.b16 %v766
  %v780 = vunpack.c.l.b16 %v767
  %v781 = vpack.c.b16 %v778, %v777
  %v782 = vpack.c.b16 %v780, %v779
  %v786 = vsel %vm109, %v769, 0
  %788 = vmatpush.bf16.msra.mxu0 0
  %789 = vmatpush.bf16.msra.mxu0 0
  %790 = vmatpush.bf16.msra.mxu0 0
  %791 = vmatpush.bf16.msra.mxu0 0
  %792 = vmatpush.bf16.msra.mxu0 0
  %793 = vmatpush.bf16.msra.mxu0 0
  %794 = vmatpush.bf16.msra.mxu0 %v782
  %795 = vmatpush.bf16.msra.mxu0 %v781
  %796 = vmatmul.bf16.gmra.mxu0 %v786
  %v797 = vpop.f32.mrf.mxu0
  %v798 = vadd.f32 %v771, %v797
  %v799 = vpop.f32.mrf.mxu0
  %v800 = vadd.f32 %v771, %v799
  %801 = vdwg.mxu0
  %v802 = vld [vmem:[%s11] sm:$0xf]
  %v803 = vld [vmem:[%s11 + $0x4] sm:$0xf]
  %v804 = vld [vmem:[%s11 + $0x8] sm:$0xf]
  %v805 = vld [vmem:[%s11 + $0xc] sm:$0xf]
  %v806 = vld [vmem:[%s12] sm:$0x1]
  %807 = vst [vmem:[#allocation1] ss:$2 sm:$0xff] %v77
  %s808 = scalar_lea.vmem [#allocation1], 1
  %809 = vst [vmem:[%s808] ss:$2 sm:$0xff] %v85
  %s810 = scalar_lea.vmem [#allocation1], 16
  %811 = vst [vmem:[%s810] ss:$2 sm:$0xff] %v78
  %s812 = scalar_lea.vmem [#allocation1], 17
  %813 = vst [vmem:[%s812] ss:$2 sm:$0xff] %v79
  %s814 = scalar_lea.vmem [#allocation1], 32
  %815 = vst [vmem:[%s814] ss:$2 sm:$0xff] %v86
  %s816 = scalar_lea.vmem [#allocation1], 33
  %817 = vst [vmem:[%s816] ss:$2 sm:$0xff] %v80
  %v818 = vld.sshfl [vmem:[#allocation1] sm:$0xff pattern:$0x75316420]
  %v819 = vld.sshfl [vmem:[#allocation1 + $0x10] sm:$0xff pattern:$0x75316420]
  %v820 = vld.sshfl [vmem:[#allocation1 + $0x20] sm:$0xff pattern:$0x75316420]
  %v824 = vpack.c.bf16 %v819, %v818
  %v825 = vpack.c.bf16 %v820, %v820
  %v827 = vperm.slane %v806, 0
  %v833 = vunpack.c.l.b16 %v802
  %v834 = vunpack.c.l.b16 %v803
  %v835 = vunpack.c.l.b16 %v804
  %v836 = vunpack.c.l.b16 %v805
  %v837 = vpack.c.b16 %v834, %v833
  %v838 = vpack.c.b16 %v836, %v835
  %v842 = vsel %vm109, %v824, 0
  %v845 = vsel %vm109, %v825, 0
  %847 = vmatpush.bf16.msra.mxu0 0
  %848 = vmatpush.bf16.msra.mxu0 0
  %849 = vmatpush.bf16.msra.mxu0 0
  %850 = vmatpush.bf16.msra.mxu0 0
  %851 = vmatpush.bf16.msra.mxu0 0
  %852 = vmatpush.bf16.msra.mxu0 0
  %853 = vmatpush.bf16.msra.mxu0 %v838
  %854 = vmatpush.bf16.msra.mxu0 %v837
  %855 = vmatmul.bf16.gmra.mxu0 %v842
  %v856 = vpop.f32.mrf.mxu0
  %v857 = vadd.f32 %v827, %v856
  %v858 = vpop.f32.mrf.mxu0
  %v859 = vadd.f32 %v827, %v858
  %860 = vmatmul.bf16.gmra.mxu0 %v845
  %v861 = vpop.f32.mrf.mxu0
  %v862 = vadd.f32 %v827, %v861
  %v863 = vpop.f32.mrf.mxu0
  %864 = vdwg.mxu0
  %v865 = vpack.c.bf16 %v798, %v798
  %v866 = vpack.c.bf16 %v800, %v800
  %v870 = vrot.slane %v857, 4
  %v871 = vrot.slane %v859, 4
  %v872 = vrot.slane %v862, 4
  %873 = vst [vmem:[#allocation1] ss:$2 sm:$0xff] %v857
  %s874 = scalar_lea.vmem [#allocation1], 1
  %875 = vst [vmem:[%s874] ss:$2 sm:$0xff] %v870
  %s876 = scalar_lea.vmem [#allocation1], 16
  %877 = vst [vmem:[%s876] ss:$2 sm:$0xff] %v859
  %v878 = vld.sshfl [vmem:[#allocation1] sm:$0xff pattern:$0x75316420]
  %v879 = vld.sshfl [vmem:[#allocation1 + $0x10] sm:$0xff pattern:$0x75316420]
  %s880 = scalar_lea.vmem [#allocation1], 32
  %881 = vst [vmem:[%s880] ss:$2 sm:$0xff] %v871
  %s882 = scalar_lea.vmem [#allocation1], 33
  %883 = vst [vmem:[%s882] ss:$2 sm:$0xff] %v862
  %s884 = scalar_lea.vmem [#allocation1], 48
  %885 = vst [vmem:[%s884] ss:$2 sm:$0xff] %v872
  %v886 = vld.sshfl [vmem:[#allocation1 + $0x20] sm:$0xff pattern:$0x75316420]
  %v887 = vld.sshfl [vmem:[#allocation1 + $0x30] sm:$0xff pattern:$0x75316420]
  %v892 = vpack.c.bf16 %v878, %v878
  %v893 = vpack.c.bf16 %v879, %v879
  %v894 = vpack.c.bf16 %v886, %v886
  %v895 = vpack.c.bf16 %v887, %v887
  %896 = vst [vmem:[#allocation1] ss:$2 sm:$0xff] %v857
  %s897 = scalar_lea.vmem [#allocation1], 1
  %898 = vst [vmem:[%s897] ss:$2 sm:$0xff] %v870
  %s899 = scalar_lea.vmem [#allocation1], 16
  %900 = vst [vmem:[%s899] ss:$2 sm:$0xff] %v859
  %v901 = vld.sshfl [vmem:[#allocation1] sm:$0xff pattern:$0x75316420]
  %v902 = vld.sshfl [vmem:[#allocation1 + $0x10] sm:$0xff pattern:$0x75316420]
  %s903 = scalar_lea.vmem [#allocation1], 32
  %904 = vst [vmem:[%s903] ss:$2 sm:$0xff] %v871
  %s905 = scalar_lea.vmem [#allocation1], 33
  %906 = vst [vmem:[%s905] ss:$2 sm:$0xff] %v862
  %s907 = scalar_lea.vmem [#allocation1], 48
  %908 = vst [vmem:[%s907] ss:$2 sm:$0xff] %v872
  %v909 = vld.sshfl [vmem:[#allocation1 + $0x20] sm:$0xff pattern:$0x75316420]
  %v910 = vld.sshfl [vmem:[#allocation1 + $0x30] sm:$0xff pattern:$0x75316420]
  %v915 = vpack.c.bf16 %v901, %v901
  %v916 = vpack.c.bf16 %v902, %v902
  %v917 = vpack.c.bf16 %v909, %v909
  %v918 = vpack.c.bf16 %v910, %v910
  %v921 = vunpack.c.l.b16 %v892
  %v922 = vunpack.c.l.b16 %v893
  %v923 = vpack.c.b16 %v922, %v921
  %v925 = vsel %vm134, %v865, 0
  %v928 = vsel %vm134, %v923, 0
  %930 = vmatpush.bf16.xpose.msra.mxu0 0
  %931 = vmatpush.bf16.xpose.msra.mxu0 0
  %932 = vmatpush.bf16.xpose.msra.mxu0 0
  %933 = vmatpush.bf16.xpose.msra.mxu0 0
  %934 = vmatpush.bf16.xpose.msra.mxu0 0
  %935 = vmatpush.bf16.xpose.msra.mxu0 0
  %936 = vmatpush.bf16.xpose.msra.mxu0 0
  %937 = vmatpush.bf16.xpose.msra.mxu0 %v928
  %938 = vmatmul.bf16.gmra.mxu0 %v925
  %v939 = vpop.f32.mrf.mxu0
  %v940 = vadd.f32 0.0, %v939
  %v941 = vpop.f32.mrf.mxu0
  %942 = vdwg.mxu0
  %v945 = vunpack.c.l.b16 %v894
  %v946 = vunpack.c.l.b16 %v895
  %v947 = vpack.c.b16 %v946, %v945
  %v949 = vsel %vm134, %v866, 0
  %v952 = vsel %vm134, %v947, 0
  %954 = vmatpush.bf16.xpose.msra.mxu0 0
  %955 = vmatpush.bf16.xpose.msra.mxu0 0
  %956 = vmatpush.bf16.xpose.msra.mxu0 0
  %957 = vmatpush.bf16.xpose.msra.mxu0 0
  %958 = vmatpush.bf16.xpose.msra.mxu0 0
  %959 = vmatpush.bf16.xpose.msra.mxu0 0
  %960 = vmatpush.bf16.xpose.msra.mxu0 0
  %961 = vmatpush.bf16.xpose.msra.mxu0 %v952
  %962 = vmatmul.bf16.gmra.mxu0 %v949
  %v963 = vpop.f32.mrf.mxu0
  %v964 = vadd.f32 0.0, %v963
  %v965 = vpop.f32.mrf.mxu0
  %966 = vdwg.mxu0
  %v967 = vmul.f32 %v940, 0.35355338
  %v968 = vmul.f32 %v964, 0.35355338
  %vm969 = vcmask 97280
  %v970 = vsel %vm969, %v967, -inf
  %971 = vmax.xlane.f32.xlu0 %v970
  %v972 = vpop.xlane.xlu0 %971
  %v973 = vsel %vm969, %v968, -inf
  %974 = vmax.xlane.f32.xlu0 %v973
  %v975 = vpop.xlane.xlu0 %974
  %v976 = vsub.f32 %v967, %v972
  %v977 = vsub.f32 %v968, %v975
  %v978 = vmul.f32 %v976, 1.442695
  %v979 = vpow.pop %v978
  %v980 = vmul.f32 %v977, 1.442695
  %v981 = vpow.pop %v980
  %v982 = vsel %vm969, %v979, 0.0
  %983 = vadd.xlane.f32.xlu0 %v982
  %v984 = vpop.xlane.xlu0 %983
  %v985 = vsel %vm969, %v981, 0.0
  %986 = vadd.xlane.f32.xlu0 %v985
  %v987 = vpop.xlane.xlu0 %986
  %v988 = vpack.c.bf16 %v979, %v979
  %v989 = vpack.c.bf16 %v981, %v981
  %v992 = vunpack.c.l.b16 %v915
  %v993 = vunpack.c.l.b16 %v916
  %v994 = vpack.c.b16 %v993, %v992
  %995 = vrot.lane.b32.xlu0 %v994, 96
  %v996 = vpop.permute.xlu0 %995
  %v998 = vsel %vm969, %v988, 0
  %vm1000 = vcmask 1045504
  %v1002 = vsel %vm1000, %v996, 0
  %1004 = vmatpush.bf16.msra.mxu0 0
  %1005 = vmatpush.bf16.msra.mxu0 0
  %1006 = vmatpush.bf16.msra.mxu0 0
  %1007 = vmatpush.bf16.msra.mxu0 0
  %1008 = vmatpush.bf16.msra.mxu0 0
  %1009 = vmatpush.bf16.msra.mxu0 0
  %1010 = vmatpush.bf16.msra.mxu0 0
  %1011 = vmatpush.bf16.msra.mxu0 %v1002
  %1012 = vmatmul.bf16.gmra.mxu0 %v998
  %v1013 = vpop.f32.mrf.mxu0
  %v1014 = vadd.f32 0.0, %v1013
  %v1015 = vpop.f32.mrf.mxu0
  %1016 = vdwg.mxu0
  %v1019 = vunpack.c.l.b16 %v917
  %v1020 = vunpack.c.l.b16 %v918
  %v1021 = vpack.c.b16 %v1020, %v1019
  %1022 = vrot.lane.b32.xlu0 %v1021, 96
  %v1023 = vpop.permute.xlu0 %1022
  %v1025 = vsel %vm969, %v989, 0
  %v1028 = vsel %vm1000, %v1023, 0
  %1030 = vmatpush.bf16.msra.mxu0 0
  %1031 = vmatpush.bf16.msra.mxu0 0
  %1032 = vmatpush.bf16.msra.mxu0 0
  %1033 = vmatpush.bf16.msra.mxu0 0
  %1034 = vmatpush.bf16.msra.mxu0 0
  %1035 = vmatpush.bf16.msra.mxu0 0
  %1036 = vmatpush.bf16.msra.mxu0 0
  %1037 = vmatpush.bf16.msra.mxu0 %v1028
  %1038 = vmatmul.bf16.gmra.mxu0 %v1025
  %v1039 = vpop.f32.mrf.mxu0
  %v1040 = vadd.f32 0.0, %v1039
  %v1041 = vpop.f32.mrf.mxu0
  %1042 = vdwg.mxu0
  %v1043 = vrcp.pop %v984
  %v1044 = vrcp.pop %v987
  %v1045 = vmul.f32 %v1014, %v1043
  %v1046 = vmul.f32 %v1040, %v1044
  %v1047 = vld [vmem:[%s13] sm:$0xff]
  %v1048 = vpack.c.bf16 %v1047, %v1047
  %v1049 = vpack.c.bf16 %v1046, %v1045
  %1050 = vst [vmem:[#allocation1] ss:$2 sm:$0xff] %v857
  %s1051 = scalar_lea.vmem [#allocation1], 1
  %1052 = vst [vmem:[%s1051] ss:$2 sm:$0xff] %v870
  %s1053 = scalar_lea.vmem [#allocation1], 16
  %1054 = vst [vmem:[%s1053] ss:$2 sm:$0xff] %v859
  %v1055 = vld.sshfl [vmem:[#allocation1] sm:$0xff pattern:$0x75316420]
  %v1056 = vld.sshfl [vmem:[#allocation1 + $0x10] sm:$0xff pattern:$0x75316420]
  %s1057 = scalar_lea.vmem [#allocation1], 32
  %1058 = vst [vmem:[%s1057] ss:$2 sm:$0xff] %v871
  %s1059 = scalar_lea.vmem [#allocation1], 33
  %1060 = vst [vmem:[%s1059] ss:$2 sm:$0xff] %v862
  %s1061 = scalar_lea.vmem [#allocation1], 48
  %1062 = vst [vmem:[%s1061] ss:$2 sm:$0xff] %v872
  %v1063 = vld.sshfl [vmem:[#allocation1 + $0x20] sm:$0xff pattern:$0x75316420]
  %v1064 = vld.sshfl [vmem:[#allocation1 + $0x30] sm:$0xff pattern:$0x75316420]
  %v1069 = vpack.c.bf16 %v1055, %v1055
  %v1070 = vpack.c.bf16 %v1056, %v1056
  %v1071 = vpack.c.bf16 %v1063, %v1063
  %v1072 = vpack.c.bf16 %v1064, %v1064
  %1073 = vst [vmem:[#allocation1] ss:$2 sm:$0xff] %v857
  %s1074 = scalar_lea.vmem [#allocation1], 1
  %1075 = vst [vmem:[%s1074] ss:$2 sm:$0xff] %v870
  %s1076 = scalar_lea.vmem [#allocation1], 16
  %1077 = vst [vmem:[%s1076] ss:$2 sm:$0xff] %v859
  %v1078 = vld.sshfl [vmem:[#allocation1] sm:$0xff pattern:$0x75316420]
  %v1079 = vld.sshfl [vmem:[#allocation1 + $0x10] sm:$0xff pattern:$0x75316420]
  %s1080 = scalar_lea.vmem [#allocation1], 32
  %1081 = vst [vmem:[%s1080] ss:$2 sm:$0xff] %v871
  %s1082 = scalar_lea.vmem [#allocation1], 33
  %1083 = vst [vmem:[%s1082] ss:$2 sm:$0xff] %v862
  %s1084 = scalar_lea.vmem [#allocation1], 48
  %1085 = vst [vmem:[%s1084] ss:$2 sm:$0xff] %v872
  %v1086 = vld.sshfl [vmem:[#allocation1 + $0x20] sm:$0xff pattern:$0x75316420]
  %v1087 = vld.sshfl [vmem:[#allocation1 + $0x30] sm:$0xff pattern:$0x75316420]
  %v1092 = vpack.c.bf16 %v1078, %v1078
  %v1093 = vpack.c.bf16 %v1079, %v1079
  %v1094 = vpack.c.bf16 %v1086, %v1086
  %v1095 = vpack.c.bf16 %v1087, %v1087
  %v1097 = vunpack.c.l.b16 %v865
  %v1098 = vpack.c.b16 %v1097, %v1097
  %1099 = vrot.lane.b32.xlu0 %v1098, 120
  %v1100 = vpop.permute.xlu0 %1099
  %v1103 = vunpack.c.l.b16 %v1069
  %v1104 = vunpack.c.l.b16 %v1070
  %v1105 = vpack.c.b16 %v1104, %v1103
  %1106 = vrot.lane.b32.xlu0 %v1105, 120
  %v1107 = vpop.permute.xlu0 %1106
  %v1109 = vsel %vm134, %v1100, 0
  %v1112 = vsel %vm134, %v1107, 0
  %1114 = vmatpush.bf16.xpose.msra.mxu0 0
  %1115 = vmatpush.bf16.xpose.msra.mxu0 0
  %1116 = vmatpush.bf16.xpose.msra.mxu0 0
  %1117 = vmatpush.bf16.xpose.msra.mxu0 0
  %1118 = vmatpush.bf16.xpose.msra.mxu0 0
  %1119 = vmatpush.bf16.xpose.msra.mxu0 0
  %1120 = vmatpush.bf16.xpose.msra.mxu0 0
  %1121 = vmatpush.bf16.xpose.msra.mxu0 %v1112
  %1122 = vmatmul.bf16.gmra.mxu0 %v1109
  %v1123 = vpop.f32.mrf.mxu0
  %v1124 = vadd.f32 0.0, %v1123
  %v1125 = vpop.f32.mrf.mxu0
  %1126 = vdwg.mxu0
  %v1128 = vunpack.c.l.b16 %v866
  %v1129 = vpack.c.b16 %v1128, %v1128
  %1130 = vrot.lane.b32.xlu0 %v1129, 120
  %v1131 = vpop.permute.xlu0 %1130
  %v1134 = vunpack.c.l.b16 %v1071
  %v1135 = vunpack.c.l.b16 %v1072
  %v1136 = vpack.c.b16 %v1135, %v1134
  %1137 = vrot.lane.b32.xlu0 %v1136, 120
  %v1138 = vpop.permute.xlu0 %1137
  %v1140 = vsel %vm134, %v1131, 0
  %v1143 = vsel %vm134, %v1138, 0
  %1145 = vmatpush.bf16.xpose.msra.mxu0 0
  %1146 = vmatpush.bf16.xpose.msra.mxu0 0
  %1147 = vmatpush.bf16.xpose.msra.mxu0 0
  %1148 = vmatpush.bf16.xpose.msra.mxu0 0
  %1149 = vmatpush.bf16.xpose.msra.mxu0 0
  %1150 = vmatpush.bf16.xpose.msra.mxu0 0
  %1151 = vmatpush.bf16.xpose.msra.mxu0 0
  %1152 = vmatpush.bf16.xpose.msra.mxu0 %v1143
  %1153 = vmatmul.bf16.gmra.mxu0 %v1140
  %v1154 = vpop.f32.mrf.mxu0
  %v1155 = vadd.f32 0.0, %v1154
  %v1156 = vpop.f32.mrf.mxu0
  %1157 = vdwg.mxu0
  %v1158 = vmul.f32 %v1124, 0.35355338
  %v1159 = vmul.f32 %v1155, 0.35355338
  %v1160 = vsel %vm969, %v1158, -inf
  %1161 = vmax.xlane.f32.xlu0 %v1160
  %v1162 = vpop.xlane.xlu0 %1161
  %v1163 = vsel %vm969, %v1159, -inf
  %1164 = vmax.xlane.f32.xlu0 %v1163
  %v1165 = vpop.xlane.xlu0 %1164
  %v1166 = vsub.f32 %v1158, %v1162
  %v1167 = vsub.f32 %v1159, %v1165
  %v1168 = vmul.f32 %v1166, 1.442695
  %v1169 = vpow.pop %v1168
  %v1170 = vmul.f32 %v1167, 1.442695
  %v1171 = vpow.pop %v1170
  %v1172 = vsel %vm969, %v1169, 0.0
  %1173 = vadd.xlane.f32.xlu0 %v1172
  %v1174 = vpop.xlane.xlu0 %1173
  %v1175 = vsel %vm969, %v1171, 0.0
  %1176 = vadd.xlane.f32.xlu0 %v1175
  %v1177 = vpop.xlane.xlu0 %1176
  %v1178 = vpack.c.bf16 %v1169, %v1169
  %v1179 = vpack.c.bf16 %v1171, %v1171
  %v1182 = vunpack.c.l.b16 %v1092
  %v1183 = vunpack.c.l.b16 %v1093
  %v1184 = vpack.c.b16 %v1183, %v1182
  %1185 = vrot.lane.b32.xlu0 %v1184, 88
  %v1186 = vpop.permute.xlu0 %1185
  %v1188 = vsel %vm969, %v1178, 0
  %v1191 = vsel %vm1000, %v1186, 0
  %1193 = vmatpush.bf16.msra.mxu0 0
  %1194 = vmatpush.bf16.msra.mxu0 0
  %1195 = vmatpush.bf16.msra.mxu0 0
  %1196 = vmatpush.bf16.msra.mxu0 0
  %1197 = vmatpush.bf16.msra.mxu0 0
  %1198 = vmatpush.bf16.msra.mxu0 0
  %1199 = vmatpush.bf16.msra.mxu0 0
  %1200 = vmatpush.bf16.msra.mxu0 %v1191
  %1201 = vmatmul.bf16.gmra.mxu0 %v1188
  %v1202 = vpop.f32.mrf.mxu0
  %v1203 = vadd.f32 0.0, %v1202
  %v1204 = vpop.f32.mrf.mxu0
  %1205 = vdwg.mxu0
  %v1208 = vunpack.c.l.b16 %v1094
  %v1209 = vunpack.c.l.b16 %v1095
  %v1210 = vpack.c.b16 %v1209, %v1208
  %1211 = vrot.lane.b32.xlu0 %v1210, 88
  %v1212 = vpop.permute.xlu0 %1211
  %v1214 = vsel %vm969, %v1179, 0
  %v1217 = vsel %vm1000, %v1212, 0
  %1219 = vmatpush.bf16.msra.mxu0 0
  %1220 = vmatpush.bf16.msra.mxu0 0
  %1221 = vmatpush.bf16.msra.mxu0 0
  %1222 = vmatpush.bf16.msra.mxu0 0
  %1223 = vmatpush.bf16.msra.mxu0 0
  %1224 = vmatpush.bf16.msra.mxu0 0
  %1225 = vmatpush.bf16.msra.mxu0 0
  %1226 = vmatpush.bf16.msra.mxu0 %v1217
  %1227 = vmatmul.bf16.gmra.mxu0 %v1214
  %v1228 = vpop.f32.mrf.mxu0
  %v1229 = vadd.f32 0.0, %v1228
  %v1230 = vpop.f32.mrf.mxu0
  %1231 = vdwg.mxu0
  %v1232 = vrcp.pop %v1174
  %v1233 = vrcp.pop %v1177
  %v1234 = vmul.f32 %v1203, %v1232
  %v1235 = vmul.f32 %v1229, %v1233
  %v1236 = vld [vmem:[%s13 + $0x8] sm:$0xff]
  %v1237 = vpack.c.bf16 %v1236, %v1236
  %v1238 = vpack.c.bf16 %v1235, %v1234
  %v1240 = vsel %vm134, %v1238, 0
  %v1243 = vsel %vm207, %v1237, 0
  %1245 = vmatpush.bf16.msra.mxu0 0
  %1246 = vmatpush.bf16.msra.mxu0 0
  %1247 = vmatpush.bf16.msra.mxu0 0
  %1248 = vmatpush.bf16.msra.mxu0 0
  %1249 = vmatpush.bf16.msra.mxu0 0
  %1250 = vmatpush.bf16.msra.mxu0 0
  %1251 = vmatpush.bf16.msra.mxu0 0
  %1252 = vmatpush.bf16.msra.mxu0 %v1243
  %1253 = vmatmul.bf16.gmra.mxu0 %v1240
  %v1254 = vpop.f32.mrf.mxu0
  %v1255 = vadd.f32 0.0, %v1254
  %v1256 = vpop.f32.mrf.mxu0
  %v1257 = vadd.f32 0.0, %v1256
  %1258 = vdwg.mxu0
  %v1260 = vsel %vm134, %v1049, 0
  %v1263 = vsel %vm207, %v1048, 0
  %1265 = vmatpush.bf16.msra.mxu0 0
  %1266 = vmatpush.bf16.msra.mxu0 0
  %1267 = vmatpush.bf16.msra.mxu0 0
  %1268 = vmatpush.bf16.msra.mxu0 0
  %1269 = vmatpush.bf16.msra.mxu0 0
  %1270 = vmatpush.bf16.msra.mxu0 0
  %1271 = vmatpush.bf16.msra.mxu0 0
  %1272 = vmatpush.bf16.msra.mxu0 %v1263
  %1273 = vmatmul.bf16.gmra.mxu0 %v1260
  %v1274 = vpop.f32.mrf.mxu0
  %v1275 = vadd.f32 %v1255, %v1274
  %v1276 = vpop.f32.mrf.mxu0
  %v1277 = vadd.f32 %v1257, %v1276
  %1278 = vdwg.mxu0
  %1279 = vst [vmem:[#allocation1] ss:$2 sm:$0xff] %v857
  %s1280 = scalar_lea.vmem [#allocation1], 1
  %1281 = vst [vmem:[%s1280] ss:$2 sm:$0xff] %v870
  %s1282 = scalar_lea.vmem [#allocation1], 16
  %1283 = vst [vmem:[%s1282] ss:$2 sm:$0xff] %v859
  %v1284 = vld.sshfl [vmem:[#allocation1] sm:$0xff pattern:$0x75316420]
  %v1285 = vld.sshfl [vmem:[#allocation1 + $0x10] sm:$0xff pattern:$0x75316420]
  %s1286 = scalar_lea.vmem [#allocation1], 32
  %1287 = vst [vmem:[%s1286] ss:$2 sm:$0xff] %v871
  %s1288 = scalar_lea.vmem [#allocation1], 33
  %1289 = vst [vmem:[%s1288] ss:$2 sm:$0xff] %v862
  %s1290 = scalar_lea.vmem [#allocation1], 48
  %1291 = vst [vmem:[%s1290] ss:$2 sm:$0xff] %v872
  %v1292 = vld.sshfl [vmem:[#allocation1 + $0x20] sm:$0xff pattern:$0x75316420]
  %v1293 = vld.sshfl [vmem:[#allocation1 + $0x30] sm:$0xff pattern:$0x75316420]
  %v1298 = vpack.c.bf16 %v1284, %v1284
  %v1299 = vpack.c.bf16 %v1285, %v1285
  %v1300 = vpack.c.bf16 %v1292, %v1292
  %v1301 = vpack.c.bf16 %v1293, %v1293
  %1302 = vst [vmem:[#allocation1] ss:$2 sm:$0xff] %v857
  %s1303 = scalar_lea.vmem [#allocation1], 1
  %1304 = vst [vmem:[%s1303] ss:$2 sm:$0xff] %v870
  %s1305 = scalar_lea.vmem [#allocation1], 16
  %1306 = vst [vmem:[%s1305] ss:$2 sm:$0xff] %v859
  %v1307 = vld.sshfl [vmem:[#allocation1] sm:$0xff pattern:$0x75316420]
  %v1308 = vld.sshfl [vmem:[#allocation1 + $0x10] sm:$0xff pattern:$0x75316420]
  %s1309 = scalar_lea.vmem [#allocation1], 32
  %1310 = vst [vmem:[%s1309] ss:$2 sm:$0xff] %v871
  %s1311 = scalar_lea.vmem [#allocation1], 33
  %1312 = vst [vmem:[%s1311] ss:$2 sm:$0xff] %v862
  %s1313 = scalar_lea.vmem [#allocation1], 48
  %1314 = vst [vmem:[%s1313] ss:$2 sm:$0xff] %v872
  %v1315 = vld.sshfl [vmem:[#allocation1 + $0x20] sm:$0xff pattern:$0x75316420]
  %v1316 = vld.sshfl [vmem:[#allocation1 + $0x30] sm:$0xff pattern:$0x75316420]
  %v1321 = vpack.c.bf16 %v1307, %v1307
  %v1322 = vpack.c.bf16 %v1308, %v1308
  %v1323 = vpack.c.bf16 %v1315, %v1315
  %v1324 = vpack.c.bf16 %v1316, %v1316
  %1325 = vrot.lane.b32.xlu0 %v1098, 112
  %v1326 = vpop.permute.xlu0 %1325
  %v1329 = vunpack.c.l.b16 %v1298
  %v1330 = vunpack.c.l.b16 %v1299
  %v1331 = vpack.c.b16 %v1330, %v1329
  %1332 = vrot.lane.b32.xlu0 %v1331, 112
  %v1333 = vpop.permute.xlu0 %1332
  %v1335 = vsel %vm134, %v1326, 0
  %v1338 = vsel %vm134, %v1333, 0
  %1340 = vmatpush.bf16.xpose.msra.mxu0 0
  %1341 = vmatpush.bf16.xpose.msra.mxu0 0
  %1342 = vmatpush.bf16.xpose.msra.mxu0 0
  %1343 = vmatpush.bf16.xpose.msra.mxu0 0
  %1344 = vmatpush.bf16.xpose.msra.mxu0 0
  %1345 = vmatpush.bf16.xpose.msra.mxu0 0
  %1346 = vmatpush.bf16.xpose.msra.mxu0 0
  %1347 = vmatpush.bf16.xpose.msra.mxu0 %v1338
  %1348 = vmatmul.bf16.gmra.mxu0 %v1335
  %v1349 = vpop.f32.mrf.mxu0
  %v1350 = vadd.f32 0.0, %v1349
  %v1351 = vpop.f32.mrf.mxu0
  %1352 = vdwg.mxu0
  %1353 = vrot.lane.b32.xlu0 %v1129, 112
  %v1354 = vpop.permute.xlu0 %1353
  %v1357 = vunpack.c.l.b16 %v1300
  %v1358 = vunpack.c.l.b16 %v1301
  %v1359 = vpack.c.b16 %v1358, %v1357
  %1360 = vrot.lane.b32.xlu0 %v1359, 112
  %v1361 = vpop.permute.xlu0 %1360
  %v1363 = vsel %vm134, %v1354, 0
  %v1366 = vsel %vm134, %v1361, 0
  %1368 = vmatpush.bf16.xpose.msra.mxu0 0
  %1369 = vmatpush.bf16.xpose.msra.mxu0 0
  %1370 = vmatpush.bf16.xpose.msra.mxu0 0
  %1371 = vmatpush.bf16.xpose.msra.mxu0 0
  %1372 = vmatpush.bf16.xpose.msra.mxu0 0
  %1373 = vmatpush.bf16.xpose.msra.mxu0 0
  %1374 = vmatpush.bf16.xpose.msra.mxu0 0
  %1375 = vmatpush.bf16.xpose.msra.mxu0 %v1366
  %1376 = vmatmul.bf16.gmra.mxu0 %v1363
  %v1377 = vpop.f32.mrf.mxu0
  %v1378 = vadd.f32 0.0, %v1377
  %v1379 = vpop.f32.mrf.mxu0
  %1380 = vdwg.mxu0
  %v1381 = vmul.f32 %v1350, 0.35355338
  %v1382 = vmul.f32 %v1378, 0.35355338
  %v1383 = vsel %vm969, %v1381, -inf
  %1384 = vmax.xlane.f32.xlu0 %v1383
  %v1385 = vpop.xlane.xlu0 %1384
  %v1386 = vsel %vm969, %v1382, -inf
  %1387 = vmax.xlane.f32.xlu0 %v1386
  %v1388 = vpop.xlane.xlu0 %1387
  %v1389 = vsub.f32 %v1381, %v1385
  %v1390 = vsub.f32 %v1382, %v1388
  %v1391 = vmul.f32 %v1389, 1.442695
  %v1392 = vpow.pop %v1391
  %v1393 = vmul.f32 %v1390, 1.442695
  %v1394 = vpow.pop %v1393
  %v1395 = vsel %vm969, %v1392, 0.0
  %1396 = vadd.xlane.f32.xlu0 %v1395
  %v1397 = vpop.xlane.xlu0 %1396
  %v1398 = vsel %vm969, %v1394, 0.0
  %1399 = vadd.xlane.f32.xlu0 %v1398
  %v1400 = vpop.xlane.xlu0 %1399
  %v1401 = vpack.c.bf16 %v1392, %v1392
  %v1402 = vpack.c.bf16 %v1394, %v1394
  %v1405 = vunpack.c.l.b16 %v1321
  %v1406 = vunpack.c.l.b16 %v1322
  %v1407 = vpack.c.b16 %v1406, %v1405
  %1408 = vrot.lane.b32.xlu0 %v1407, 80
  %v1409 = vpop.permute.xlu0 %1408
  %v1411 = vsel %vm969, %v1401, 0
  %v1414 = vsel %vm1000, %v1409, 0
  %1416 = vmatpush.bf16.msra.mxu0 0
  %1417 = vmatpush.bf16.msra.mxu0 0
  %1418 = vmatpush.bf16.msra.mxu0 0
  %1419 = vmatpush.bf16.msra.mxu0 0
  %1420 = vmatpush.bf16.msra.mxu0 0
  %1421 = vmatpush.bf16.msra.mxu0 0
  %1422 = vmatpush.bf16.msra.mxu0 0
  %1423 = vmatpush.bf16.msra.mxu0 %v1414
  %1424 = vmatmul.bf16.gmra.mxu0 %v1411
  %v1425 = vpop.f32.mrf.mxu0
  %v1426 = vadd.f32 0.0, %v1425
  %v1427 = vpop.f32.mrf.mxu0
  %1428 = vdwg.mxu0
  %v1431 = vunpack.c.l.b16 %v1323
  %v1432 = vunpack.c.l.b16 %v1324
  %v1433 = vpack.c.b16 %v1432, %v1431
  %1434 = vrot.lane.b32.xlu0 %v1433, 80
  %v1435 = vpop.permute.xlu0 %1434
  %v1437 = vsel %vm969, %v1402, 0
  %v1440 = vsel %vm1000, %v1435, 0
  %1442 = vmatpush.bf16.msra.mxu0 0
  %1443 = vmatpush.bf16.msra.mxu0 0
  %1444 = vmatpush.bf16.msra.mxu0 0
  %1445 = vmatpush.bf16.msra.mxu0 0
  %1446 = vmatpush.bf16.msra.mxu0 0
  %1447 = vmatpush.bf16.msra.mxu0 0
  %1448 = vmatpush.bf16.msra.mxu0 0
  %1449 = vmatpush.bf16.msra.mxu0 %v1440
  %1450 = vmatmul.bf16.gmra.mxu0 %v1437
  %v1451 = vpop.f32.mrf.mxu0
  %v1452 = vadd.f32 0.0, %v1451
  %v1453 = vpop.f32.mrf.mxu0
  %1454 = vdwg.mxu0
  %v1455 = vrcp.pop %v1397
  %v1456 = vrcp.pop %v1400
  %v1457 = vmul.f32 %v1426, %v1455
  %v1458 = vmul.f32 %v1452, %v1456
  %v1459 = vld [vmem:[%s13 + $0x10] sm:$0xff]
  %v1460 = vpack.c.bf16 %v1459, %v1459
  %v1461 = vpack.c.bf16 %v1458, %v1457
  %v1463 = vsel %vm134, %v1461, 0
  %v1466 = vsel %vm207, %v1460, 0
  %1468 = vmatpush.bf16.msra.mxu0 0
  %1469 = vmatpush.bf16.msra.mxu0 0
  %1470 = vmatpush.bf16.msra.mxu0 0
  %1471 = vmatpush.bf16.msra.mxu0 0
  %1472 = vmatpush.bf16.msra.mxu0 0
  %1473 = vmatpush.bf16.msra.mxu0 0
  %1474 = vmatpush.bf16.msra.mxu0 0
  %1475 = vmatpush.bf16.msra.mxu0 %v1466
  %1476 = vmatmul.bf16.gmra.mxu0 %v1463
  %v1477 = vpop.f32.mrf.mxu0
  %v1478 = vadd.f32 0.0, %v1477
  %v1479 = vpop.f32.mrf.mxu0
  %v1480 = vadd.f32 0.0, %v1479
  %1481 = vdwg.mxu0
  %v1482 = vadd.f32 %v1275, %v1478
  %v1483 = vadd.f32 %v1277, %v1480
  %1484 = vst [vmem:[#allocation1] ss:$2 sm:$0xff] %v857
  %s1485 = scalar_lea.vmem [#allocation1], 1
  %1486 = vst [vmem:[%s1485] ss:$2 sm:$0xff] %v870
  %s1487 = scalar_lea.vmem [#allocation1], 16
  %1488 = vst [vmem:[%s1487] ss:$2 sm:$0xff] %v859
  %v1489 = vld.sshfl [vmem:[#allocation1] sm:$0xff pattern:$0x75316420]
  %v1490 = vld.sshfl [vmem:[#allocation1 + $0x10] sm:$0xff pattern:$0x75316420]
  %s1491 = scalar_lea.vmem [#allocation1], 32
  %1492 = vst [vmem:[%s1491] ss:$2 sm:$0xff] %v871
  %s1493 = scalar_lea.vmem [#allocation1], 33
  %1494 = vst [vmem:[%s1493] ss:$2 sm:$0xff] %v862
  %s1495 = scalar_lea.vmem [#allocation1], 48
  %1496 = vst [vmem:[%s1495] ss:$2 sm:$0xff] %v872
  %v1497 = vld.sshfl [vmem:[#allocation1 + $0x20] sm:$0xff pattern:$0x75316420]
  %v1498 = vld.sshfl [vmem:[#allocation1 + $0x30] sm:$0xff pattern:$0x75316420]
  %v1503 = vpack.c.bf16 %v1489, %v1489
  %v1504 = vpack.c.bf16 %v1490, %v1490
  %v1505 = vpack.c.bf16 %v1497, %v1497
  %v1506 = vpack.c.bf16 %v1498, %v1498
  %1507 = vst [vmem:[#allocation1] ss:$2 sm:$0xff] %v857
  %s1508 = scalar_lea.vmem [#allocation1], 1
  %1509 = vst [vmem:[%s1508] ss:$2 sm:$0xff] %v870
  %s1510 = scalar_lea.vmem [#allocation1], 16
  %1511 = vst [vmem:[%s1510] ss:$2 sm:$0xff] %v859
  %v1512 = vld.sshfl [vmem:[#allocation1] sm:$0xff pattern:$0x75316420]
  %v1513 = vld.sshfl [vmem:[#allocation1 + $0x10] sm:$0xff pattern:$0x75316420]
  %s1514 = scalar_lea.vmem [#allocation1], 32
  %1515 = vst [vmem:[%s1514] ss:$2 sm:$0xff] %v871
  %s1516 = scalar_lea.vmem [#allocation1], 33
  %1517 = vst [vmem:[%s1516] ss:$2 sm:$0xff] %v862
  %s1518 = scalar_lea.vmem [#allocation1], 48
  %1519 = vst [vmem:[%s1518] ss:$2 sm:$0xff] %v872
  %v1520 = vld.sshfl [vmem:[#allocation1 + $0x20] sm:$0xff pattern:$0x75316420]
  %v1521 = vld.sshfl [vmem:[#allocation1 + $0x30] sm:$0xff pattern:$0x75316420]
  %v1526 = vpack.c.bf16 %v1512, %v1512
  %v1527 = vpack.c.bf16 %v1513, %v1513
  %v1528 = vpack.c.bf16 %v1520, %v1520
  %v1529 = vpack.c.bf16 %v1521, %v1521
  %1530 = vrot.lane.b32.xlu0 %v1098, 104
  %v1531 = vpop.permute.xlu0 %1530
  %v1534 = vunpack.c.l.b16 %v1503
  %v1535 = vunpack.c.l.b16 %v1504
  %v1536 = vpack.c.b16 %v1535, %v1534
  %1537 = vrot.lane.b32.xlu0 %v1536, 104
  %v1538 = vpop.permute.xlu0 %1537
  %v1540 = vsel %vm134, %v1531, 0
  %v1543 = vsel %vm134, %v1538, 0
  %1545 = vmatpush.bf16.xpose.msra.mxu0 0
  %1546 = vmatpush.bf16.xpose.msra.mxu0 0
  %1547 = vmatpush.bf16.xpose.msra.mxu0 0
  %1548 = vmatpush.bf16.xpose.msra.mxu0 0
  %1549 = vmatpush.bf16.xpose.msra.mxu0 0
  %1550 = vmatpush.bf16.xpose.msra.mxu0 0
  %1551 = vmatpush.bf16.xpose.msra.mxu0 0
  %1552 = vmatpush.bf16.xpose.msra.mxu0 %v1543
  %1553 = vmatmul.bf16.gmra.mxu0 %v1540
  %v1554 = vpop.f32.mrf.mxu0
  %v1555 = vadd.f32 0.0, %v1554
  %v1556 = vpop.f32.mrf.mxu0
  %1557 = vdwg.mxu0
  %1558 = vrot.lane.b32.xlu0 %v1129, 104
  %v1559 = vpop.permute.xlu0 %1558
  %v1562 = vunpack.c.l.b16 %v1505
  %v1563 = vunpack.c.l.b16 %v1506
  %v1564 = vpack.c.b16 %v1563, %v1562
  %1565 = vrot.lane.b32.xlu0 %v1564, 104
  %v1566 = vpop.permute.xlu0 %1565
  %v1568 = vsel %vm134, %v1559, 0
  %v1571 = vsel %vm134, %v1566, 0
  %1573 = vmatpush.bf16.xpose.msra.mxu0 0
  %1574 = vmatpush.bf16.xpose.msra.mxu0 0
  %1575 = vmatpush.bf16.xpose.msra.mxu0 0
  %1576 = vmatpush.bf16.xpose.msra.mxu0 0
  %1577 = vmatpush.bf16.xpose.msra.mxu0 0
  %1578 = vmatpush.bf16.xpose.msra.mxu0 0
  %1579 = vmatpush.bf16.xpose.msra.mxu0 0
  %1580 = vmatpush.bf16.xpose.msra.mxu0 %v1571
  %1581 = vmatmul.bf16.gmra.mxu0 %v1568
  %v1582 = vpop.f32.mrf.mxu0
  %v1583 = vadd.f32 0.0, %v1582
  %v1584 = vpop.f32.mrf.mxu0
  %1585 = vdwg.mxu0
  %v1586 = vmul.f32 %v1555, 0.35355338
  %v1587 = vmul.f32 %v1583, 0.35355338
  %v1588 = vsel %vm969, %v1586, -inf
  %1589 = vmax.xlane.f32.xlu0 %v1588
  %v1590 = vpop.xlane.xlu0 %1589
  %v1591 = vsel %vm969, %v1587, -inf
  %1592 = vmax.xlane.f32.xlu0 %v1591
  %v1593 = vpop.xlane.xlu0 %1592
  %v1594 = vsub.f32 %v1586, %v1590
  %v1595 = vsub.f32 %v1587, %v1593
  %v1596 = vmul.f32 %v1594, 1.442695
  %v1597 = vpow.pop %v1596
  %v1598 = vmul.f32 %v1595, 1.442695
  %v1599 = vpow.pop %v1598
  %v1600 = vsel %vm969, %v1597, 0.0
  %1601 = vadd.xlane.f32.xlu0 %v1600
  %v1602 = vpop.xlane.xlu0 %1601
  %v1603 = vsel %vm969, %v1599, 0.0
  %1604 = vadd.xlane.f32.xlu0 %v1603
  %v1605 = vpop.xlane.xlu0 %1604
  %v1606 = vpack.c.bf16 %v1597, %v1597
  %v1607 = vpack.c.bf16 %v1599, %v1599
  %v1610 = vunpack.c.l.b16 %v1526
  %v1611 = vunpack.c.l.b16 %v1527
  %v1612 = vpack.c.b16 %v1611, %v1610
  %1613 = vrot.lane.b32.xlu0 %v1612, 72
  %v1614 = vpop.permute.xlu0 %1613
  %v1616 = vsel %vm969, %v1606, 0
  %v1619 = vsel %vm1000, %v1614, 0
  %1621 = vmatpush.bf16.msra.mxu0 0
  %1622 = vmatpush.bf16.msra.mxu0 0
  %1623 = vmatpush.bf16.msra.mxu0 0
  %1624 = vmatpush.bf16.msra.mxu0 0
  %1625 = vmatpush.bf16.msra.mxu0 0
  %1626 = vmatpush.bf16.msra.mxu0 0
  %1627 = vmatpush.bf16.msra.mxu0 0
  %1628 = vmatpush.bf16.msra.mxu0 %v1619
  %1629 = vmatmul.bf16.gmra.mxu0 %v1616
  %v1630 = vpop.f32.mrf.mxu0
  %v1631 = vadd.f32 0.0, %v1630
  %v1632 = vpop.f32.mrf.mxu0
  %1633 = vdwg.mxu0
  %v1636 = vunpack.c.l.b16 %v1528
  %v1637 = vunpack.c.l.b16 %v1529
  %v1638 = vpack.c.b16 %v1637, %v1636
  %1639 = vrot.lane.b32.xlu0 %v1638, 72
  %v1640 = vpop.permute.xlu0 %1639
  %v1642 = vsel %vm969, %v1607, 0
  %v1645 = vsel %vm1000, %v1640, 0
  %1647 = vmatpush.bf16.msra.mxu0 0
  %1648 = vmatpush.bf16.msra.mxu0 0
  %1649 = vmatpush.bf16.msra.mxu0 0
  %1650 = vmatpush.bf16.msra.mxu0 0
  %1651 = vmatpush.bf16.msra.mxu0 0
  %1652 = vmatpush.bf16.msra.mxu0 0
  %1653 = vmatpush.bf16.msra.mxu0 0
  %1654 = vmatpush.bf16.msra.mxu0 %v1645
  %1655 = vmatmul.bf16.gmra.mxu0 %v1642
  %v1656 = vpop.f32.mrf.mxu0
  %v1657 = vadd.f32 0.0, %v1656
  %v1658 = vpop.f32.mrf.mxu0
  %1659 = vdwg.mxu0
  %v1660 = vrcp.pop %v1602
  %v1661 = vrcp.pop %v1605
  %v1662 = vmul.f32 %v1631, %v1660
  %v1663 = vmul.f32 %v1657, %v1661
  %v1664 = vld [vmem:[%s13 + $0x18] sm:$0xff]
  %v1665 = vpack.c.bf16 %v1664, %v1664
  %v1666 = vpack.c.bf16 %v1663, %v1662
  %v1668 = vsel %vm134, %v1666, 0
  %v1671 = vsel %vm207, %v1665, 0
  %1673 = vmatpush.bf16.msra.mxu0 0
  %1674 = vmatpush.bf16.msra.mxu0 0
  %1675 = vmatpush.bf16.msra.mxu0 0
  %1676 = vmatpush.bf16.msra.mxu0 0
  %1677 = vmatpush.bf16.msra.mxu0 0
  %1678 = vmatpush.bf16.msra.mxu0 0
  %1679 = vmatpush.bf16.msra.mxu0 0
  %1680 = vmatpush.bf16.msra.mxu0 %v1671
  %1681 = vmatmul.bf16.gmra.mxu0 %v1668
  %v1682 = vpop.f32.mrf.mxu0
  %v1683 = vadd.f32 0.0, %v1682
  %v1684 = vpop.f32.mrf.mxu0
  %v1685 = vadd.f32 0.0, %v1684
  %1686 = vdwg.mxu0
  %v1687 = vadd.f32 %v1482, %v1683
  %v1688 = vadd.f32 %v1483, %v1685
  %v1689 = vld [vmem:[%s14] sm:$0x1]
  %v1691 = vperm.slane %v1689, 0
  %v1693 = vadd.f32 %v1687, %v1691
  %v1694 = vadd.f32 %v1688, %v1691
  %v1695 = vadd.f32 %v762, %v1693
  %v1696 = vadd.f32 %v763, %v1694
  %v1697 = vld [vmem:[%s15] sm:$0x1]
  %v1698 = vld [vmem:[%s16] sm:$0x1]
  %v1699 = vsel %vm109, %v1695, 0.0
  %1700 = vadd.xlane.f32.xlu0 %v1699
  %v1701 = vpop.xlane.xlu0 %1700
  %v1702 = vsel %vm109, %v1696, 0.0
  %1703 = vadd.xlane.f32.xlu0 %v1702
  %v1704 = vpop.xlane.xlu0 %1703
  %v1705 = vmul.f32 %v1701, %v715
  %v1706 = vmul.f32 %v1704, %v715
  %v1707 = vsub.f32 %v1695, %v1705
  %v1708 = vsub.f32 %v1696, %v1706
  %v1709 = vmul.f32 %v1707, %v1707
  %v1710 = vmul.f32 %v1708, %v1708
  %v1711 = vsel %vm109, %v1709, 0.0
  %1712 = vadd.xlane.f32.xlu0 %v1711
  %v1713 = vpop.xlane.xlu0 %1712
  %v1714 = vsel %vm109, %v1710, 0.0
  %1715 = vadd.xlane.f32.xlu0 %v1714
  %v1716 = vpop.xlane.xlu0 %1715
  %v1717 = vmul.f32 %v1713, %v715
  %v1718 = vmul.f32 %v1716, %v715
  %v1719 = vadd.f32 %v1717, 1e-05
  %v1720 = vadd.f32 %v1718, 1e-05
  %v1721 = vrsqrt.pop %v1719
  %v1722 = vmul.f32 %v1721, %v1719
  %v1723 = vmul.f32 %v1722, %v1721
  %v1724 = vmul.f32 0.5, %v1723
  %v1725 = vsub.f32 1.5, %v1724
  %v1726 = vmul.f32 %v1721, %v1725
  %vm1727 = vweird.f32 %v1719
  %vm1728 = vweird.f32 %v1721
  %vm1729 = vmor %vm1727, %vm1728
  %v1730 = vsel %vm1729, %v1721, %v1726
  %v1731 = vrsqrt.pop %v1720
  %v1732 = vmul.f32 %v1731, %v1720
  %v1733 = vmul.f32 %v1732, %v1731
  %v1734 = vmul.f32 0.5, %v1733
  %v1735 = vsub.f32 1.5, %v1734
  %v1736 = vmul.f32 %v1731, %v1735
  %vm1737 = vweird.f32 %v1720
  %vm1738 = vweird.f32 %v1731
  %vm1739 = vmor %vm1737, %vm1738
  %v1740 = vsel %vm1739, %v1731, %v1736
  %v1741 = vmul.f32 %v1707, %v1730
  %v1742 = vmul.f32 %v1708, %v1740
  %v1744 = vperm.slane %v1697, 0
  %v1746 = vmul.f32 %v1741, %v1744
  %v1747 = vmul.f32 %v1742, %v1744
  %v1749 = vperm.slane %v1698, 0
  %v1751 = vadd.f32 %v1746, %v1749
  %v1752 = vadd.f32 %v1747, %v1749
  %v1753 = vld [vmem:[%s17] sm:$0xf]
  %v1754 = vld [vmem:[%s17 + $0x4] sm:$0xf]
  %v1755 = vld [vmem:[%s17 + $0x8] sm:$0xf]
  %v1756 = vld [vmem:[%s17 + $0xc] sm:$0xf]
  %v1757 = vld [vmem:[%s18] sm:$0x1]
  %v1758 = vpack.c.bf16 %v1752, %v1751
  %v1760 = vperm.slane %v1757, 0
  %v1766 = vunpack.c.l.b16 %v1753
  %v1767 = vunpack.c.l.b16 %v1754
  %v1768 = vunpack.c.l.b16 %v1755
  %v1769 = vunpack.c.l.b16 %v1756
  %v1770 = vpack.c.b16 %v1767, %v1766
  %v1771 = vpack.c.b16 %v1769, %v1768
  %v1775 = vsel %vm109, %v1758, 0
  %1777 = vmatpush.bf16.msra.mxu0 0
  %1778 = vmatpush.bf16.msra.mxu0 0
  %1779 = vmatpush.bf16.msra.mxu0 0
  %1780 = vmatpush.bf16.msra.mxu0 0
  %1781 = vmatpush.bf16.msra.mxu0 0
  %1782 = vmatpush.bf16.msra.mxu0 0
  %1783 = vmatpush.bf16.msra.mxu0 %v1771
  %1784 = vmatpush.bf16.msra.mxu0 %v1770
  %1785 = vmatmul.bf16.gmra.mxu0 %v1775
  %v1786 = vpop.f32.mrf.mxu0
  %v1787 = vadd.f32 %v1760, %v1786
  %v1788 = vpop.f32.mrf.mxu0
  %v1789 = vadd.f32 %v1760, %v1788
  %1790 = vdwg.mxu0
  %v1791 = vmax.f32 %v1787, 0.0
  %v1792 = vmax.f32 %v1789, 0.0
  %v1793 = vld [vmem:[%s19] sm:$0xf]
  %v1794 = vld [vmem:[%s19 + $0x4] sm:$0xf]
  %v1795 = vld [vmem:[%s19 + $0x8] sm:$0xf]
  %v1796 = vld [vmem:[%s19 + $0xc] sm:$0xf]
  %v1797 = vld [vmem:[%s19 + $0x10] sm:$0xf]
  %v1798 = vld [vmem:[%s19 + $0x14] sm:$0xf]
  %v1799 = vld [vmem:[%s19 + $0x18] sm:$0xf]
  %v1800 = vld [vmem:[%s19 + $0x1c] sm:$0xf]
  %v1801 = vld [vmem:[%s20] sm:$0x1]
  %v1802 = vpack.c.bf16 %v1792, %v1791
  %v1804 = vperm.slane %v1801, 0
  %v1814 = vunpack.c.l.b16 %v1793
  %v1815 = vunpack.c.l.b16 %v1794
  %v1816 = vunpack.c.l.b16 %v1795
  %v1817 = vunpack.c.l.b16 %v1796
  %v1818 = vunpack.c.l.b16 %v1797
  %v1819 = vunpack.c.l.b16 %v1798
  %v1820 = vunpack.c.l.b16 %v1799
  %v1821 = vunpack.c.l.b16 %v1800
  %v1822 = vpack.c.b16 %v1815, %v1814
  %v1823 = vpack.c.b16 %v1817, %v1816
  %v1824 = vpack.c.b16 %v1819, %v1818
  %v1825 = vpack.c.b16 %v1821, %v1820
  %vm1830 = vcmask 523264
  %v1832 = vsel %vm1830, %v1802, 0
  %1834 = vmatpush.bf16.msra.mxu0 0
  %1835 = vmatpush.bf16.msra.mxu0 0
  %1836 = vmatpush.bf16.msra.mxu0 0
  %1837 = vmatpush.bf16.msra.mxu0 0
  %1838 = vmatpush.bf16.msra.mxu0 %v1825
  %1839 = vmatpush.bf16.msra.mxu0 %v1824
  %1840 = vmatpush.bf16.msra.mxu0 %v1823
  %1841 = vmatpush.bf16.msra.mxu0 %v1822
  %1842 = vmatmul.bf16.gmra.mxu0 %v1832
  %v1843 = vpop.f32.mrf.mxu0
  %v1844 = vadd.f32 %v1804, %v1843
  %v1845 = vpop.f32.mrf.mxu0
  %v1846 = vadd.f32 %v1804, %v1845
  %1847 = vdwg.mxu0
  %v1848 = vadd.f32 %v1751, %v1844
  %v1849 = vadd.f32 %v1752, %v1846
  %v1850 = vld [vmem:[%s21] sm:$0x1]
  %v1851 = vld [vmem:[%s22] sm:$0x1]
  %v1852 = vsel %vm109, %v1848, 0.0
  %1853 = vadd.xlane.f32.xlu0 %v1852
  %v1854 = vpop.xlane.xlu0 %1853
  %v1855 = vsel %vm109, %v1849, 0.0
  %1856 = vadd.xlane.f32.xlu0 %v1855
  %v1857 = vpop.xlane.xlu0 %1856
  %v1858 = vmul.f32 %v1854, %v715
  %v1859 = vmul.f32 %v1857, %v715
  %v1860 = vsub.f32 %v1848, %v1858
  %v1861 = vsub.f32 %v1849, %v1859
  %v1862 = vmul.f32 %v1860, %v1860
  %v1863 = vmul.f32 %v1861, %v1861
  %v1864 = vsel %vm109, %v1862, 0.0
  %1865 = vadd.xlane.f32.xlu0 %v1864
  %v1866 = vpop.xlane.xlu0 %1865
  %v1867 = vsel %vm109, %v1863, 0.0
  %1868 = vadd.xlane.f32.xlu0 %v1867
  %v1869 = vpop.xlane.xlu0 %1868
  %v1870 = vmul.f32 %v1866, %v715
  %v1871 = vmul.f32 %v1869, %v715
  %v1872 = vadd.f32 %v1870, 1e-05
  %v1873 = vadd.f32 %v1871, 1e-05
  %v1874 = vrsqrt.pop %v1872
  %v1875 = vmul.f32 %v1874, %v1872
  %v1876 = vmul.f32 %v1875, %v1874
  %v1877 = vmul.f32 0.5, %v1876
  %v1878 = vsub.f32 1.5, %v1877
  %v1879 = vmul.f32 %v1874, %v1878
  %vm1880 = vweird.f32 %v1872
  %vm1881 = vweird.f32 %v1874
  %vm1882 = vmor %vm1880, %vm1881
  %v1883 = vsel %vm1882, %v1874, %v1879
  %v1884 = vrsqrt.pop %v1873
  %v1885 = vmul.f32 %v1884, %v1873
  %v1886 = vmul.f32 %v1885, %v1884
  %v1887 = vmul.f32 0.5, %v1886
  %v1888 = vsub.f32 1.5, %v1887
  %v1889 = vmul.f32 %v1884, %v1888
  %vm1890 = vweird.f32 %v1873
  %vm1891 = vweird.f32 %v1884
  %vm1892 = vmor %vm1890, %vm1891
  %v1893 = vsel %vm1892, %v1884, %v1889
  %v1894 = vmul.f32 %v1860, %v1883
  %v1895 = vmul.f32 %v1861, %v1893
  %v1897 = vperm.slane %v1850, 0
  %v1899 = vmul.f32 %v1894, %v1897
  %v1900 = vmul.f32 %v1895, %v1897
  %v1902 = vperm.slane %v1851, 0
  %v1904 = vadd.f32 %v1899, %v1902
  %v1905 = vadd.f32 %v1900, %v1902
  %1906 = vst.msk [vmem:[%s23] sm:$0xff] %vm109, %v1904
  %1907 = vst.msk [vmem:[%s23 + $0x8] sm:$0xff] %vm109, %v1905
  // Predicated region
  $region94: #{decoder_forward.3} parent=0 // pred_check
    _
  $region95: #{decoder_forward.3} parent=0 // pred_check_branch
    %1909 = sbr.rel (0) target = $region97
  $region96: #{decoder_forward.3} parent=0 // pred_region
    _
  $region97: #{decoder_forward.3} parent=0 // pred_fallthru
    _
  // Predicated region
  $region98: #{decoder_forward.3} parent=0 // pred_check
    _
  $region99: #{decoder_forward.3} parent=0 // pred_check_branch
    %1911 = sbr.rel (0) target = $region101
  $region100: #{decoder_forward.3} parent=0 // pred_region
    _
  $region101: #{decoder_forward.3} parent=0 // pred_fallthru
    _

</llo_original>
